<compile_context>
chip_gen: v7x
topology: tpu7x:2x2x1
jax: 0.10.0
libtpu: 0.0.40
codegen_flags: <defaults>
</compile_context>

<pallas_src>
import functools

import jax
import jax.numpy as jnp
from jax import lax
from jax.experimental import pallas as pl
from jax.experimental.pallas import tpu as pltpu

_LANE = 128

# Architecture constants fixed by the QLearner spec.
_C1, _C2, _C3 = 32, 64, 64
_K1, _S1 = 8, 4
_K2, _S2 = 4, 2
_K3, _S3 = 3, 1
_HIDDEN = 512


def _round_up(x, m):
    return (x + m - 1) // m * m


def _parallel_params():
    return pltpu.CompilerParams(dimension_semantics=("parallel",))


# ---------------------------------------------------------------------------
# XLA-side patch building (kept in the wrapper for conv1/conv2 only)
# ---------------------------------------------------------------------------
def _im2col(x, kh, kw, stride):
    """x: (N, H, W, C) -> (N, Ho*Wo, kh*kw*C); K order = (kh, kw, C)."""
    n, h, w, c = x.shape
    ho = (h - kh) // stride + 1
    wo = (w - kw) // stride + 1
    cols = []
    for i in range(kh):
        for j in range(kw):
            cols.append(x[:, i:i + stride * (ho - 1) + 1:stride,
                          j:j + stride * (wo - 1) + 1:stride, :])
    p = jnp.stack(cols, axis=3).reshape(n, ho * wo, kh * kw * c)
    return p, ho, wo


# ---------------------------------------------------------------------------
# Pallas kernel 1: conv1 as a per-sample matmul + bias + ReLU (bf16 out)
# ---------------------------------------------------------------------------
def _conv1_kernel(p_ref, w_ref, b_ref, o_ref):
    acc = jnp.dot(p_ref[0], w_ref[...], preferred_element_type=jnp.float32)
    acc = jnp.maximum(acc + b_ref[...], 0.0)          # f32 epilogue (v5e-safe)
    o_ref[0] = acc.astype(o_ref.dtype)


def _conv1_call(patches, w_mat, b_vec):
    n, m, k = patches.shape
    cp = w_mat.shape[1]
    return pl.pallas_call(
        _conv1_kernel,
        out_shape=jax.ShapeDtypeStruct((n, m, cp), jnp.bfloat16),
        grid=(n,),
        in_specs=[
            pl.BlockSpec((1, m, k), lambda i: (i, 0, 0)),
            pl.BlockSpec((k, cp), lambda i: (0, 0)),
            pl.BlockSpec((1, cp), lambda i: (0, 0)),
        ],
        out_specs=pl.BlockSpec((1, m, cp), lambda i: (i, 0, 0)),
        compiler_params=_parallel_params(),
    )(patches, w_mat, b_vec)


# ---------------------------------------------------------------------------
# Pallas kernel 2: fused conv2 + conv3 (in-kernel im2col) + fc1 + fc2
# ---------------------------------------------------------------------------
def _fused_tail_kernel(p2_ref, w2_ref, b2_ref, w3_ref, b3_ref,
                       w1_ref, b1_ref, w2f_ref, b2f_ref,
                       act3_ref, q_ref,
                       *, a2_cols, kh, kw, oh, ow, cpad, hidden):
    # conv2: one MXU matmul on the pre-built per-sample patch block.
    a2 = jnp.dot(p2_ref[0], w2_ref[...], preferred_element_type=jnp.float32)
    a2 = jnp.maximum(a2 + b2_ref[...], 0.0)                  # (h2*w2, cpad) f32

    # conv3 (stride 1): shifted-matmul accumulation with static row slices.
    #   out[oi, oj] = sum_{di,dj} a2[(oi+di)*a2_cols + (oj+dj)] @ W3[di, dj]
    accs = [jnp.zeros((ow, cpad), jnp.float32) for _ in range(oh)]
    for di in range(kh):
        for dj in range(kw):
            wc = w3_ref[(di * kw + dj) * cpad:(di * kw + dj + 1) * cpad, :]
            for oi in range(oh):
                start = (oi + di) * a2_cols + dj
                lhs = a2[start:start + ow, :].astype(jnp.bfloat16)
                accs[oi] = accs[oi] + jnp.dot(
                    lhs, wc, preferred_element_type=jnp.float32)
    a3 = jnp.concatenate(accs, axis=0) if oh > 1 else accs[0]   # (oh*ow, cpad)
    a3 = jnp.maximum(a3 + b3_ref[...], 0.0)                     # f32
    act3_ref[0] = a3.astype(act3_ref.dtype)

    # fc1 (+ReLU) and fc2; feature consumed in position-major order, with the
    # matching row permutation baked into w1_ref by prepare_params.
    z = jnp.zeros((1, hidden), jnp.float32)
    for p in range(oh * ow):
        z = z + jnp.dot(a3[p:p + 1, :].astype(jnp.bfloat16),
                        w1_ref[p * cpad:(p + 1) * cpad, :],
                        preferred_element_type=jnp.float32)
    z = jnp.maximum(z + b1_ref[...], 0.0).astype(jnp.bfloat16)  # (1, hidden)
    q = jnp.dot(z, w2f_ref[...], preferred_element_type=jnp.float32)
    q_ref[0] = (q + b2f_ref[...]).astype(q_ref.dtype)


def _fused_tail_call(p2, prep, *, a2_cols, oh, ow):
    n, m2, k2 = p2.shape
    cpad = prep["c3_w"].shape[1]
    hidden = prep["fc1_w"].shape[1]
    ap = prep["fc2_w"].shape[1]
    p_spatial = oh * ow

    kernel = functools.partial(
        _fused_tail_kernel, a2_cols=a2_cols, kh=_K3, kw=_K3,
        oh=oh, ow=ow, cpad=cpad, hidden=hidden)

    act3, q = pl.pallas_call(
        kernel,
        out_shape=(jax.ShapeDtypeStruct((n, p_spatial, cpad), jnp.float32),
                   jax.ShapeDtypeStruct((n, 1, ap), jnp.float32)),
        grid=(n,),
        in_specs=[
            pl.BlockSpec((1, m2, k2), lambda i: (i, 0, 0)),
            pl.BlockSpec(prep["c2_w"].shape, lambda i: (0, 0)),
            pl.BlockSpec(prep["c2_b"].shape, lambda i: (0, 0)),
            pl.BlockSpec(prep["c3_w"].shape, lambda i: (0, 0)),
            pl.BlockSpec(prep["c3_b"].shape, lambda i: (0, 0)),
            pl.BlockSpec(prep["fc1_w"].shape, lambda i: (0, 0)),
            pl.BlockSpec(prep["fc1_b"].shape, lambda i: (0, 0)),
            pl.BlockSpec(prep["fc2_w"].shape, lambda i: (0, 0)),
            pl.BlockSpec(prep["fc2_b"].shape, lambda i: (0, 0)),
        ],
        out_specs=(pl.BlockSpec((1, p_spatial, cpad), lambda i: (i, 0, 0)),
                   pl.BlockSpec((1, 1, ap), lambda i: (i, 0, 0))),
        compiler_params=_parallel_params(),
    )(p2, prep["c2_w"], prep["c2_b"], prep["c3_w"], prep["c3_b"],
      prep["fc1_w"], prep["fc1_b"], prep["fc2_w"], prep["fc2_b"])
    return act3, q


# ---------------------------------------------------------------------------
# One-time parameter preprocessing (outside the per-step forward)
# ---------------------------------------------------------------------------
def prepare_params(params):
    def conv_mat(w, b):
        cout, cin, kh, kw = w.shape
        cp = _round_up(cout, _LANE)
        m = w.transpose(2, 3, 1, 0).reshape(kh * kw * cin, cout)
        m = jnp.pad(m, ((0, 0), (0, cp - cout))).astype(jnp.bfloat16)
        bv = jnp.pad(b, (0, cp - cout)).astype(jnp.float32).reshape(1, cp)
        return m, bv

    c1w, c1b = conv_mat(params["conv1_w"], params["conv1_b"])
    c2w, c2b = conv_mat(params["conv2_w"], params["conv2_b"])

    # conv3: per-(di,dj) chunk layout with Cin padded to 128 lanes so the fused
    # kernel can feed the full 128-lane conv2 activation straight into the MXU.
    c3 = params["conv3_w"]                               # (Cout, Cin, kh, kw)
    cout3, cin3, kh3, kw3 = c3.shape
    cp = _round_up(max(cout3, cin3), _LANE)
    w3t = c3.transpose(2, 3, 1, 0)                       # (kh, kw, Cin, Cout)
    w3t = jnp.pad(w3t, ((0, 0), (0, 0), (0, cp - cin3), (0, cp - cout3)))
    c3w = w3t.reshape(kh3 * kw3 * cp, cp).astype(jnp.bfloat16)
    c3b = jnp.pad(params["conv3_b"], (0, cp - cout3)).astype(jnp.float32).reshape(1, cp)

    # fc1: permute rows from torch's NCHW flatten (c*P + p) to the fused
    # kernel's position-major layout (p*128 + c), zero-padding c to 128.
    fc1 = params["fc1_w"]                                # (F, hidden)
    feat, hidden = fc1.shape
    p_spatial = feat // cout3
    w1 = fc1.reshape(cout3, p_spatial, hidden).transpose(1, 0, 2)   # (P, c, h)
    w1 = jnp.pad(w1, ((0, 0), (0, cp - cout3), (0, 0)))
    w1 = w1.reshape(p_spatial * cp, hidden).astype(jnp.bfloat16)
    b1 = params["fc1_b"].astype(jnp.float32).reshape(1, hidden)

    fc2 = params["fc2_w"]                                # (hidden, A)
    a = fc2.shape[1]
    ap = _round_up(a, _LANE)
    w2 = jnp.pad(fc2, ((0, 0), (0, ap - a))).astype(jnp.bfloat16)
    b2 = jnp.pad(params["fc2_b"], (0, ap - a)).astype(jnp.float32).reshape(1, ap)

    return {"c1_w": c1w, "c1_b": c1b, "c2_w": c2w, "c2_b": c2b,
            "c3_w": c3w, "c3_b": c3b,
            "fc1_w": w1, "fc1_b": b1, "fc2_w": w2, "fc2_b": b2}


# ---------------------------------------------------------------------------
# QLearner forward
# ---------------------------------------------------------------------------
def make_qlearner_forward(num_actions):
    def forward(prep, x):
        n = x.shape[0]
        x_nhwc = jnp.transpose(x, (0, 2, 3, 1)).astype(jnp.bfloat16)

        # conv1 (Pallas kernel #1), bf16 lane-padded output.
        p1, h1, w1 = _im2col(x_nhwc, _K1, _K1, _S1)
        a1 = _conv1_call(p1, prep["c1_w"], prep["c1_b"])       # (N, h1*w1, 128)
        a1 = a1[:, :, :_C1].reshape(n, h1, w1, _C1)

        # conv2 patches (XLA gather), then fused conv2+conv3+fc head kernel.
        p2, h2, w2 = _im2col(a1, _K2, _K2, _S2)
        h3 = h2 - _K3 + 1
        w3 = w2 - _K3 + 1
        assert prep["fc1_w"].shape[0] == h3 * w3 * _LANE, "feature size mismatch"
        act3, q = _fused_tail_call(p2, prep, a2_cols=w2, oh=h3, ow=w3)

        # torch-compatible outputs: NCHW-flattened feature, (N, A) q-values.
        feature = act3[:, :, :_C3].transpose(0, 2, 1).reshape(n, _C3 * h3 * w3)
        q = q.reshape(n, -1)[:, :num_actions]
        return q, feature
    return forward


# ---------------------------------------------------------------------------
# Parameter init + pure-JAX f32 reference (correctness check only)
# ---------------------------------------------------------------------------
def init_params(key, in_channels, num_actions, feat_size):
    ks = jax.random.split(key, 10)
    s = 0.05

    def w(k, shape):
        return jax.random.normal(k, shape, jnp.float32) * s

    return {
        "conv1_w": w(ks[0], (32, in_channels, 8, 8)), "conv1_b": w(ks[1], (32,)),
        "conv2_w": w(ks[2], (64, 32, 4, 4)), "conv2_b": w(ks[3], (64,)),
        "conv3_w": w(ks[4], (64, 64, 3, 3)), "conv3_b": w(ks[5], (64,)),
        "fc1_w": w(ks[6], (feat_size, 512)), "fc1_b": w(ks[7], (512,)),
        "fc2_w": w(ks[8], (512, num_actions)), "fc2_b": w(ks[9], (num_actions,)),
    }


def _ref_forward(params, x):
    def conv(x, w, b, s):
        y = lax.conv_general_dilated(
            x, w, window_strides=(s, s), padding="VALID",
            dimension_numbers=("NCHW", "OIHW", "NCHW"))
        return jnp.maximum(y + b.reshape(1, -1, 1, 1), 0.0)

    h = conv(x, params["conv1_w"], params["conv1_b"], 4)
    h = conv(h, params["conv2_w"], params["conv2_b"], 2)
    h = conv(h, params["conv3_w"], params["conv3_b"], 1)
    feature = h.reshape(h.shape[0], -1)
    z = jnp.maximum(feature @ params["fc1_w"] + params["fc1_b"], 0.0)
    q = z @ params["fc2_w"] + params["fc2_b"]
    return q, feature


if __name__ == "__main__":
    # Conv-stack-consistent small shapes: 48x48 -> 11x11 -> 4x4 -> 2x2.
    batch, channels, spatial = 2, 4, 48
    num_actions = 6
    feat_size = 64 * 2 * 2  # 256

    key = jax.random.PRNGKey(0)
    kx, kp = jax.random.split(key)
    x = jax.random.normal(kx, (batch, channels, spatial, spatial), jnp.float32)
    params = init_params(kp, channels, num_actions, feat_size)

    prep = prepare_params(params)            # one-time weight preprocessing
    forward = jax.jit(make_qlearner_forward(num_actions))
    q, feature = forward(prep, x)
    jax.block_until_ready((q, feature))

    q_ref, feat_ref = _ref_forward(params, x)
    assert q.shape == (batch, num_actions) and feature.shape == (batch, feat_size)
    # bf16 operands with f32 accumulation: compare against the f32 reference.
    assert jnp.allclose(q, q_ref, rtol=3e-2, atol=3e-2)
    assert jnp.allclose(feature, feat_ref, rtol=3e-2, atol=3e-2)

    print("KERNEL_OK")
</pallas_src>

<mosaic_0001>
module attributes {stable_mosaic.version = 11 : i64} {
  func.func @_conv1_kernel(%arg0: i32, %arg1: memref<1x121x256xbf16, #tpu.memory_space<vmem>>, %arg2: memref<256x128xbf16, #tpu.memory_space<vmem>>, %arg3: memref<1x128xf32, #tpu.memory_space<vmem>>, %arg4: memref<1x121x128xbf16, #tpu.memory_space<vmem>>) attributes {dimension_semantics = [#tpu.dimension_semantics<parallel>], iteration_bounds = array<i64: 2>, scalar_prefetch = 0 : i64, scratch_operands = 0 : i64, tpu.core_type = #tpu.core_type<tc>, window_params = [{transform_indices = @transform_0, window_bounds = array<i64: 1, 121, 256>}, {pipeline_mode = #tpu.pipeline_mode<synchronous>, transform_indices = @transform_1, window_bounds = array<i64: 256, 128>}, {pipeline_mode = #tpu.pipeline_mode<synchronous>, transform_indices = @transform_2, window_bounds = array<i64: 1, 128>}, {transform_indices = @transform_3, window_bounds = array<i64: 1, 121, 128>}]} {
    %c0 = arith.constant 0 : index
    %c0_0 = arith.constant 0 : index
    %c0_1 = arith.constant 0 : index
    %0 = vector.load %arg1[%c0, %c0_0, %c0_1] : memref<1x121x256xbf16, #tpu.memory_space<vmem>>, vector<1x121x256xbf16>
    %1 = vector.shape_cast %0 : vector<1x121x256xbf16> to vector<121x256xbf16>
    %c0_2 = arith.constant 0 : index
    %c0_3 = arith.constant 0 : index
    %2 = vector.load %arg2[%c0_2, %c0_3] : memref<256x128xbf16, #tpu.memory_space<vmem>>, vector<256x128xbf16>
    %cst = arith.constant dense<0.000000e+00> : vector<121x128xf32>
    %3 = tpu.matmul %1, %2, %cst {dimension_numbers = #tpu.dot_dimension_numbers<[1], [0], [0], [1], [0, 0, 1, 1], [], []>} : vector<121x256xbf16>, vector<256x128xbf16>, vector<121x128xf32> -> vector<121x128xf32>
    %c0_4 = arith.constant 0 : index
    %c0_5 = arith.constant 0 : index
    %4 = vector.load %arg3[%c0_4, %c0_5] : memref<1x128xf32, #tpu.memory_space<vmem>>, vector<1x128xf32>
    %5 = vector.broadcast %4 : vector<1x128xf32> to vector<121x128xf32>
    %6 = arith.addf %3, %5 : vector<121x128xf32>
    %cst_6 = arith.constant 0.000000e+00 : f32
    %7 = vector.broadcast %cst_6 : f32 to vector<121x128xf32>
    %8 = arith.maximumf %6, %7 : vector<121x128xf32>
    %9 = arith.truncf %8 : vector<121x128xf32> to vector<121x128xbf16>
    %c0_7 = arith.constant 0 : index
    %c0_8 = arith.constant 0 : index
    %c0_9 = arith.constant 0 : index
    %10 = vector.load %arg4[%c0_7, %c0_8, %c0_9] : memref<1x121x128xbf16, #tpu.memory_space<vmem>>, vector<1x121x128xbf16>
    %11 = vector.shape_cast %10 : vector<1x121x128xbf16> to vector<121x128xbf16>
    %12 = vector.shape_cast %9 : vector<121x128xbf16> to vector<1x121x128xbf16>
    tpu.vector_store %arg4[%c0_7, %c0_8, %c0_9], %12 {strides = array<i32>} : memref<1x121x128xbf16, #tpu.memory_space<vmem>>, vector<1x121x128xbf16>,
    return
  }
  func.func @transform_0(%arg0: i32) -> (i32, i32, i32) {
    %c0_i32 = arith.constant 0 : i32
    %c0_i32_0 = arith.constant 0 : i32
    %c0_i32_1 = arith.constant 0 : i32
    return %arg0, %c0_i32, %c0_i32_0 : i32, i32, i32
  }
  func.func @transform_1(%arg0: i32) -> (i32, i32) {
    %c0_i32 = arith.constant 0 : i32
    %c0_i32_0 = arith.constant 0 : i32
    %c0_i32_1 = arith.constant 0 : i32
    return %c0_i32, %c0_i32_0 : i32, i32
  }
  func.func @transform_2(%arg0: i32) -> (i32, i32) {
    %c0_i32 = arith.constant 0 : i32
    %c0_i32_0 = arith.constant 0 : i32
    %c0_i32_1 = arith.constant 0 : i32
    return %c0_i32, %c0_i32_0 : i32, i32
  }
  func.func @transform_3(%arg0: i32) -> (i32, i32, i32) {
    %c0_i32 = arith.constant 0 : i32
    %c0_i32_0 = arith.constant 0 : i32
    %c0_i32_1 = arith.constant 0 : i32
    return %arg0, %c0_i32, %c0_i32_0 : i32, i32, i32
  }
}

module attributes {stable_mosaic.version = 11 : i64} {
  func.func @_fused_tail_kernel(%arg0: i32, %arg1: memref<1x16x512xbf16, #tpu.memory_space<vmem>>, %arg2: memref<512x128xbf16, #tpu.memory_space<vmem>>, %arg3: memref<1x128xf32, #tpu.memory_space<vmem>>, %arg4: memref<1152x128xbf16, #tpu.memory_space<vmem>>, %arg5: memref<1x128xf32, #tpu.memory_space<vmem>>, %arg6: memref<512x512xbf16, #tpu.memory_space<vmem>>, %arg7: memref<1x512xf32, #tpu.memory_space<vmem>>, %arg8: memref<512x128xbf16, #tpu.memory_space<vmem>>, %arg9: memref<1x128xf32, #tpu.memory_space<vmem>>, %arg10: memref<1x4x128xf32, #tpu.memory_space<vmem>>, %arg11: memref<1x1x128xf32, #tpu.memory_space<vmem>>) attributes {dimension_semantics = [#tpu.dimension_semantics<parallel>], iteration_bounds = array<i64: 2>, scalar_prefetch = 0 : i64, scratch_operands = 0 : i64, tpu.core_type = #tpu.core_type<tc>, window_params = [{transform_indices = @transform_0, window_bounds = array<i64: 1, 16, 512>}, {pipeline_mode = #tpu.pipeline_mode<synchronous>, transform_indices = @transform_1, window_bounds = array<i64: 512, 128>}, {pipeline_mode = #tpu.pipeline_mode<synchronous>, transform_indices = @transform_2, window_bounds = array<i64: 1, 128>}, {pipeline_mode = #tpu.pipeline_mode<synchronous>, transform_indices = @transform_3, window_bounds = array<i64: 1152, 128>}, {pipeline_mode = #tpu.pipeline_mode<synchronous>, transform_indices = @transform_4, window_bounds = array<i64: 1, 128>}, {pipeline_mode = #tpu.pipeline_mode<synchronous>, transform_indices = @transform_5, window_bounds = array<i64: 512, 512>}, {pipeline_mode = #tpu.pipeline_mode<synchronous>, transform_indices = @transform_6, window_bounds = array<i64: 1, 512>}, {pipeline_mode = #tpu.pipeline_mode<synchronous>, transform_indices = @transform_7, window_bounds = array<i64: 512, 128>}, {pipeline_mode = #tpu.pipeline_mode<synchronous>, transform_indices = @transform_8, window_bounds = array<i64: 1, 128>}, {transform_indices = @transform_9, window_bounds = array<i64: 1, 4, 128>}, {transform_indices = @transform_10, window_bounds = array<i64: 1, 1, 128>}]} {
    %c0 = arith.constant 0 : index
    %c0_0 = arith.constant 0 : index
    %c0_1 = arith.constant 0 : index
    %0 = vector.load %arg1[%c0, %c0_0, %c0_1] : memref<1x16x512xbf16, #tpu.memory_space<vmem>>, vector<1x16x512xbf16>
    %1 = vector.shape_cast %0 : vector<1x16x512xbf16> to vector<16x512xbf16>
    %c0_2 = arith.constant 0 : index
    %c0_3 = arith.constant 0 : index
    %2 = vector.load %arg2[%c0_2, %c0_3] : memref<512x128xbf16, #tpu.memory_space<vmem>>, vector<512x128xbf16>
    %cst = arith.constant dense<0.000000e+00> : vector<16x128xf32>
    %3 = tpu.matmul %1, %2, %cst {dimension_numbers = #tpu.dot_dimension_numbers<[1], [0], [0], [1], [0, 0, 1, 1], [], []>} : vector<16x512xbf16>, vector<512x128xbf16>, vector<16x128xf32> -> vector<16x128xf32>
    %c0_4 = arith.constant 0 : index
    %c0_5 = arith.constant 0 : index
    %4 = vector.load %arg3[%c0_4, %c0_5] : memref<1x128xf32, #tpu.memory_space<vmem>>, vector<1x128xf32>
    %5 = vector.broadcast %4 : vector<1x128xf32> to vector<16x128xf32>
    %6 = arith.addf %3, %5 : vector<16x128xf32>
    %cst_6 = arith.constant 0.000000e+00 : f32
    %7 = vector.broadcast %cst_6 : f32 to vector<16x128xf32>
    %8 = arith.maximumf %6, %7 : vector<16x128xf32>
    %cst_7 = arith.constant 0.000000e+00 : f32
    %9 = vector.broadcast %cst_7 : f32 to vector<2x128xf32>
    %cst_8 = arith.constant 0.000000e+00 : f32
    %10 = vector.broadcast %cst_8 : f32 to vector<2x128xf32>
    %c0_9 = arith.constant 0 : index
    %c0_10 = arith.constant 0 : index
    %11 = vector.load %arg4[%c0_9, %c0_10] : memref<1152x128xbf16, #tpu.memory_space<vmem>>, vector<128x128xbf16>
    %12 = vector.extract_strided_slice %8 {offsets = [0, 0], sizes = [2, 128], strides = [1, 1]} : vector<16x128xf32> to vector<2x128xf32>
    %13 = arith.truncf %12 : vector<2x128xf32> to vector<2x128xbf16>
    %cst_11 = arith.constant dense<0.000000e+00> : vector<2x128xf32>
    %14 = tpu.matmul %13, %11, %cst_11 {dimension_numbers = #tpu.dot_dimension_numbers<[1], [0], [0], [1], [0, 0, 1, 1], [], []>} : vector<2x128xbf16>, vector<128x128xbf16>, vector<2x128xf32> -> vector<2x128xf32>
    %15 = arith.addf %9, %14 : vector<2x128xf32>
    %16 = vector.extract_strided_slice %8 {offsets = [4, 0], sizes = [2, 128], strides = [1, 1]} : vector<16x128xf32> to vector<2x128xf32>
    %17 = arith.truncf %16 : vector<2x128xf32> to vector<2x128xbf16>
    %cst_12 = arith.constant dense<0.000000e+00> : vector<2x128xf32>
    %18 = tpu.matmul %17, %11, %cst_12 {dimension_numbers = #tpu.dot_dimension_numbers<[1], [0], [0], [1], [0, 0, 1, 1], [], []>} : vector<2x128xbf16>, vector<128x128xbf16>, vector<2x128xf32> -> vector<2x128xf32>
    %19 = arith.addf %10, %18 : vector<2x128xf32>
    %c128 = arith.constant 128 : index
    %c0_13 = arith.constant 0 : index
    %20 = vector.load %arg4[%c128, %c0_13] : memref<1152x128xbf16, #tpu.memory_space<vmem>>, vector<128x128xbf16>
    %21 = vector.extract_strided_slice %8 {offsets = [1, 0], sizes = [2, 128], strides = [1, 1]} : vector<16x128xf32> to vector<2x128xf32>
    %22 = arith.truncf %21 : vector<2x128xf32> to vector<2x128xbf16>
    %cst_14 = arith.constant dense<0.000000e+00> : vector<2x128xf32>
    %23 = tpu.matmul %22, %20, %cst_14 {dimension_numbers = #tpu.dot_dimension_numbers<[1], [0], [0], [1], [0, 0, 1, 1], [], []>} : vector<2x128xbf16>, vector<128x128xbf16>, vector<2x128xf32> -> vector<2x128xf32>
    %24 = arith.addf %15, %23 : vector<2x128xf32>
    %25 = vector.extract_strided_slice %8 {offsets = [5, 0], sizes = [2, 128], strides = [1, 1]} : vector<16x128xf32> to vector<2x128xf32>
    %26 = arith.truncf %25 : vector<2x128xf32> to vector<2x128xbf16>
    %cst_15 = arith.constant dense<0.000000e+00> : vector<2x128xf32>
    %27 = tpu.matmul %26, %20, %cst_15 {dimension_numbers = #tpu.dot_dimension_numbers<[1], [0], [0], [1], [0, 0, 1, 1], [], []>} : vector<2x128xbf16>, vector<128x128xbf16>, vector<2x128xf32> -> vector<2x128xf32>
    %28 = arith.addf %19, %27 : vector<2x128xf32>
    %c256 = arith.constant 256 : index
    %c0_16 = arith.constant 0 : index
    %29 = vector.load %arg4[%c256, %c0_16] : memref<1152x128xbf16, #tpu.memory_space<vmem>>, vector<128x128xbf16>
    %30 = vector.extract_strided_slice %8 {offsets = [2, 0], sizes = [2, 128], strides = [1, 1]} : vector<16x128xf32> to vector<2x128xf32>
    %31 = arith.truncf %30 : vector<2x128xf32> to vector<2x128xbf16>
    %cst_17 = arith.constant dense<0.000000e+00> : vector<2x128xf32>
    %32 = tpu.matmul %31, %29, %cst_17 {dimension_numbers = #tpu.dot_dimension_numbers<[1], [0], [0], [1], [0, 0, 1, 1], [], []>} : vector<2x128xbf16>, vector<128x128xbf16>, vector<2x128xf32> -> vector<2x128xf32>
    %33 = arith.addf %24, %32 : vector<2x128xf32>
    %34 = vector.extract_strided_slice %8 {offsets = [6, 0], sizes = [2, 128], strides = [1, 1]} : vector<16x128xf32> to vector<2x128xf32>
    %35 = arith.truncf %34 : vector<2x128xf32> to vector<2x128xbf16>
    %cst_18 = arith.constant dense<0.000000e+00> : vector<2x128xf32>
    %36 = tpu.matmul %35, %29, %cst_18 {dimension_numbers = #tpu.dot_dimension_numbers<[1], [0], [0], [1], [0, 0, 1, 1], [], []>} : vector<2x128xbf16>, vector<128x128xbf16>, vector<2x128xf32> -> vector<2x128xf32>
    %37 = arith.addf %28, %36 : vector<2x128xf32>
    %c384 = arith.constant 384 : index
    %c0_19 = arith.constant 0 : index
    %38 = vector.load %arg4[%c384, %c0_19] : memref<1152x128xbf16, #tpu.memory_space<vmem>>, vector<128x128xbf16>
    %39 = vector.extract_strided_slice %8 {offsets = [4, 0], sizes = [2, 128], strides = [1, 1]} : vector<16x128xf32> to vector<2x128xf32>
    %40 = arith.truncf %39 : vector<2x128xf32> to vector<2x128xbf16>
    %cst_20 = arith.constant dense<0.000000e+00> : vector<2x128xf32>
    %41 = tpu.matmul %40, %38, %cst_20 {dimension_numbers = #tpu.dot_dimension_numbers<[1], [0], [0], [1], [0, 0, 1, 1], [], []>} : vector<2x128xbf16>, vector<128x128xbf16>, vector<2x128xf32> -> vector<2x128xf32>
    %42 = arith.addf %33, %41 : vector<2x128xf32>
    %43 = vector.extract_strided_slice %8 {offsets = [8, 0], sizes = [2, 128], strides = [1, 1]} : vector<16x128xf32> to vector<2x128xf32>
    %44 = arith.truncf %43 : vector<2x128xf32> to vector<2x128xbf16>
    %cst_21 = arith.constant dense<0.000000e+00> : vector<2x128xf32>
    %45 = tpu.matmul %44, %38, %cst_21 {dimension_numbers = #tpu.dot_dimension_numbers<[1], [0], [0], [1], [0, 0, 1, 1], [], []>} : vector<2x128xbf16>, vector<128x128xbf16>, vector<2x128xf32> -> vector<2x128xf32>
    %46 = arith.addf %37, %45 : vector<2x128xf32>
    %c512 = arith.constant 512 : index
    %c0_22 = arith.constant 0 : index
    %47 = vector.load %arg4[%c512, %c0_22] : memref<1152x128xbf16, #tpu.memory_space<vmem>>, vector<128x128xbf16>
    %48 = vector.extract_strided_slice %8 {offsets = [5, 0], sizes = [2, 128], strides = [1, 1]} : vector<16x128xf32> to vector<2x128xf32>
    %49 = arith.truncf %48 : vector<2x128xf32> to vector<2x128xbf16>
    %cst_23 = arith.constant dense<0.000000e+00> : vector<2x128xf32>
    %50 = tpu.matmul %49, %47, %cst_23 {dimension_numbers = #tpu.dot_dimension_numbers<[1], [0], [0], [1], [0, 0, 1, 1], [], []>} : vector<2x128xbf16>, vector<128x128xbf16>, vector<2x128xf32> -> vector<2x128xf32>
    %51 = arith.addf %42, %50 : vector<2x128xf32>
    %52 = vector.extract_strided_slice %8 {offsets = [9, 0], sizes = [2, 128], strides = [1, 1]} : vector<16x128xf32> to vector<2x128xf32>
    %53 = arith.truncf %52 : vector<2x128xf32> to vector<2x128xbf16>
    %cst_24 = arith.constant dense<0.000000e+00> : vector<2x128xf32>
    %54 = tpu.matmul %53, %47, %cst_24 {dimension_numbers = #tpu.dot_dimension_numbers<[1], [0], [0], [1], [0, 0, 1, 1], [], []>} : vector<2x128xbf16>, vector<128x128xbf16>, vector<2x128xf32> -> vector<2x128xf32>
    %55 = arith.addf %46, %54 : vector<2x128xf32>
    %c640 = arith.constant 640 : index
    %c0_25 = arith.constant 0 : index
    %56 = vector.load %arg4[%c640, %c0_25] : memref<1152x128xbf16, #tpu.memory_space<vmem>>, vector<128x128xbf16>
    %57 = vector.extract_strided_slice %8 {offsets = [6, 0], sizes = [2, 128], strides = [1, 1]} : vector<16x128xf32> to vector<2x128xf32>
    %58 = arith.truncf %57 : vector<2x128xf32> to vector<2x128xbf16>
    %cst_26 = arith.constant dense<0.000000e+00> : vector<2x128xf32>
    %59 = tpu.matmul %58, %56, %cst_26 {dimension_numbers = #tpu.dot_dimension_numbers<[1], [0], [0], [1], [0, 0, 1, 1], [], []>} : vector<2x128xbf16>, vector<128x128xbf16>, vector<2x128xf32> -> vector<2x128xf32>
    %60 = arith.addf %51, %59 : vector<2x128xf32>
    %61 = vector.extract_strided_slice %8 {offsets = [10, 0], sizes = [2, 128], strides = [1, 1]} : vector<16x128xf32> to vector<2x128xf32>
    %62 = arith.truncf %61 : vector<2x128xf32> to vector<2x128xbf16>
    %cst_27 = arith.constant dense<0.000000e+00> : vector<2x128xf32>
    %63 = tpu.matmul %62, %56, %cst_27 {dimension_numbers = #tpu.dot_dimension_numbers<[1], [0], [0], [1], [0, 0, 1, 1], [], []>} : vector<2x128xbf16>, vector<128x128xbf16>, vector<2x128xf32> -> vector<2x128xf32>
    %64 = arith.addf %55, %63 : vector<2x128xf32>
    %c768 = arith.constant 768 : index
    %c0_28 = arith.constant 0 : index
    %65 = vector.load %arg4[%c768, %c0_28] : memref<1152x128xbf16, #tpu.memory_space<vmem>>, vector<128x128xbf16>
    %66 = vector.extract_strided_slice %8 {offsets = [8, 0], sizes = [2, 128], strides = [1, 1]} : vector<16x128xf32> to vector<2x128xf32>
    %67 = arith.truncf %66 : vector<2x128xf32> to vector<2x128xbf16>
    %cst_29 = arith.constant dense<0.000000e+00> : vector<2x128xf32>
    %68 = tpu.matmul %67, %65, %cst_29 {dimension_numbers = #tpu.dot_dimension_numbers<[1], [0], [0], [1], [0, 0, 1, 1], [], []>} : vector<2x128xbf16>, vector<128x128xbf16>, vector<2x128xf32> -> vector<2x128xf32>
    %69 = arith.addf %60, %68 : vector<2x128xf32>
    %70 = vector.extract_strided_slice %8 {offsets = [12, 0], sizes = [2, 128], strides = [1, 1]} : vector<16x128xf32> to vector<2x128xf32>
    %71 = arith.truncf %70 : vector<2x128xf32> to vector<2x128xbf16>
    %cst_30 = arith.constant dense<0.000000e+00> : vector<2x128xf32>
    %72 = tpu.matmul %71, %65, %cst_30 {dimension_numbers = #tpu.dot_dimension_numbers<[1], [0], [0], [1], [0, 0, 1, 1], [], []>} : vector<2x128xbf16>, vector<128x128xbf16>, vector<2x128xf32> -> vector<2x128xf32>
    %73 = arith.addf %64, %72 : vector<2x128xf32>
    %c896 = arith.constant 896 : index
    %c0_31 = arith.constant 0 : index
    %74 = vector.load %arg4[%c896, %c0_31] : memref<1152x128xbf16, #tpu.memory_space<vmem>>, vector<128x128xbf16>
    %75 = vector.extract_strided_slice %8 {offsets = [9, 0], sizes = [2, 128], strides = [1, 1]} : vector<16x128xf32> to vector<2x128xf32>
    %76 = arith.truncf %75 : vector<2x128xf32> to vector<2x128xbf16>
    %cst_32 = arith.constant dense<0.000000e+00> : vector<2x128xf32>
    %77 = tpu.matmul %76, %74, %cst_32 {dimension_numbers = #tpu.dot_dimension_numbers<[1], [0], [0], [1], [0, 0, 1, 1], [], []>} : vector<2x128xbf16>, vector<128x128xbf16>, vector<2x128xf32> -> vector<2x128xf32>
    %78 = arith.addf %69, %77 : vector<2x128xf32>
    %79 = vector.extract_strided_slice %8 {offsets = [13, 0], sizes = [2, 128], strides = [1, 1]} : vector<16x128xf32> to vector<2x128xf32>
    %80 = arith.truncf %79 : vector<2x128xf32> to vector<2x128xbf16>
    %cst_33 = arith.constant dense<0.000000e+00> : vector<2x128xf32>
    %81 = tpu.matmul %80, %74, %cst_33 {dimension_numbers = #tpu.dot_dimension_numbers<[1], [0], [0], [1], [0, 0, 1, 1], [], []>} : vector<2x128xbf16>, vector<128x128xbf16>, vector<2x128xf32> -> vector<2x128xf32>
    %82 = arith.addf %73, %81 : vector<2x128xf32>
    %c1024 = arith.constant 1024 : index
    %c0_34 = arith.constant 0 : index
    %83 = vector.load %arg4[%c1024, %c0_34] : memref<1152x128xbf16, #tpu.memory_space<vmem>>, vector<128x128xbf16>
    %84 = vector.extract_strided_slice %8 {offsets = [10, 0], sizes = [2, 128], strides = [1, 1]} : vector<16x128xf32> to vector<2x128xf32>
    %85 = arith.truncf %84 : vector<2x128xf32> to vector<2x128xbf16>
    %cst_35 = arith.constant dense<0.000000e+00> : vector<2x128xf32>
    %86 = tpu.matmul %85, %83, %cst_35 {dimension_numbers = #tpu.dot_dimension_numbers<[1], [0], [0], [1], [0, 0, 1, 1], [], []>} : vector<2x128xbf16>, vector<128x128xbf16>, vector<2x128xf32> -> vector<2x128xf32>
    %87 = arith.addf %78, %86 : vector<2x128xf32>
    %88 = vector.extract_strided_slice %8 {offsets = [14, 0], sizes = [2, 128], strides = [1, 1]} : vector<16x128xf32> to vector<2x128xf32>
    %89 = arith.truncf %88 : vector<2x128xf32> to vector<2x128xbf16>
    %cst_36 = arith.constant dense<0.000000e+00> : vector<2x128xf32>
    %90 = tpu.matmul %89, %83, %cst_36 {dimension_numbers = #tpu.dot_dimension_numbers<[1], [0], [0], [1], [0, 0, 1, 1], [], []>} : vector<2x128xbf16>, vector<128x128xbf16>, vector<2x128xf32> -> vector<2x128xf32>
    %91 = arith.addf %82, %90 : vector<2x128xf32>
    %92 = tpu.concatenate %87, %91 in 0 : vector<2x128xf32>, vector<2x128xf32> -> vector<4x128xf32>
    %c0_37 = arith.constant 0 : index
    %c0_38 = arith.constant 0 : index
    %93 = vector.load %arg5[%c0_37, %c0_38] : memref<1x128xf32, #tpu.memory_space<vmem>>, vector<1x128xf32>
    %94 = vector.broadcast %93 : vector<1x128xf32> to vector<4x128xf32>
    %95 = arith.addf %92, %94 : vector<4x128xf32>
    %cst_39 = arith.constant 0.000000e+00 : f32
    %96 = vector.broadcast %cst_39 : f32 to vector<4x128xf32>
    %97 = arith.maximumf %95, %96 : vector<4x128xf32>
    %c0_40 = arith.constant 0 : index
    %c0_41 = arith.constant 0 : index
    %c0_42 = arith.constant 0 : index
    %98 = vector.load %arg10[%c0_40, %c0_41, %c0_42] : memref<1x4x128xf32, #tpu.memory_space<vmem>>, vector<1x4x128xf32>
    %99 = vector.shape_cast %98 : vector<1x4x128xf32> to vector<4x128xf32>
    %100 = vector.shape_cast %97 : vector<4x128xf32> to vector<1x4x128xf32>
    tpu.vector_store %arg10[%c0_40, %c0_41, %c0_42], %100 {strides = array<i32>} : memref<1x4x128xf32, #tpu.memory_space<vmem>>, vector<1x4x128xf32>,
    %cst_43 = arith.constant 0.000000e+00 : f32
    %101 = vector.broadcast %cst_43 : f32 to vector<1x512xf32>
    %102 = vector.extract_strided_slice %97 {offsets = [0, 0], sizes = [1, 128], strides = [1, 1]} : vector<4x128xf32> to vector<1x128xf32>
    %103 = arith.truncf %102 : vector<1x128xf32> to vector<1x128xbf16>
    %c0_44 = arith.constant 0 : index
    %c0_45 = arith.constant 0 : index
    %104 = vector.load %arg6[%c0_44, %c0_45] : memref<512x512xbf16, #tpu.memory_space<vmem>>, vector<128x512xbf16>
    %cst_46 = arith.constant dense<0.000000e+00> : vector<1x512xf32>
    %105 = tpu.matmul %103, %104, %cst_46 {dimension_numbers = #tpu.dot_dimension_numbers<[1], [0], [0], [1], [0, 0, 1, 1], [], []>} : vector<1x128xbf16>, vector<128x512xbf16>, vector<1x512xf32> -> vector<1x512xf32>
    %106 = arith.addf %101, %105 : vector<1x512xf32>
    %107 = vector.extract_strided_slice %97 {offsets = [1, 0], sizes = [1, 128], strides = [1, 1]} : vector<4x128xf32> to vector<1x128xf32>
    %108 = arith.truncf %107 : vector<1x128xf32> to vector<1x128xbf16>
    %c128_47 = arith.constant 128 : index
    %c0_48 = arith.constant 0 : index
    %109 = vector.load %arg6[%c128_47, %c0_48] : memref<512x512xbf16, #tpu.memory_space<vmem>>, vector<128x512xbf16>
    %cst_49 = arith.constant dense<0.000000e+00> : vector<1x512xf32>
    %110 = tpu.matmul %108, %109, %cst_49 {dimension_numbers = #tpu.dot_dimension_numbers<[1], [0], [0], [1], [0, 0, 1, 1], [], []>} : vector<1x128xbf16>, vector<128x512xbf16>, vector<1x512xf32> -> vector<1x512xf32>
    %111 = arith.addf %106, %110 : vector<1x512xf32>
    %112 = vector.extract_strided_slice %97 {offsets = [2, 0], sizes = [1, 128], strides = [1, 1]} : vector<4x128xf32> to vector<1x128xf32>
    %113 = arith.truncf %112 : vector<1x128xf32> to vector<1x128xbf16>
    %c256_50 = arith.constant 256 : index
    %c0_51 = arith.constant 0 : index
    %114 = vector.load %arg6[%c256_50, %c0_51] : memref<512x512xbf16, #tpu.memory_space<vmem>>, vector<128x512xbf16>
    %cst_52 = arith.constant dense<0.000000e+00> : vector<1x512xf32>
    %115 = tpu.matmul %113, %114, %cst_52 {dimension_numbers = #tpu.dot_dimension_numbers<[1], [0], [0], [1], [0, 0, 1, 1], [], []>} : vector<1x128xbf16>, vector<128x512xbf16>, vector<1x512xf32> -> vector<1x512xf32>
    %116 = arith.addf %111, %115 : vector<1x512xf32>
    %117 = vector.extract_strided_slice %97 {offsets = [3, 0], sizes = [1, 128], strides = [1, 1]} : vector<4x128xf32> to vector<1x128xf32>
    %118 = arith.truncf %117 : vector<1x128xf32> to vector<1x128xbf16>
    %c384_53 = arith.constant 384 : index
    %c0_54 = arith.constant 0 : index
    %119 = vector.load %arg6[%c384_53, %c0_54] : memref<512x512xbf16, #tpu.memory_space<vmem>>, vector<128x512xbf16>
    %cst_55 = arith.constant dense<0.000000e+00> : vector<1x512xf32>
    %120 = tpu.matmul %118, %119, %cst_55 {dimension_numbers = #tpu.dot_dimension_numbers<[1], [0], [0], [1], [0, 0, 1, 1], [], []>} : vector<1x128xbf16>, vector<128x512xbf16>, vector<1x512xf32> -> vector<1x512xf32>
    %121 = arith.addf %116, %120 : vector<1x512xf32>
    %c0_56 = arith.constant 0 : index
    %c0_57 = arith.constant 0 : index
    %122 = vector.load %arg7[%c0_56, %c0_57] : memref<1x512xf32, #tpu.memory_space<vmem>>, vector<1x512xf32>
    %123 = arith.addf %121, %122 : vector<1x512xf32>
    %cst_58 = arith.constant 0.000000e+00 : f32
    %124 = vector.broadcast %cst_58 : f32 to vector<1x512xf32>
    %125 = arith.maximumf %123, %124 : vector<1x512xf32>
    %126 = arith.truncf %125 : vector<1x512xf32> to vector<1x512xbf16>
    %c0_59 = arith.constant 0 : index
    %c0_60 = arith.constant 0 : index
    %127 = vector.load %arg8[%c0_59, %c0_60] : memref<512x128xbf16, #tpu.memory_space<vmem>>, vector<512x128xbf16>
    %cst_61 = arith.constant dense<0.000000e+00> : vector<1x128xf32>
    %128 = tpu.matmul %126, %127, %cst_61 {dimension_numbers = #tpu.dot_dimension_numbers<[1], [0], [0], [1], [0, 0, 1, 1], [], []>} : vector<1x512xbf16>, vector<512x128xbf16>, vector<1x128xf32> -> vector<1x128xf32>
    %c0_62 = arith.constant 0 : index
    %c0_63 = arith.constant 0 : index
    %129 = vector.load %arg9[%c0_62, %c0_63] : memref<1x128xf32, #tpu.memory_space<vmem>>, vector<1x128xf32>
    %130 = arith.addf %128, %129 : vector<1x128xf32>
    %c0_64 = arith.constant 0 : index
    %c0_65 = arith.constant 0 : index
    %c0_66 = arith.constant 0 : index
    %131 = vector.load %arg11[%c0_64, %c0_65, %c0_66] : memref<1x1x128xf32, #tpu.memory_space<vmem>>, vector<1x1x128xf32>
    %132 = vector.shape_cast %131 : vector<1x1x128xf32> to vector<1x128xf32>
    %133 = vector.shape_cast %130 : vector<1x128xf32> to vector<1x1x128xf32>
    tpu.vector_store %arg11[%c0_64, %c0_65, %c0_66], %133 {strides = array<i32>} : memref<1x1x128xf32, #tpu.memory_space<vmem>>, vector<1x1x128xf32>,
    return
  }
  func.func @transform_0(%arg0: i32) -> (i32, i32, i32) {
    %c0_i32 = arith.constant 0 : i32
    %c0_i32_0 = arith.constant 0 : i32
    %c0_i32_1 = arith.constant 0 : i32
    return %arg0, %c0_i32, %c0_i32_0 : i32, i32, i32
  }
  func.func @transform_1(%arg0: i32) -> (i32, i32) {
    %c0_i32 = arith.constant 0 : i32
    %c0_i32_0 = arith.constant 0 : i32
    %c0_i32_1 = arith.constant 0 : i32
    return %c0_i32, %c0_i32_0 : i32, i32
  }
  func.func @transform_2(%arg0: i32) -> (i32, i32) {
    %c0_i32 = arith.constant 0 : i32
    %c0_i32_0 = arith.constant 0 : i32
    %c0_i32_1 = arith.constant 0 : i32
    return %c0_i32, %c0_i32_0 : i32, i32
  }
  func.func @transform_3(%arg0: i32) -> (i32, i32) {
    %c0_i32 = arith.constant 0 : i32
    %c0_i32_0 = arith.constant 0 : i32
    %c0_i32_1 = arith.constant 0 : i32
    return %c0_i32, %c0_i32_0 : i32, i32
  }
  func.func @transform_4(%arg0: i32) -> (i32, i32) {
    %c0_i32 = arith.constant 0 : i32
    %c0_i32_0 = arith.constant 0 : i32
    %c0_i32_1 = arith.constant 0 : i32
    return %c0_i32, %c0_i32_0 : i32, i32
  }
  func.func @transform_5(%arg0: i32) -> (i32, i32) {
    %c0_i32 = arith.constant 0 : i32
    %c0_i32_0 = arith.constant 0 : i32
    %c0_i32_1 = arith.constant 0 : i32
    return %c0_i32, %c0_i32_0 : i32, i32
  }
  func.func @transform_6(%arg0: i32) -> (i32, i32) {
    %c0_i32 = arith.constant 0 : i32
    %c0_i32_0 = arith.constant 0 : i32
    %c0_i32_1 = arith.constant 0 : i32
    return %c0_i32, %c0_i32_0 : i32, i32
  }
  func.func @transform_7(%arg0: i32) -> (i32, i32) {
    %c0_i32 = arith.constant 0 : i32
    %c0_i32_0 = arith.constant 0 : i32
    %c0_i32_1 = arith.constant 0 : i32
    return %c0_i32, %c0_i32_0 : i32, i32
  }
  func.func @transform_8(%arg0: i32) -> (i32, i32) {
    %c0_i32 = arith.constant 0 : i32
    %c0_i32_0 = arith.constant 0 : i32
    %c0_i32_1 = arith.constant 0 : i32
    return %c0_i32, %c0_i32_0 : i32, i32
  }
  func.func @transform_9(%arg0: i32) -> (i32, i32, i32) {
    %c0_i32 = arith.constant 0 : i32
    %c0_i32_0 = arith.constant 0 : i32
    %c0_i32_1 = arith.constant 0 : i32
    return %arg0, %c0_i32, %c0_i32_0 : i32, i32, i32
  }
  func.func @transform_10(%arg0: i32) -> (i32, i32, i32) {
    %c0_i32 = arith.constant 0 : i32
    %c0_i32_0 = arith.constant 0 : i32
    %c0_i32_1 = arith.constant 0 : i32
    return %arg0, %c0_i32, %c0_i32_0 : i32, i32, i32
  }
}

</mosaic_0001>

<llo_original>
// kernel: forward.2
$region0: #{forward.2}
  #allocation0 [shape = 'u32[]', space=smem, size = 0x4, offset = 0x4, fixed_abs, tag = 'smem constant byte address 0x4 - core index']
  #allocation1 [shape = 'u32[144,128]{1,0:T(1,128)}', space=vmem, size = 0x12000, scoped, tag = 'internal scratch']
  %s0 = inlined_call_operand.vmem [shape: bf16[2,121,256], index: 0, kind: input, shape index: {}]
  %s1 = inlined_call_operand.vmem [shape: bf16[256,128], index: 1, kind: input, shape index: {}]
  %s2 = inlined_call_operand.vmem [shape: f32[1,128], index: 2, kind: input, shape index: {}]
  %s3 = inlined_call_operand.vmem [shape: bf16[2,121,128], index: 3, kind: output, shape index: {}]
  %s4 = sld [smem:[#allocation0]]
  $region45: #{forward.2} parent=0
    _
  %s6 = ssub.s32 1, %s4
  %s7 = scalar_select 0, %s6, %s4
  loop: start=0, step=1, limit=4
  $region2: #{forward.2} parent=0 // loop_pre_header
    _
  $region3: #{forward.2} parent=0 // loop_header
    %s9 = sphi 0, %s13
    %p10 = scmp.ge.s32.totalorder %s9, 4
    %s19 = sphi 0, %s21
    %s22 = sphi 0, %s19
    %s23 = sphi 0, %s22
    %s39 = sphi 0, %s23
    %s43 = sphi 0, %s43
    %s45 = sphi 0, %s43
    %s46 = sphi 0, %s45
    %s60 = sphi 0, %s46
    %s64 = sphi 0, %s64
    %s66 = sphi 0, %s64
    %s67 = sphi 0, %s66
    %s81 = sphi 0, %s67
    %s87 = sphi 0, %s89
    %s90 = sphi 0, %s87
    %s91 = sphi 0, %s90
    %s107 = sphi 0, %s91
  $region4: #{forward.2} parent=0 // loop_header_branch
    %12 = sbr.rel (%p10) target = $region8
  $region5: #{forward.2} parent=0 // loop_body
    %s14 = ssub.s32 %s9, 1
    %s15 = ssub.s32 %s9, 2
    %s16 = sadd.s32 %s9, 1
    %s17 = ssub.s32 %s9, %s16
    %p18 = scmp.eq.s32.totalorder %s17, 0
    %s20 = sadd.s32 %s19, 1
    %s21 = scalar_select %p18, %s19, %s20
    %p24 = pneg %p18
    %p25 = scmp.eq.s32.totalorder %s9, 1
    %p26 = por %p24, %p25
    %p27 = scmp.ne.s32.totalorder %s19, %s22
    %p28 = scmp.eq.s32.totalorder %s9, 0
    %p29 = por %p27, %p28
    %p30 = scmp.ne.s32.totalorder %s19, %s22
    %p31 = scmp.eq.s32.totalorder %s14, 1
    %p32 = por %p30, %p31
    %p33 = scmp.ne.s32.totalorder %s22, %s23
    %p34 = scmp.eq.s32.totalorder %s14, 0
    %p35 = por %p33, %p34
    %p36 = scmp.ne.s32.totalorder %s22, %s23
    %p37 = scmp.eq.s32.totalorder %s15, 1
    %p38 = por %p36, %p37
    %p40 = scmp.ne.s32.totalorder %s23, %s39
    %p41 = scmp.eq.s32.totalorder %s15, 0
    %p42 = por %p40, %p41
    %s44 = sadd.s32 %s43, 1
    %p47 = scmp.eq.s32.totalorder %s9, 1
    %p48 = scmp.ne.s32.totalorder %s43, %s45
    %p49 = scmp.eq.s32.totalorder %s9, 0
    %p50 = por %p48, %p49
    %p51 = scmp.ne.s32.totalorder %s43, %s45
    %p52 = scmp.eq.s32.totalorder %s14, 1
    %p53 = por %p51, %p52
    %p54 = scmp.ne.s32.totalorder %s45, %s46
    %p55 = scmp.eq.s32.totalorder %s14, 0
    %p56 = por %p54, %p55
    %p57 = scmp.ne.s32.totalorder %s45, %s46
    %p58 = scmp.eq.s32.totalorder %s15, 1
    %p59 = por %p57, %p58
    %p61 = scmp.ne.s32.totalorder %s46, %s60
    %p62 = scmp.eq.s32.totalorder %s15, 0
    %p63 = por %p61, %p62
    %s65 = sadd.s32 %s64, 1
    %p68 = scmp.eq.s32.totalorder %s9, 1
    %p69 = scmp.ne.s32.totalorder %s64, %s66
    %p70 = scmp.eq.s32.totalorder %s9, 0
    %p71 = por %p69, %p70
    %p72 = scmp.ne.s32.totalorder %s64, %s66
    %p73 = scmp.eq.s32.totalorder %s14, 1
    %p74 = por %p72, %p73
    %p75 = scmp.ne.s32.totalorder %s66, %s67
    %p76 = scmp.eq.s32.totalorder %s14, 0
    %p77 = por %p75, %p76
    %p78 = scmp.ne.s32.totalorder %s66, %s67
    %p79 = scmp.eq.s32.totalorder %s15, 1
    %p80 = por %p78, %p79
    %p82 = scmp.ne.s32.totalorder %s67, %s81
    %p83 = scmp.eq.s32.totalorder %s15, 0
    %p84 = por %p82, %p83
    %s85 = ssub.s32 %s9, %s16
    %p86 = scmp.eq.s32.totalorder %s85, 0
    %s88 = sadd.s32 %s87, 1
    %s89 = scalar_select %p86, %s87, %s88
    %p92 = pneg %p86
    %p93 = scmp.eq.s32.totalorder %s9, 1
    %p94 = por %p92, %p93
    %p95 = scmp.ne.s32.totalorder %s87, %s90
    %p96 = scmp.eq.s32.totalorder %s9, 0
    %p97 = por %p95, %p96
    %p98 = scmp.ne.s32.totalorder %s87, %s90
    %p99 = scmp.eq.s32.totalorder %s14, 1
    %p100 = por %p98, %p99
    %p101 = scmp.ne.s32.totalorder %s90, %s91
    %p102 = scmp.eq.s32.totalorder %s14, 0
    %p103 = por %p101, %p102
    %p104 = scmp.ne.s32.totalorder %s90, %s91
    %p105 = scmp.eq.s32.totalorder %s15, 1
    %p106 = por %p104, %p105
    %p108 = scmp.ne.s32.totalorder %s91, %s107
    %p109 = scmp.eq.s32.totalorder %s15, 0
    %p110 = por %p108, %p109
    %p111 = scmp.le.s32.totalorder 1, %s9
    %p112 = scmp.lt.s32.totalorder %s9, 3
    %p113 = pnand %p111, %p112
    %p114 = pneg %p113
    // Predicated region
    $region9: #{forward.2} parent=5 // pred_check
      _
    $region10: #{forward.2} parent=5 // pred_check_branch
      %116 = sbr.rel (%p113) target = $region12
    $region11: #{forward.2} parent=5 // pred_region
      %s117 = ssub.s32 %s9, 1
      // Predicated region
      $region13: #{forward.2} parent=11 // pred_check
        %p118 = pneg %p56
      $region14: #{forward.2} parent=11 // pred_check_branch
        %120 = sbr.rel (%p118) target = $region16
      $region15: #{forward.2} parent=11 // pred_region
        _
      $region16: #{forward.2} parent=11 // pred_fallthru
        _
      // Predicated region
      $region17: #{forward.2} parent=11 // pred_check
        %p121 = pneg %p77
      $region18: #{forward.2} parent=11 // pred_check_branch
        %123 = sbr.rel (%p121) target = $region20
      $region19: #{forward.2} parent=11 // pred_region
        _
      $region20: #{forward.2} parent=11 // pred_fallthru
        _
    $region12: #{forward.2} parent=5 // pred_fallthru
      _
    %p124 = scmp.lt.s32.totalorder %s9, 2
    // Predicated region
    $region21: #{forward.2} parent=5 // pred_check
      %p125 = pneg %p124
    $region22: #{forward.2} parent=5 // pred_check_branch
      %127 = sbr.rel (%p125) target = $region24
    $region23: #{forward.2} parent=5 // pred_region
      // Predicated region
      $region25: #{forward.2} parent=23 // pred_check
        %p128 = pneg %p29
      $region26: #{forward.2} parent=23 // pred_check_branch
        %130 = sbr.rel (%p128) target = $region28
      $region27: #{forward.2} parent=23 // pred_region
        %p131 = scmp.lt.s32.totalorder %s9, 1
        %s132 = scalar_select %p131, %s9, 1
        %s133 = smul.addr %s132, 32
        %s134 = smul.addr %s133, 4
        %s135 = scalar_lea.vmem %s0, %s134
      $region28: #{forward.2} parent=23 // pred_fallthru
        _
    $region24: #{forward.2} parent=5 // pred_fallthru
      _
    %p136 = scmp.le.s32.totalorder 1, %s9
    %p137 = scmp.lt.s32.totalorder %s9, 3
    %p138 = pnand %p136, %p137
    %p139 = pneg %p138
    // Predicated region
    $region29: #{forward.2} parent=5 // pred_check
      _
    $region30: #{forward.2} parent=5 // pred_check_branch
      %141 = sbr.rel (%p138) target = $region32
    $region31: #{forward.2} parent=5 // pred_region
      %s142 = ssub.s32 %s9, 1
      %p143 = scmp.lt.s32.totalorder %s14, 1
      %s144 = scalar_select %p143, %s14, 1
      %s145 = smul.addr %s144, 32
      %s146 = smul.addr %s145, 4
      %s147 = scalar_lea.vmem %s0, %s146
      %p148 = pneg %p35
      %p149 = pneg %p32
      %p150 = pneg %p56
      %p151 = pneg %p53
      %p152 = pneg %p77
      %p153 = pneg %p74
      %p154 = pneg %p103
      %p155 = pneg %p100
      %p156 = scmp.lt.s32.totalorder %s14, 1
      %s157 = scalar_select %p156, %s14, 1
      %s158 = smul.addr %s157, 16
      %s159 = smul.addr %s158, 4
      %s160 = scalar_lea.vmem %s3, %s159
      %p161 = scmp.lt.s32.totalorder %s14, 1
      %s162 = scalar_select %p161, %s14, 1
      %s163 = smul.addr %s162, 32
      %s164 = smul.addr %s163, 4
      %s165 = scalar_lea.vmem %s0, %s164
      %p166 = scmp.lt.s32.totalorder %s14, 1
      %s167 = scalar_select %p166, %s14, 1
      %s168 = smul.addr %s167, 16
      %s169 = smul.addr %s168, 4
      %s170 = scalar_lea.vmem %s3, %s169
      %v172 = vld [vmem:[%s165] sm:$0xff]
      %v173 = vld [vmem:[%s165 + $0x8] sm:$0xff]
      %v174 = vld [vmem:[%s165 + $0x10] sm:$0xff]
      %v175 = vld [vmem:[%s165 + $0x18] sm:$0xff]
      %v176 = vld [vmem:[%s165 + $0x20] sm:$0xff]
      %v177 = vld [vmem:[%s165 + $0x28] sm:$0xff]
      %v178 = vld [vmem:[%s165 + $0x30] sm:$0xff]
      %v179 = vld [vmem:[%s165 + $0x38] sm:$0xff]
      %v180 = vld [vmem:[%s165 + $0x40] sm:$0xff]
      %v181 = vld [vmem:[%s165 + $0x48] sm:$0xff]
      %v182 = vld [vmem:[%s165 + $0x50] sm:$0xff]
      %v183 = vld [vmem:[%s165 + $0x58] sm:$0xff]
      %v184 = vld [vmem:[%s165 + $0x60] sm:$0xff]
      %v185 = vld [vmem:[%s165 + $0x68] sm:$0xff]
      %v186 = vld [vmem:[%s165 + $0x70] sm:$0xff]
      %v187 = vld [vmem:[%s165 + $0x78] sm:$0x11]
      %v188 = vld [vmem:[%s1] sm:$0xf]
      %v189 = vld [vmem:[%s1 + $0x4] sm:$0xf]
      %v190 = vld [vmem:[%s1 + $0x8] sm:$0xf]
      %v191 = vld [vmem:[%s1 + $0xc] sm:$0xf]
      %v192 = vld [vmem:[%s1 + $0x10] sm:$0xf]
      %v193 = vld [vmem:[%s1 + $0x14] sm:$0xf]
      %v194 = vld [vmem:[%s1 + $0x18] sm:$0xf]
      %v195 = vld [vmem:[%s1 + $0x1c] sm:$0xf]
      %v196 = vld [vmem:[%s1 + $0x20] sm:$0xf]
      %v197 = vld [vmem:[%s1 + $0x24] sm:$0xf]
      %v198 = vld [vmem:[%s1 + $0x28] sm:$0xf]
      %v199 = vld [vmem:[%s1 + $0x2c] sm:$0xf]
      %v200 = vld [vmem:[%s1 + $0x30] sm:$0xf]
      %v201 = vld [vmem:[%s1 + $0x34] sm:$0xf]
      %v202 = vld [vmem:[%s1 + $0x38] sm:$0xf]
      %v203 = vld [vmem:[%s1 + $0x3c] sm:$0xf]
      %v204 = vld [vmem:[%s1 + $0x40] sm:$0xf]
      %v205 = vld [vmem:[%s1 + $0x44] sm:$0xf]
      %v206 = vld [vmem:[%s1 + $0x48] sm:$0xf]
      %v207 = vld [vmem:[%s1 + $0x4c] sm:$0xf]
      %v208 = vld [vmem:[%s1 + $0x50] sm:$0xf]
      %v209 = vld [vmem:[%s1 + $0x54] sm:$0xf]
      %v210 = vld [vmem:[%s1 + $0x58] sm:$0xf]
      %v211 = vld [vmem:[%s1 + $0x5c] sm:$0xf]
      %v212 = vld [vmem:[%s1 + $0x60] sm:$0xf]
      %v213 = vld [vmem:[%s1 + $0x64] sm:$0xf]
      %v214 = vld [vmem:[%s1 + $0x68] sm:$0xf]
      %v215 = vld [vmem:[%s1 + $0x6c] sm:$0xf]
      %v216 = vld [vmem:[%s1 + $0x70] sm:$0xf]
      %v217 = vld [vmem:[%s1 + $0x74] sm:$0xf]
      %v218 = vld [vmem:[%s1 + $0x78] sm:$0xf]
      %v219 = vld [vmem:[%s1 + $0x7c] sm:$0xf]
      %v220 = vld [vmem:[%s2] sm:$0x1]
      %v222 = vlaneseq
      %v223 = vshrl.u32 %v222, 7
      %v224 = vsub.s32 0, %v223
      %v225 = vrot.slane %v220, %v224
      %v243 = vunpack.c.l.b16 %v172
      %v244 = vunpack.c.h.b16 %v172
      %v245 = vunpack.c.l.b16 %v173
      %v246 = vunpack.c.h.b16 %v173
      %v247 = vunpack.c.l.b16 %v174
      %v248 = vunpack.c.h.b16 %v174
      %v249 = vunpack.c.l.b16 %v175
      %v250 = vunpack.c.h.b16 %v175
      %v251 = vunpack.c.l.b16 %v176
      %v252 = vunpack.c.h.b16 %v176
      %v253 = vunpack.c.l.b16 %v177
      %v254 = vunpack.c.h.b16 %v177
      %v255 = vunpack.c.l.b16 %v178
      %v256 = vunpack.c.h.b16 %v178
      %v257 = vunpack.c.l.b16 %v179
      %v258 = vunpack.c.h.b16 %v179
      %v259 = vunpack.c.l.b16 %v180
      %v260 = vunpack.c.h.b16 %v180
      %v261 = vunpack.c.l.b16 %v181
      %v262 = vunpack.c.h.b16 %v181
      %v263 = vunpack.c.l.b16 %v182
      %v264 = vunpack.c.h.b16 %v182
      %v265 = vunpack.c.l.b16 %v183
      %v266 = vunpack.c.h.b16 %v183
      %v267 = vunpack.c.l.b16 %v184
      %v268 = vunpack.c.h.b16 %v184
      %v269 = vunpack.c.l.b16 %v185
      %v270 = vunpack.c.h.b16 %v185
      %v271 = vunpack.c.l.b16 %v186
      %v272 = vunpack.c.h.b16 %v186
      %v273 = vunpack.c.l.b16 %v187
      %v274 = vunpack.c.h.b16 %v187
      %v275 = vpack.c.b16 %v245, %v243
      %v276 = vpack.c.b16 %v246, %v244
      %v277 = vpack.c.b16 %v249, %v247
      %v278 = vpack.c.b16 %v250, %v248
      %v279 = vpack.c.b16 %v253, %v251
      %v280 = vpack.c.b16 %v254, %v252
      %v281 = vpack.c.b16 %v257, %v255
      %v282 = vpack.c.b16 %v258, %v256
      %v283 = vpack.c.b16 %v261, %v259
      %v284 = vpack.c.b16 %v262, %v260
      %v285 = vpack.c.b16 %v265, %v263
      %v286 = vpack.c.b16 %v266, %v264
      %v287 = vpack.c.b16 %v269, %v267
      %v288 = vpack.c.b16 %v270, %v268
      %v289 = vpack.c.b16 %v273, %v271
      %v290 = vpack.c.b16 %v274, %v272
      %v339 = vunpack.c.l.b16 %v188
      %v340 = vunpack.c.l.b16 %v189
      %v341 = vunpack.c.l.b16 %v190
      %v342 = vunpack.c.l.b16 %v191
      %v343 = vunpack.c.l.b16 %v192
      %v344 = vunpack.c.l.b16 %v193
      %v345 = vunpack.c.l.b16 %v194
      %v346 = vunpack.c.l.b16 %v195
      %v347 = vunpack.c.l.b16 %v196
      %v348 = vunpack.c.l.b16 %v197
      %v349 = vunpack.c.l.b16 %v198
      %v350 = vunpack.c.l.b16 %v199
      %v351 = vunpack.c.l.b16 %v200
      %v352 = vunpack.c.l.b16 %v201
      %v353 = vunpack.c.l.b16 %v202
      %v354 = vunpack.c.l.b16 %v203
      %v355 = vunpack.c.l.b16 %v204
      %v356 = vunpack.c.l.b16 %v205
      %v357 = vunpack.c.l.b16 %v206
      %v358 = vunpack.c.l.b16 %v207
      %v359 = vunpack.c.l.b16 %v208
      %v360 = vunpack.c.l.b16 %v209
      %v361 = vunpack.c.l.b16 %v210
      %v362 = vunpack.c.l.b16 %v211
      %v363 = vunpack.c.l.b16 %v212
      %v364 = vunpack.c.l.b16 %v213
      %v365 = vunpack.c.l.b16 %v214
      %v366 = vunpack.c.l.b16 %v215
      %v367 = vunpack.c.l.b16 %v216
      %v368 = vunpack.c.l.b16 %v217
      %v369 = vunpack.c.l.b16 %v218
      %v370 = vunpack.c.l.b16 %v219
      %v371 = vpack.c.b16 %v340, %v339
      %v372 = vpack.c.b16 %v342, %v341
      %v373 = vpack.c.b16 %v344, %v343
      %v374 = vpack.c.b16 %v346, %v345
      %v375 = vpack.c.b16 %v348, %v347
      %v376 = vpack.c.b16 %v350, %v349
      %v377 = vpack.c.b16 %v352, %v351
      %v378 = vpack.c.b16 %v354, %v353
      %v379 = vpack.c.b16 %v356, %v355
      %v380 = vpack.c.b16 %v358, %v357
      %v381 = vpack.c.b16 %v360, %v359
      %v382 = vpack.c.b16 %v362, %v361
      %v383 = vpack.c.b16 %v364, %v363
      %v384 = vpack.c.b16 %v366, %v365
      %v385 = vpack.c.b16 %v368, %v367
      %v386 = vpack.c.b16 %v370, %v369
      %403 = vmatprep.subr.bf16.mxu0 0
      %404 = vmatpush1.bf16.msra.mxu0 %v371
      %405 = vmatprep.subr.bf16.mxu0 0
      %406 = vmatpush1.bf16.msra.mxu0 %v372
      %407 = vmatprep.subr.bf16.mxu0 0
      %408 = vmatpush1.bf16.msra.mxu0 %v373
      %409 = vmatprep.subr.bf16.mxu0 0
      %410 = vmatpush1.bf16.msra.mxu0 %v374
      %411 = vmatprep.subr.bf16.mxu0 0
      %412 = vmatpush1.bf16.msra.mxu0 %v375
      %413 = vmatprep.subr.bf16.mxu0 0
      %414 = vmatpush1.bf16.msra.mxu0 %v376
      %415 = vmatprep.subr.bf16.mxu0 0
      %416 = vmatpush1.bf16.msra.mxu0 %v377
      %417 = vmatprep.subr.bf16.mxu0 0
      %418 = vmatpush1.bf16.msra.mxu0 %v378
      %419 = vmatprep.subr.bf16.mxu0 0
      %420 = vmatpush1.bf16.msra.mxu0 %v379
      %421 = vmatprep.subr.bf16.mxu0 0
      %422 = vmatpush1.bf16.msra.mxu0 %v380
      %423 = vmatprep.subr.bf16.mxu0 0
      %424 = vmatpush1.bf16.msra.mxu0 %v381
      %425 = vmatprep.subr.bf16.mxu0 0
      %426 = vmatpush1.bf16.msra.mxu0 %v382
      %427 = vmatprep.subr.bf16.mxu0 0
      %428 = vmatpush1.bf16.msra.mxu0 %v383
      %429 = vmatprep.subr.bf16.mxu0 0
      %430 = vmatpush1.bf16.msra.mxu0 %v384
      %431 = vmatprep.subr.bf16.mxu0 0
      %432 = vmatpush1.bf16.msra.mxu0 %v385
      %433 = vmatprep.subr.bf16.mxu0 0
      %434 = vmatpush1.bf16.msra.mxu0 %v386
      %435 = vmatprep.mubr.bf16.mxu0 %v276
      %436 = vmatmul.mubr.bf16.gmra.mrb[0].mxu0 %v275
      %v437 = vpop.f32.mrb[0].mxu0
      %v438 = vadd.f32 %v225, %v437
      %v439 = vpop.f32.mrb[0].mxu0
      %v440 = vpop.f32.mrb[0].mxu0
      %v441 = vadd.f32 %v225, %v440
      %v442 = vpop.f32.mrb[0].mxu0
      %443 = vmatprep.mubr.bf16.mxu0 %v278
      %444 = vmatmul.mubr.bf16.gmra.mrb[0].mxu0 %v277
      %v445 = vpop.f32.mrb[0].mxu0
      %v446 = vadd.f32 %v225, %v445
      %v447 = vpop.f32.mrb[0].mxu0
      %v448 = vpop.f32.mrb[0].mxu0
      %v449 = vadd.f32 %v225, %v448
      %v450 = vpop.f32.mrb[0].mxu0
      %451 = vmatprep.mubr.bf16.mxu0 %v280
      %452 = vmatmul.mubr.bf16.gmra.mrb[0].mxu0 %v279
      %v453 = vpop.f32.mrb[0].mxu0
      %v454 = vadd.f32 %v225, %v453
      %v455 = vpop.f32.mrb[0].mxu0
      %v456 = vpop.f32.mrb[0].mxu0
      %v457 = vadd.f32 %v225, %v456
      %v458 = vpop.f32.mrb[0].mxu0
      %459 = vmatprep.mubr.bf16.mxu0 %v282
      %460 = vmatmul.mubr.bf16.gmra.mrb[0].mxu0 %v281
      %v461 = vpop.f32.mrb[0].mxu0
      %v462 = vadd.f32 %v225, %v461
      %v463 = vpop.f32.mrb[0].mxu0
      %v464 = vpop.f32.mrb[0].mxu0
      %v465 = vadd.f32 %v225, %v464
      %v466 = vpop.f32.mrb[0].mxu0
      %467 = vmatprep.mubr.bf16.mxu0 %v284
      %468 = vmatmul.mubr.bf16.gmra.mrb[0].mxu0 %v283
      %v469 = vpop.f32.mrb[0].mxu0
      %v470 = vadd.f32 %v225, %v469
      %v471 = vpop.f32.mrb[0].mxu0
      %v472 = vpop.f32.mrb[0].mxu0
      %v473 = vadd.f32 %v225, %v472
      %v474 = vpop.f32.mrb[0].mxu0
      %475 = vmatprep.mubr.bf16.mxu0 %v286
      %476 = vmatmul.mubr.bf16.gmra.mrb[0].mxu0 %v285
      %v477 = vpop.f32.mrb[0].mxu0
      %v478 = vadd.f32 %v225, %v477
      %v479 = vpop.f32.mrb[0].mxu0
      %v480 = vpop.f32.mrb[0].mxu0
      %v481 = vadd.f32 %v225, %v480
      %v482 = vpop.f32.mrb[0].mxu0
      %483 = vmatprep.mubr.bf16.mxu0 %v288
      %484 = vmatmul.mubr.bf16.gmra.mrb[0].mxu0 %v287
      %v485 = vpop.f32.mrb[0].mxu0
      %v486 = vadd.f32 %v225, %v485
      %v487 = vpop.f32.mrb[0].mxu0
      %v488 = vpop.f32.mrb[0].mxu0
      %v489 = vadd.f32 %v225, %v488
      %v490 = vpop.f32.mrb[0].mxu0
      %491 = vmatprep.mubr.bf16.mxu0 %v290
      %492 = vmatmul.mubr.bf16.gmra.mrb[0].mxu0 %v289
      %v493 = vpop.f32.mrb[0].mxu0
      %v494 = vadd.f32 %v225, %v493
      %v495 = vpop.f32.mrb[0].mxu0
      %v496 = vpop.f32.mrb[0].mxu0
      %v497 = vadd.f32 %v225, %v496
      %v498 = vpop.f32.mrb[0].mxu0
      %499 = vdwg.mxu0
      %v500 = vmax.f32 %v438, 0.0
      %v501 = vmax.f32 %v441, 0.0
      %v502 = vmax.f32 %v446, 0.0
      %v503 = vmax.f32 %v449, 0.0
      %v504 = vmax.f32 %v454, 0.0
      %v505 = vmax.f32 %v457, 0.0
      %v506 = vmax.f32 %v462, 0.0
      %v507 = vmax.f32 %v465, 0.0
      %v508 = vmax.f32 %v470, 0.0
      %v509 = vmax.f32 %v473, 0.0
      %v510 = vmax.f32 %v478, 0.0
      %v511 = vmax.f32 %v481, 0.0
      %v512 = vmax.f32 %v486, 0.0
      %v513 = vmax.f32 %v489, 0.0
      %v514 = vmax.f32 %v494, 0.0
      %v515 = vmax.f32 %v497, 0.0
      %v516 = vpack.c.bf16 %v501, %v500
      %v517 = vpack.c.bf16 %v503, %v502
      %v518 = vpack.c.bf16 %v505, %v504
      %v519 = vpack.c.bf16 %v507, %v506
      %v520 = vpack.c.bf16 %v509, %v508
      %v521 = vpack.c.bf16 %v511, %v510
      %v522 = vpack.c.bf16 %v513, %v512
      %v523 = vpack.c.bf16 %v515, %v514
      %v532 = vunpack.c.l.b16 %v516
      %v533 = vunpack.c.h.b16 %v516
      %v534 = vunpack.c.l.b16 %v517
      %v535 = vunpack.c.h.b16 %v517
      %v536 = vunpack.c.l.b16 %v518
      %v537 = vunpack.c.h.b16 %v518
      %v538 = vunpack.c.l.b16 %v519
      %v539 = vunpack.c.h.b16 %v519
      %v540 = vunpack.c.l.b16 %v520
      %v541 = vunpack.c.h.b16 %v520
      %v542 = vunpack.c.l.b16 %v521
      %v543 = vunpack.c.h.b16 %v521
      %v544 = vunpack.c.l.b16 %v522
      %v545 = vunpack.c.h.b16 %v522
      %v546 = vunpack.c.l.b16 %v523
      %v547 = vunpack.c.h.b16 %v523
      %v548 = vpack.c.b16 %v532, %v532
      %v549 = vpack.c.b16 %v533, %v533
      %v550 = vpack.c.b16 %v534, %v534
      %v551 = vpack.c.b16 %v535, %v535
      %v552 = vpack.c.b16 %v536, %v536
      %v553 = vpack.c.b16 %v537, %v537
      %v554 = vpack.c.b16 %v538, %v538
      %v555 = vpack.c.b16 %v539, %v539
      %v556 = vpack.c.b16 %v540, %v540
      %v557 = vpack.c.b16 %v541, %v541
      %v558 = vpack.c.b16 %v542, %v542
      %v559 = vpack.c.b16 %v543, %v543
      %v560 = vpack.c.b16 %v544, %v544
      %v561 = vpack.c.b16 %v545, %v545
      %v562 = vpack.c.b16 %v546, %v546
      %v563 = vpack.c.b16 %v547, %v547
      %580 = vst [vmem:[%s170] sm:$0xf] %v548
      %581 = vst [vmem:[%s170 + $0x4] sm:$0xf] %v549
      %582 = vst [vmem:[%s170 + $0x8] sm:$0xf] %v550
      %583 = vst [vmem:[%s170 + $0xc] sm:$0xf] %v551
      %584 = vst [vmem:[%s170 + $0x10] sm:$0xf] %v552
      %585 = vst [vmem:[%s170 + $0x14] sm:$0xf] %v553
      %586 = vst [vmem:[%s170 + $0x18] sm:$0xf] %v554
      %587 = vst [vmem:[%s170 + $0x1c] sm:$0xf] %v555
      %588 = vst [vmem:[%s170 + $0x20] sm:$0xf] %v556
      %589 = vst [vmem:[%s170 + $0x24] sm:$0xf] %v557
      %590 = vst [vmem:[%s170 + $0x28] sm:$0xf] %v558
      %591 = vst [vmem:[%s170 + $0x2c] sm:$0xf] %v559
      %592 = vst [vmem:[%s170 + $0x30] sm:$0xf] %v560
      %593 = vst [vmem:[%s170 + $0x34] sm:$0xf] %v561
      %594 = vst [vmem:[%s170 + $0x38] sm:$0xf] %v562
      %vm595 = vcmask 1040384
      %vm596 = vsmask.f32 256
      %vm597 = vmand %vm595, %vm596
      %v598 = vld [vmem:[%s170 + $0x3c] sm:$0x1]
      %v599 = vsel %vm597, %v563, %v598
      %600 = vst [vmem:[%s170 + $0x3c] sm:$0x1] %v599
      %p601 = scmp.lt.s32.totalorder %s14, 1
      %s602 = scalar_select %p601, %s14, 1
      %s603 = smul.addr %s602, 16
      %s604 = smul.addr %s603, 4
      %s605 = scalar_lea.vmem %s3, %s604
      // Predicated region
      $region33: #{forward.2} parent=31 // pred_check
        %p606 = pneg %p100
      $region34: #{forward.2} parent=31 // pred_check_branch
        %608 = sbr.rel (%p606) target = $region36
      $region35: #{forward.2} parent=31 // pred_region
        _
      $region36: #{forward.2} parent=31 // pred_fallthru
        _
    $region32: #{forward.2} parent=5 // pred_fallthru
      _
    %p609 = scmp.le.s32.totalorder 2, %s9
    // Predicated region
    $region37: #{forward.2} parent=5 // pred_check
      %p610 = pneg %p609
    $region38: #{forward.2} parent=5 // pred_check_branch
      %612 = sbr.rel (%p610) target = $region40
    $region39: #{forward.2} parent=5 // pred_region
      %s613 = ssub.s32 %s9, 2
      // Predicated region
      $region41: #{forward.2} parent=39 // pred_check
        %p614 = pneg %p106
      $region42: #{forward.2} parent=39 // pred_check_branch
        %616 = sbr.rel (%p614) target = $region44
      $region43: #{forward.2} parent=39 // pred_region
        %p617 = scmp.lt.s32.totalorder %s15, 1
        %s618 = scalar_select %p617, %s15, 1
        %s619 = smul.addr %s618, 16
        %s620 = smul.addr %s619, 4
        %s621 = scalar_lea.vmem %s3, %s620
      $region44: #{forward.2} parent=39 // pred_fallthru
        _
    $region40: #{forward.2} parent=5 // pred_fallthru
      _
  $region6: #{forward.2} parent=0 // loop_footer
    %s13 = sadd.s32 1, %s9
  $region7: #{forward.2} parent=0 // loop_footer_branch
    %8 = sbr.rel target = $region3
  $region8: #{forward.2} parent=0 // loop_exit
    _

// kernel: forward.3
$region0: #{forward.3}
  #allocation0 [shape = 'u32[]', space=smem, size = 0x4, offset = 0x4, fixed_abs, tag = 'smem constant byte address 0x4 - core index']
  #allocation1 [shape = 'u32[144,128]{1,0:T(1,128)}', space=vmem, size = 0x12000, scoped, tag = 'internal scratch']
  %s0 = inlined_call_operand.vmem [shape: bf16[2,16,512], index: 0, kind: input, shape index: {}]
  %s1 = inlined_call_operand.vmem [shape: bf16[512,128], index: 1, kind: input, shape index: {}]
  %s2 = inlined_call_operand.vmem [shape: f32[1,128], index: 2, kind: input, shape index: {}]
  %s3 = inlined_call_operand.vmem [shape: bf16[1152,128], index: 3, kind: input, shape index: {}]
  %s4 = inlined_call_operand.vmem [shape: f32[1,128], index: 4, kind: input, shape index: {}]
  %s5 = inlined_call_operand.vmem [shape: bf16[512,512], index: 5, kind: input, shape index: {}]
  %s6 = inlined_call_operand.vmem [shape: f32[1,512], index: 6, kind: input, shape index: {}]
  %s7 = inlined_call_operand.vmem [shape: bf16[512,128], index: 7, kind: input, shape index: {}]
  %s8 = inlined_call_operand.vmem [shape: f32[1,128], index: 8, kind: input, shape index: {}]
  %s9 = inlined_call_operand.vmem [shape: f32[2,4,128], index: 9, kind: output, shape index: {0}]
  %s10 = inlined_call_operand.hbm [shape: f32[2,1,128], index: 10, kind: output, shape index: {1}]
  %11 = xla_tuple %s9, %s10
  %s12 = sld [smem:[#allocation0]]
  $region77: #{forward.3} parent=0
    _
  %s14 = ssub.s32 1, %s12
  %s15 = scalar_select 0, %s14, %s12
  $region1: #{forward.3} parent=0
    #allocation2 [shape = 'u8[1024]{0}', space=vmem, size = 0x400, scoped, tag = 'output window, operand 1']
    #allocation3 [shape = 's32[2]{0}', space=sflag, size = 0x8, scoped, tag = 'scoped memory for forward.3']
    %16 = vsyncpa [#allocation3], 0
    %s17 = scalar_lea.sflag [#allocation3], 1
    %18 = vsyncpa %s17, 0
    loop: start=0, step=1, limit=4
    $region2: #{forward.3} parent=1 // loop_pre_header
      _
    $region3: #{forward.3} parent=1 // loop_header
      %s20 = sphi 0, %s24
      %p21 = scmp.ge.s32.totalorder %s20, 4
      %s30 = sphi 0, %s32
      %s33 = sphi 0, %s30
      %s34 = sphi 0, %s33
      %s50 = sphi 0, %s34
      %s54 = sphi 0, %s54
      %s56 = sphi 0, %s54
      %s57 = sphi 0, %s56
      %s71 = sphi 0, %s57
      %s75 = sphi 0, %s75
      %s77 = sphi 0, %s75
      %s78 = sphi 0, %s77
      %s92 = sphi 0, %s78
      %s96 = sphi 0, %s96
      %s98 = sphi 0, %s96
      %s99 = sphi 0, %s98
      %s113 = sphi 0, %s99
      %s117 = sphi 0, %s117
      %s119 = sphi 0, %s117
      %s120 = sphi 0, %s119
      %s134 = sphi 0, %s120
      %s138 = sphi 0, %s138
      %s140 = sphi 0, %s138
      %s141 = sphi 0, %s140
      %s155 = sphi 0, %s141
      %s159 = sphi 0, %s159
      %s161 = sphi 0, %s159
      %s162 = sphi 0, %s161
      %s176 = sphi 0, %s162
      %s180 = sphi 0, %s180
      %s182 = sphi 0, %s180
      %s183 = sphi 0, %s182
      %s197 = sphi 0, %s183
      %s201 = sphi 0, %s201
      %s203 = sphi 0, %s201
      %s204 = sphi 0, %s203
      %s218 = sphi 0, %s204
      %s224 = sphi 0, %s226
      %s227 = sphi 0, %s224
      %s228 = sphi 0, %s227
      %s244 = sphi 0, %s228
      %s250 = sphi 0, %s252
      %s253 = sphi 0, %s250
      %s254 = sphi 0, %s253
      %s270 = sphi 0, %s254
    $region4: #{forward.3} parent=1 // loop_header_branch
      %23 = sbr.rel (%p21) target = $region8
    $region5: #{forward.3} parent=1 // loop_body
      %s25 = ssub.s32 %s20, 1
      %s26 = ssub.s32 %s20, 2
      %s27 = sadd.s32 %s20, 1
      %s28 = ssub.s32 %s20, %s27
      %p29 = scmp.eq.s32.totalorder %s28, 0
      %s31 = sadd.s32 %s30, 1
      %s32 = scalar_select %p29, %s30, %s31
      %p35 = pneg %p29
      %p36 = scmp.eq.s32.totalorder %s20, 1
      %p37 = por %p35, %p36
      %p38 = scmp.ne.s32.totalorder %s30, %s33
      %p39 = scmp.eq.s32.totalorder %s20, 0
      %p40 = por %p38, %p39
      %p41 = scmp.ne.s32.totalorder %s30, %s33
      %p42 = scmp.eq.s32.totalorder %s25, 1
      %p43 = por %p41, %p42
      %p44 = scmp.ne.s32.totalorder %s33, %s34
      %p45 = scmp.eq.s32.totalorder %s25, 0
      %p46 = por %p44, %p45
      %p47 = scmp.ne.s32.totalorder %s33, %s34
      %p48 = scmp.eq.s32.totalorder %s26, 1
      %p49 = por %p47, %p48
      %p51 = scmp.ne.s32.totalorder %s34, %s50
      %p52 = scmp.eq.s32.totalorder %s26, 0
      %p53 = por %p51, %p52
      %s55 = sadd.s32 %s54, 1
      %p58 = scmp.eq.s32.totalorder %s20, 1
      %p59 = scmp.ne.s32.totalorder %s54, %s56
      %p60 = scmp.eq.s32.totalorder %s20, 0
      %p61 = por %p59, %p60
      %p62 = scmp.ne.s32.totalorder %s54, %s56
      %p63 = scmp.eq.s32.totalorder %s25, 1
      %p64 = por %p62, %p63
      %p65 = scmp.ne.s32.totalorder %s56, %s57
      %p66 = scmp.eq.s32.totalorder %s25, 0
      %p67 = por %p65, %p66
      %p68 = scmp.ne.s32.totalorder %s56, %s57
      %p69 = scmp.eq.s32.totalorder %s26, 1
      %p70 = por %p68, %p69
      %p72 = scmp.ne.s32.totalorder %s57, %s71
      %p73 = scmp.eq.s32.totalorder %s26, 0
      %p74 = por %p72, %p73
      %s76 = sadd.s32 %s75, 1
      %p79 = scmp.eq.s32.totalorder %s20, 1
      %p80 = scmp.ne.s32.totalorder %s75, %s77
      %p81 = scmp.eq.s32.totalorder %s20, 0
      %p82 = por %p80, %p81
      %p83 = scmp.ne.s32.totalorder %s75, %s77
      %p84 = scmp.eq.s32.totalorder %s25, 1
      %p85 = por %p83, %p84
      %p86 = scmp.ne.s32.totalorder %s77, %s78
      %p87 = scmp.eq.s32.totalorder %s25, 0
      %p88 = por %p86, %p87
      %p89 = scmp.ne.s32.totalorder %s77, %s78
      %p90 = scmp.eq.s32.totalorder %s26, 1
      %p91 = por %p89, %p90
      %p93 = scmp.ne.s32.totalorder %s78, %s92
      %p94 = scmp.eq.s32.totalorder %s26, 0
      %p95 = por %p93, %p94
      %s97 = sadd.s32 %s96, 1
      %p100 = scmp.eq.s32.totalorder %s20, 1
      %p101 = scmp.ne.s32.totalorder %s96, %s98
      %p102 = scmp.eq.s32.totalorder %s20, 0
      %p103 = por %p101, %p102
      %p104 = scmp.ne.s32.totalorder %s96, %s98
      %p105 = scmp.eq.s32.totalorder %s25, 1
      %p106 = por %p104, %p105
      %p107 = scmp.ne.s32.totalorder %s98, %s99
      %p108 = scmp.eq.s32.totalorder %s25, 0
      %p109 = por %p107, %p108
      %p110 = scmp.ne.s32.totalorder %s98, %s99
      %p111 = scmp.eq.s32.totalorder %s26, 1
      %p112 = por %p110, %p111
      %p114 = scmp.ne.s32.totalorder %s99, %s113
      %p115 = scmp.eq.s32.totalorder %s26, 0
      %p116 = por %p114, %p115
      %s118 = sadd.s32 %s117, 1
      %p121 = scmp.eq.s32.totalorder %s20, 1
      %p122 = scmp.ne.s32.totalorder %s117, %s119
      %p123 = scmp.eq.s32.totalorder %s20, 0
      %p124 = por %p122, %p123
      %p125 = scmp.ne.s32.totalorder %s117, %s119
      %p126 = scmp.eq.s32.totalorder %s25, 1
      %p127 = por %p125, %p126
      %p128 = scmp.ne.s32.totalorder %s119, %s120
      %p129 = scmp.eq.s32.totalorder %s25, 0
      %p130 = por %p128, %p129
      %p131 = scmp.ne.s32.totalorder %s119, %s120
      %p132 = scmp.eq.s32.totalorder %s26, 1
      %p133 = por %p131, %p132
      %p135 = scmp.ne.s32.totalorder %s120, %s134
      %p136 = scmp.eq.s32.totalorder %s26, 0
      %p137 = por %p135, %p136
      %s139 = sadd.s32 %s138, 1
      %p142 = scmp.eq.s32.totalorder %s20, 1
      %p143 = scmp.ne.s32.totalorder %s138, %s140
      %p144 = scmp.eq.s32.totalorder %s20, 0
      %p145 = por %p143, %p144
      %p146 = scmp.ne.s32.totalorder %s138, %s140
      %p147 = scmp.eq.s32.totalorder %s25, 1
      %p148 = por %p146, %p147
      %p149 = scmp.ne.s32.totalorder %s140, %s141
      %p150 = scmp.eq.s32.totalorder %s25, 0
      %p151 = por %p149, %p150
      %p152 = scmp.ne.s32.totalorder %s140, %s141
      %p153 = scmp.eq.s32.totalorder %s26, 1
      %p154 = por %p152, %p153
      %p156 = scmp.ne.s32.totalorder %s141, %s155
      %p157 = scmp.eq.s32.totalorder %s26, 0
      %p158 = por %p156, %p157
      %s160 = sadd.s32 %s159, 1
      %p163 = scmp.eq.s32.totalorder %s20, 1
      %p164 = scmp.ne.s32.totalorder %s159, %s161
      %p165 = scmp.eq.s32.totalorder %s20, 0
      %p166 = por %p164, %p165
      %p167 = scmp.ne.s32.totalorder %s159, %s161
      %p168 = scmp.eq.s32.totalorder %s25, 1
      %p169 = por %p167, %p168
      %p170 = scmp.ne.s32.totalorder %s161, %s162
      %p171 = scmp.eq.s32.totalorder %s25, 0
      %p172 = por %p170, %p171
      %p173 = scmp.ne.s32.totalorder %s161, %s162
      %p174 = scmp.eq.s32.totalorder %s26, 1
      %p175 = por %p173, %p174
      %p177 = scmp.ne.s32.totalorder %s162, %s176
      %p178 = scmp.eq.s32.totalorder %s26, 0
      %p179 = por %p177, %p178
      %s181 = sadd.s32 %s180, 1
      %p184 = scmp.eq.s32.totalorder %s20, 1
      %p185 = scmp.ne.s32.totalorder %s180, %s182
      %p186 = scmp.eq.s32.totalorder %s20, 0
      %p187 = por %p185, %p186
      %p188 = scmp.ne.s32.totalorder %s180, %s182
      %p189 = scmp.eq.s32.totalorder %s25, 1
      %p190 = por %p188, %p189
      %p191 = scmp.ne.s32.totalorder %s182, %s183
      %p192 = scmp.eq.s32.totalorder %s25, 0
      %p193 = por %p191, %p192
      %p194 = scmp.ne.s32.totalorder %s182, %s183
      %p195 = scmp.eq.s32.totalorder %s26, 1
      %p196 = por %p194, %p195
      %p198 = scmp.ne.s32.totalorder %s183, %s197
      %p199 = scmp.eq.s32.totalorder %s26, 0
      %p200 = por %p198, %p199
      %s202 = sadd.s32 %s201, 1
      %p205 = scmp.eq.s32.totalorder %s20, 1
      %p206 = scmp.ne.s32.totalorder %s201, %s203
      %p207 = scmp.eq.s32.totalorder %s20, 0
      %p208 = por %p206, %p207
      %p209 = scmp.ne.s32.totalorder %s201, %s203
      %p210 = scmp.eq.s32.totalorder %s25, 1
      %p211 = por %p209, %p210
      %p212 = scmp.ne.s32.totalorder %s203, %s204
      %p213 = scmp.eq.s32.totalorder %s25, 0
      %p214 = por %p212, %p213
      %p215 = scmp.ne.s32.totalorder %s203, %s204
      %p216 = scmp.eq.s32.totalorder %s26, 1
      %p217 = por %p215, %p216
      %p219 = scmp.ne.s32.totalorder %s204, %s218
      %p220 = scmp.eq.s32.totalorder %s26, 0
      %p221 = por %p219, %p220
      %s222 = ssub.s32 %s20, %s27
      %p223 = scmp.eq.s32.totalorder %s222, 0
      %s225 = sadd.s32 %s224, 1
      %s226 = scalar_select %p223, %s224, %s225
      %p229 = pneg %p223
      %p230 = scmp.eq.s32.totalorder %s20, 1
      %p231 = por %p229, %p230
      %p232 = scmp.ne.s32.totalorder %s224, %s227
      %p233 = scmp.eq.s32.totalorder %s20, 0
      %p234 = por %p232, %p233
      %p235 = scmp.ne.s32.totalorder %s224, %s227
      %p236 = scmp.eq.s32.totalorder %s25, 1
      %p237 = por %p235, %p236
      %p238 = scmp.ne.s32.totalorder %s227, %s228
      %p239 = scmp.eq.s32.totalorder %s25, 0
      %p240 = por %p238, %p239
      %p241 = scmp.ne.s32.totalorder %s227, %s228
      %p242 = scmp.eq.s32.totalorder %s26, 1
      %p243 = por %p241, %p242
      %p245 = scmp.ne.s32.totalorder %s228, %s244
      %p246 = scmp.eq.s32.totalorder %s26, 0
      %p247 = por %p245, %p246
      %s248 = ssub.s32 %s20, %s27
      %p249 = scmp.eq.s32.totalorder %s248, 0
      %s251 = sadd.s32 %s250, 1
      %s252 = scalar_select %p249, %s250, %s251
      %p255 = pneg %p249
      %p256 = scmp.eq.s32.totalorder %s20, 1
      %p257 = por %p255, %p256
      %p258 = scmp.ne.s32.totalorder %s250, %s253
      %p259 = scmp.eq.s32.totalorder %s20, 0
      %p260 = por %p258, %p259
      %p261 = scmp.ne.s32.totalorder %s250, %s253
      %p262 = scmp.eq.s32.totalorder %s25, 1
      %p263 = por %p261, %p262
      %p264 = scmp.ne.s32.totalorder %s253, %s254
      %p265 = scmp.eq.s32.totalorder %s25, 0
      %p266 = por %p264, %p265
      %p267 = scmp.ne.s32.totalorder %s253, %s254
      %p268 = scmp.eq.s32.totalorder %s26, 1
      %p269 = por %p267, %p268
      %p271 = scmp.ne.s32.totalorder %s254, %s270
      %p272 = scmp.eq.s32.totalorder %s26, 0
      %p273 = por %p271, %p272
      %p274 = scmp.le.s32.totalorder 1, %s20
      %p275 = scmp.lt.s32.totalorder %s20, 3
      %p276 = pnand %p274, %p275
      %p277 = pneg %p276
      // Predicated region
      $region9: #{forward.3} parent=5 // pred_check
        _
      $region10: #{forward.3} parent=5 // pred_check_branch
        %279 = sbr.rel (%p276) target = $region12
      $region11: #{forward.3} parent=5 // pred_region
        %s280 = ssub.s32 %s20, 1
        // Predicated region
        $region13: #{forward.3} parent=11 // pred_check
          %p281 = pneg %p67
        $region14: #{forward.3} parent=11 // pred_check_branch
          %283 = sbr.rel (%p281) target = $region16
        $region15: #{forward.3} parent=11 // pred_region
          _
        $region16: #{forward.3} parent=11 // pred_fallthru
          _
        // Predicated region
        $region17: #{forward.3} parent=11 // pred_check
          %p284 = pneg %p88
        $region18: #{forward.3} parent=11 // pred_check_branch
          %286 = sbr.rel (%p284) target = $region20
        $region19: #{forward.3} parent=11 // pred_region
          _
        $region20: #{forward.3} parent=11 // pred_fallthru
          _
        // Predicated region
        $region21: #{forward.3} parent=11 // pred_check
          %p287 = pneg %p109
        $region22: #{forward.3} parent=11 // pred_check_branch
          %289 = sbr.rel (%p287) target = $region24
        $region23: #{forward.3} parent=11 // pred_region
          _
        $region24: #{forward.3} parent=11 // pred_fallthru
          _
        // Predicated region
        $region25: #{forward.3} parent=11 // pred_check
          %p290 = pneg %p130
        $region26: #{forward.3} parent=11 // pred_check_branch
          %292 = sbr.rel (%p290) target = $region28
        $region27: #{forward.3} parent=11 // pred_region
          _
        $region28: #{forward.3} parent=11 // pred_fallthru
          _
        // Predicated region
        $region29: #{forward.3} parent=11 // pred_check
          %p293 = pneg %p151
        $region30: #{forward.3} parent=11 // pred_check_branch
          %295 = sbr.rel (%p293) target = $region32
        $region31: #{forward.3} parent=11 // pred_region
          _
        $region32: #{forward.3} parent=11 // pred_fallthru
          _
        // Predicated region
        $region33: #{forward.3} parent=11 // pred_check
          %p296 = pneg %p172
        $region34: #{forward.3} parent=11 // pred_check_branch
          %298 = sbr.rel (%p296) target = $region36
        $region35: #{forward.3} parent=11 // pred_region
          _
        $region36: #{forward.3} parent=11 // pred_fallthru
          _
        // Predicated region
        $region37: #{forward.3} parent=11 // pred_check
          %p299 = pneg %p193
        $region38: #{forward.3} parent=11 // pred_check_branch
          %301 = sbr.rel (%p299) target = $region40
        $region39: #{forward.3} parent=11 // pred_region
          _
        $region40: #{forward.3} parent=11 // pred_fallthru
          _
        // Predicated region
        $region41: #{forward.3} parent=11 // pred_check
          %p302 = pneg %p214
        $region42: #{forward.3} parent=11 // pred_check_branch
          %304 = sbr.rel (%p302) target = $region44
        $region43: #{forward.3} parent=11 // pred_region
          _
        $region44: #{forward.3} parent=11 // pred_fallthru
          _
      $region12: #{forward.3} parent=5 // pred_fallthru
        _
      %p305 = scmp.lt.s32.totalorder %s20, 2
      // Predicated region
      $region45: #{forward.3} parent=5 // pred_check
        %p306 = pneg %p305
      $region46: #{forward.3} parent=5 // pred_check_branch
        %308 = sbr.rel (%p306) target = $region48
      $region47: #{forward.3} parent=5 // pred_region
        // Predicated region
        $region49: #{forward.3} parent=47 // pred_check
          %p309 = pneg %p40
        $region50: #{forward.3} parent=47 // pred_check_branch
          %311 = sbr.rel (%p309) target = $region52
        $region51: #{forward.3} parent=47 // pred_region
          %p312 = scmp.lt.s32.totalorder %s20, 1
          %s313 = scalar_select %p312, %s20, 1
          %s314 = smul.addr %s313, 8
          %s315 = smul.addr %s314, 4
          %s316 = scalar_lea.vmem %s0, %s315
        $region52: #{forward.3} parent=47 // pred_fallthru
          _
      $region48: #{forward.3} parent=5 // pred_fallthru
        _
      %p317 = scmp.le.s32.totalorder 1, %s20
      %p318 = scmp.lt.s32.totalorder %s20, 3
      %p319 = pnand %p317, %p318
      %p320 = pneg %p319
      // Predicated region
      $region53: #{forward.3} parent=5 // pred_check
        _
      $region54: #{forward.3} parent=5 // pred_check_branch
        %322 = sbr.rel (%p319) target = $region56
      $region55: #{forward.3} parent=5 // pred_region
        %s323 = ssub.s32 %s20, 1
        %p324 = scmp.lt.s32.totalorder %s25, 1
        %s325 = scalar_select %p324, %s25, 1
        %s326 = smul.addr %s325, 8
        %s327 = smul.addr %s326, 4
        %s328 = scalar_lea.vmem %s0, %s327
        %p329 = pneg %p46
        %p330 = pneg %p43
        %p331 = pneg %p67
        %p332 = pneg %p64
        %p333 = pneg %p88
        %p334 = pneg %p85
        %p335 = pneg %p109
        %p336 = pneg %p106
        %p337 = pneg %p130
        %p338 = pneg %p127
        %p339 = pneg %p151
        %p340 = pneg %p148
        %p341 = pneg %p172
        %p342 = pneg %p169
        %p343 = pneg %p193
        %p344 = pneg %p190
        %p345 = pneg %p214
        %p346 = pneg %p211
        %p347 = pneg %p240
        %p348 = pneg %p237
        %p349 = scmp.lt.s32.totalorder %s25, 1
        %s350 = scalar_select %p349, %s25, 1
        %s351 = smul.addr %s350, 4
        %s352 = scalar_lea.vmem %s9, %s351
        %p353 = pneg %p266
        %p354 = pneg %p263
        %s355 = sand.u32 %s253, 1
        %s356 = scalar_lea.sflag [#allocation3], %s355
        %s357 = sand.u32 %s253, 1
        %s358 = scalar_lea.vmem [#allocation2], %s357
        %p359 = scmp.lt.s32.totalorder %s25, 1
        %s360 = scalar_select %p359, %s25, 1
        %s361 = smul.addr %s360, 8
        %s362 = smul.addr %s361, 4
        %s363 = scalar_lea.vmem %s0, %s362
        %p364 = scmp.lt.s32.totalorder %s25, 1
        %s365 = scalar_select %p364, %s25, 1
        %s366 = smul.addr %s365, 4
        %s367 = scalar_lea.vmem %s9, %s366
        %v369 = vld [vmem:[%s363] sm:$0xff]
        %v370 = vld [vmem:[%s363 + $0x8] sm:$0xff]
        %v371 = vld [vmem:[%s363 + $0x10] sm:$0xff]
        %v372 = vld [vmem:[%s363 + $0x18] sm:$0xff]
        %v373 = vld [vmem:[%s1] sm:$0xf]
        %v374 = vld [vmem:[%s1 + $0x4] sm:$0xf]
        %v375 = vld [vmem:[%s1 + $0x8] sm:$0xf]
        %v376 = vld [vmem:[%s1 + $0xc] sm:$0xf]
        %v377 = vld [vmem:[%s1 + $0x10] sm:$0xf]
        %v378 = vld [vmem:[%s1 + $0x14] sm:$0xf]
        %v379 = vld [vmem:[%s1 + $0x18] sm:$0xf]
        %v380 = vld [vmem:[%s1 + $0x1c] sm:$0xf]
        %v381 = vld [vmem:[%s1 + $0x20] sm:$0xf]
        %v382 = vld [vmem:[%s1 + $0x24] sm:$0xf]
        %v383 = vld [vmem:[%s1 + $0x28] sm:$0xf]
        %v384 = vld [vmem:[%s1 + $0x2c] sm:$0xf]
        %v385 = vld [vmem:[%s1 + $0x30] sm:$0xf]
        %v386 = vld [vmem:[%s1 + $0x34] sm:$0xf]
        %v387 = vld [vmem:[%s1 + $0x38] sm:$0xf]
        %v388 = vld [vmem:[%s1 + $0x3c] sm:$0xf]
        %v389 = vld [vmem:[%s1 + $0x40] sm:$0xf]
        %v390 = vld [vmem:[%s1 + $0x44] sm:$0xf]
        %v391 = vld [vmem:[%s1 + $0x48] sm:$0xf]
        %v392 = vld [vmem:[%s1 + $0x4c] sm:$0xf]
        %v393 = vld [vmem:[%s1 + $0x50] sm:$0xf]
        %v394 = vld [vmem:[%s1 + $0x54] sm:$0xf]
        %v395 = vld [vmem:[%s1 + $0x58] sm:$0xf]
        %v396 = vld [vmem:[%s1 + $0x5c] sm:$0xf]
        %v397 = vld [vmem:[%s1 + $0x60] sm:$0xf]
        %v398 = vld [vmem:[%s1 + $0x64] sm:$0xf]
        %v399 = vld [vmem:[%s1 + $0x68] sm:$0xf]
        %v400 = vld [vmem:[%s1 + $0x6c] sm:$0xf]
        %v401 = vld [vmem:[%s1 + $0x70] sm:$0xf]
        %v402 = vld [vmem:[%s1 + $0x74] sm:$0xf]
        %v403 = vld [vmem:[%s1 + $0x78] sm:$0xf]
        %v404 = vld [vmem:[%s1 + $0x7c] sm:$0xf]
        %v405 = vld [vmem:[%s1 + $0x80] sm:$0xf]
        %v406 = vld [vmem:[%s1 + $0x84] sm:$0xf]
        %v407 = vld [vmem:[%s1 + $0x88] sm:$0xf]
        %v408 = vld [vmem:[%s1 + $0x8c] sm:$0xf]
        %v409 = vld [vmem:[%s1 + $0x90] sm:$0xf]
        %v410 = vld [vmem:[%s1 + $0x94] sm:$0xf]
        %v411 = vld [vmem:[%s1 + $0x98] sm:$0xf]
        %v412 = vld [vmem:[%s1 + $0x9c] sm:$0xf]
        %v413 = vld [vmem:[%s1 + $0xa0] sm:$0xf]
        %v414 = vld [vmem:[%s1 + $0xa4] sm:$0xf]
        %v415 = vld [vmem:[%s1 + $0xa8] sm:$0xf]
        %v416 = vld [vmem:[%s1 + $0xac] sm:$0xf]
        %v417 = vld [vmem:[%s1 + $0xb0] sm:$0xf]
        %v418 = vld [vmem:[%s1 + $0xb4] sm:$0xf]
        %v419 = vld [vmem:[%s1 + $0xb8] sm:$0xf]
        %v420 = vld [vmem:[%s1 + $0xbc] sm:$0xf]
        %v421 = vld [vmem:[%s1 + $0xc0] sm:$0xf]
        %v422 = vld [vmem:[%s1 + $0xc4] sm:$0xf]
        %v423 = vld [vmem:[%s1 + $0xc8] sm:$0xf]
        %v424 = vld [vmem:[%s1 + $0xcc] sm:$0xf]
        %v425 = vld [vmem:[%s1 + $0xd0] sm:$0xf]
        %v426 = vld [vmem:[%s1 + $0xd4] sm:$0xf]
        %v427 = vld [vmem:[%s1 + $0xd8] sm:$0xf]
        %v428 = vld [vmem:[%s1 + $0xdc] sm:$0xf]
        %v429 = vld [vmem:[%s1 + $0xe0] sm:$0xf]
        %v430 = vld [vmem:[%s1 + $0xe4] sm:$0xf]
        %v431 = vld [vmem:[%s1 + $0xe8] sm:$0xf]
        %v432 = vld [vmem:[%s1 + $0xec] sm:$0xf]
        %v433 = vld [vmem:[%s1 + $0xf0] sm:$0xf]
        %v434 = vld [vmem:[%s1 + $0xf4] sm:$0xf]
        %v435 = vld [vmem:[%s1 + $0xf8] sm:$0xf]
        %v436 = vld [vmem:[%s1 + $0xfc] sm:$0xf]
        %v437 = vld [vmem:[%s2] sm:$0x1]
        %v439 = vlaneseq
        %v440 = vshrl.u32 %v439, 7
        %v441 = vsub.s32 0, %v440
        %v442 = vrot.slane %v437, %v441
        %v448 = vunpack.c.l.b16 %v369
        %v449 = vunpack.c.h.b16 %v369
        %v450 = vunpack.c.l.b16 %v370
        %v451 = vunpack.c.h.b16 %v370
        %v452 = vunpack.c.l.b16 %v371
        %v453 = vunpack.c.h.b16 %v371
        %v454 = vunpack.c.l.b16 %v372
        %v455 = vunpack.c.h.b16 %v372
        %v456 = vpack.c.b16 %v452, %v448
        %v457 = vpack.c.b16 %v453, %v449
        %v458 = vpack.c.b16 %v454, %v450
        %v459 = vpack.c.b16 %v455, %v451
        %v528 = vunpack.c.l.b16 %v373
        %v529 = vunpack.c.l.b16 %v374
        %v530 = vunpack.c.l.b16 %v375
        %v531 = vunpack.c.l.b16 %v376
        %v532 = vunpack.c.l.b16 %v377
        %v533 = vunpack.c.l.b16 %v378
        %v534 = vunpack.c.l.b16 %v379
        %v535 = vunpack.c.l.b16 %v380
        %v536 = vunpack.c.l.b16 %v381
        %v537 = vunpack.c.l.b16 %v382
        %v538 = vunpack.c.l.b16 %v383
        %v539 = vunpack.c.l.b16 %v384
        %v540 = vunpack.c.l.b16 %v385
        %v541 = vunpack.c.l.b16 %v386
        %v542 = vunpack.c.l.b16 %v387
        %v543 = vunpack.c.l.b16 %v388
        %v544 = vunpack.c.l.b16 %v389
        %v545 = vunpack.c.l.b16 %v390
        %v546 = vunpack.c.l.b16 %v391
        %v547 = vunpack.c.l.b16 %v392
        %v548 = vunpack.c.l.b16 %v393
        %v549 = vunpack.c.l.b16 %v394
        %v550 = vunpack.c.l.b16 %v395
        %v551 = vunpack.c.l.b16 %v396
        %v552 = vunpack.c.l.b16 %v397
        %v553 = vunpack.c.l.b16 %v398
        %v554 = vunpack.c.l.b16 %v399
        %v555 = vunpack.c.l.b16 %v400
        %v556 = vunpack.c.l.b16 %v401
        %v557 = vunpack.c.l.b16 %v402
        %v558 = vunpack.c.l.b16 %v403
        %v559 = vunpack.c.l.b16 %v404
        %v560 = vunpack.c.l.b16 %v405
        %v561 = vunpack.c.l.b16 %v406
        %v562 = vunpack.c.l.b16 %v407
        %v563 = vunpack.c.l.b16 %v408
        %v564 = vunpack.c.l.b16 %v409
        %v565 = vunpack.c.l.b16 %v410
        %v566 = vunpack.c.l.b16 %v411
        %v567 = vunpack.c.l.b16 %v412
        %v568 = vunpack.c.l.b16 %v413
        %v569 = vunpack.c.l.b16 %v414
        %v570 = vunpack.c.l.b16 %v415
        %v571 = vunpack.c.l.b16 %v416
        %v572 = vunpack.c.l.b16 %v417
        %v573 = vunpack.c.l.b16 %v418
        %v574 = vunpack.c.l.b16 %v419
        %v575 = vunpack.c.l.b16 %v420
        %v576 = vunpack.c.l.b16 %v421
        %v577 = vunpack.c.l.b16 %v422
        %v578 = vunpack.c.l.b16 %v423
        %v579 = vunpack.c.l.b16 %v424
        %v580 = vunpack.c.l.b16 %v425
        %v581 = vunpack.c.l.b16 %v426
        %v582 = vunpack.c.l.b16 %v427
        %v583 = vunpack.c.l.b16 %v428
        %v584 = vunpack.c.l.b16 %v429
        %v585 = vunpack.c.l.b16 %v430
        %v586 = vunpack.c.l.b16 %v431
        %v587 = vunpack.c.l.b16 %v432
        %v588 = vunpack.c.l.b16 %v433
        %v589 = vunpack.c.l.b16 %v434
        %v590 = vunpack.c.l.b16 %v435
        %v591 = vunpack.c.l.b16 %v436
        %v592 = vpack.c.b16 %v529, %v528
        %v593 = vpack.c.b16 %v531, %v530
        %v594 = vpack.c.b16 %v533, %v532
        %v595 = vpack.c.b16 %v535, %v534
        %v596 = vpack.c.b16 %v537, %v536
        %v597 = vpack.c.b16 %v539, %v538
        %v598 = vpack.c.b16 %v541, %v540
        %v599 = vpack.c.b16 %v543, %v542
        %v600 = vpack.c.b16 %v545, %v544
        %v601 = vpack.c.b16 %v547, %v546
        %v602 = vpack.c.b16 %v549, %v548
        %v603 = vpack.c.b16 %v551, %v550
        %v604 = vpack.c.b16 %v553, %v552
        %v605 = vpack.c.b16 %v555, %v554
        %v606 = vpack.c.b16 %v557, %v556
        %v607 = vpack.c.b16 %v559, %v558
        %v608 = vpack.c.b16 %v561, %v560
        %v609 = vpack.c.b16 %v563, %v562
        %v610 = vpack.c.b16 %v565, %v564
        %v611 = vpack.c.b16 %v567, %v566
        %v612 = vpack.c.b16 %v569, %v568
        %v613 = vpack.c.b16 %v571, %v570
        %v614 = vpack.c.b16 %v573, %v572
        %v615 = vpack.c.b16 %v575, %v574
        %v616 = vpack.c.b16 %v577, %v576
        %v617 = vpack.c.b16 %v579, %v578
        %v618 = vpack.c.b16 %v581, %v580
        %v619 = vpack.c.b16 %v583, %v582
        %v620 = vpack.c.b16 %v585, %v584
        %v621 = vpack.c.b16 %v587, %v586
        %v622 = vpack.c.b16 %v589, %v588
        %v623 = vpack.c.b16 %v591, %v590
        %656 = vmatprep.subr.bf16.mxu0 0
        %657 = vmatpush1.bf16.msra.mxu0 %v592
        %658 = vmatprep.subr.bf16.mxu0 0
        %659 = vmatpush1.bf16.msra.mxu0 %v593
        %660 = vmatprep.subr.bf16.mxu0 0
        %661 = vmatpush1.bf16.msra.mxu0 %v594
        %662 = vmatprep.subr.bf16.mxu0 0
        %663 = vmatpush1.bf16.msra.mxu0 %v595
        %664 = vmatprep.subr.bf16.mxu0 0
        %665 = vmatpush1.bf16.msra.mxu0 %v596
        %666 = vmatprep.subr.bf16.mxu0 0
        %667 = vmatpush1.bf16.msra.mxu0 %v597
        %668 = vmatprep.subr.bf16.mxu0 0
        %669 = vmatpush1.bf16.msra.mxu0 %v598
        %670 = vmatprep.subr.bf16.mxu0 0
        %671 = vmatpush1.bf16.msra.mxu0 %v599
        %672 = vmatprep.subr.bf16.mxu0 0
        %673 = vmatpush1.bf16.msra.mxu0 %v600
        %674 = vmatprep.subr.bf16.mxu0 0
        %675 = vmatpush1.bf16.msra.mxu0 %v601
        %676 = vmatprep.subr.bf16.mxu0 0
        %677 = vmatpush1.bf16.msra.mxu0 %v602
        %678 = vmatprep.subr.bf16.mxu0 0
        %679 = vmatpush1.bf16.msra.mxu0 %v603
        %680 = vmatprep.subr.bf16.mxu0 0
        %681 = vmatpush1.bf16.msra.mxu0 %v604
        %682 = vmatprep.subr.bf16.mxu0 0
        %683 = vmatpush1.bf16.msra.mxu0 %v605
        %684 = vmatprep.subr.bf16.mxu0 0
        %685 = vmatpush1.bf16.msra.mxu0 %v606
        %686 = vmatprep.subr.bf16.mxu0 0
        %687 = vmatpush1.bf16.msra.mxu0 %v607
        %688 = vmatprep.mubr.bf16.mxu0 %v457
        %689 = vmatmul.mubr.bf16.gmra.mrb[0].mxu0 %v456
        %v690 = vpop.f32.mrb[0].mxu0
        %v691 = vadd.f32 %v442, %v690
        %v692 = vpop.f32.mrb[0].mxu0
        %v693 = vpop.f32.mrb[0].mxu0
        %v694 = vadd.f32 %v442, %v693
        %v695 = vpop.f32.mrb[0].mxu0
        %696 = vdwg.mxu0
        %697 = vmatprep.subr.bf16.mxu0 0
        %698 = vmatpush1.bf16.msra.mxu0 %v608
        %699 = vmatprep.subr.bf16.mxu0 0
        %700 = vmatpush1.bf16.msra.mxu0 %v609
        %701 = vmatprep.subr.bf16.mxu0 0
        %702 = vmatpush1.bf16.msra.mxu0 %v610
        %703 = vmatprep.subr.bf16.mxu0 0
        %704 = vmatpush1.bf16.msra.mxu0 %v611
        %705 = vmatprep.subr.bf16.mxu0 0
        %706 = vmatpush1.bf16.msra.mxu0 %v612
        %707 = vmatprep.subr.bf16.mxu0 0
        %708 = vmatpush1.bf16.msra.mxu0 %v613
        %709 = vmatprep.subr.bf16.mxu0 0
        %710 = vmatpush1.bf16.msra.mxu0 %v614
        %711 = vmatprep.subr.bf16.mxu0 0
        %712 = vmatpush1.bf16.msra.mxu0 %v615
        %713 = vmatprep.subr.bf16.mxu0 0
        %714 = vmatpush1.bf16.msra.mxu0 %v616
        %715 = vmatprep.subr.bf16.mxu0 0
        %716 = vmatpush1.bf16.msra.mxu0 %v617
        %717 = vmatprep.subr.bf16.mxu0 0
        %718 = vmatpush1.bf16.msra.mxu0 %v618
        %719 = vmatprep.subr.bf16.mxu0 0
        %720 = vmatpush1.bf16.msra.mxu0 %v619
        %721 = vmatprep.subr.bf16.mxu0 0
        %722 = vmatpush1.bf16.msra.mxu0 %v620
        %723 = vmatprep.subr.bf16.mxu0 0
        %724 = vmatpush1.bf16.msra.mxu0 %v621
        %725 = vmatprep.subr.bf16.mxu0 0
        %726 = vmatpush1.bf16.msra.mxu0 %v622
        %727 = vmatprep.subr.bf16.mxu0 0
        %728 = vmatpush1.bf16.msra.mxu0 %v623
        %729 = vmatprep.mubr.bf16.mxu0 %v459
        %730 = vmatmul.mubr.bf16.gmra.mrb[0].mxu0 %v458
        %v731 = vpop.f32.mrb[0].mxu0
        %v732 = vadd.f32 %v691, %v731
        %v733 = vpop.f32.mrb[0].mxu0
        %v734 = vpop.f32.mrb[0].mxu0
        %v735 = vadd.f32 %v694, %v734
        %v736 = vpop.f32.mrb[0].mxu0
        %737 = vdwg.mxu0
        %v738 = vmax.f32 %v732, 0.0
        %v739 = vmax.f32 %v735, 0.0
        %v740 = vld [vmem:[%s3] sm:$0xf]
        %v741 = vld [vmem:[%s3 + $0x4] sm:$0xf]
        %v742 = vld [vmem:[%s3 + $0x8] sm:$0xf]
        %v743 = vld [vmem:[%s3 + $0xc] sm:$0xf]
        %v744 = vld [vmem:[%s3 + $0x10] sm:$0xf]
        %v745 = vld [vmem:[%s3 + $0x14] sm:$0xf]
        %v746 = vld [vmem:[%s3 + $0x18] sm:$0xf]
        %v747 = vld [vmem:[%s3 + $0x1c] sm:$0xf]
        %v748 = vld [vmem:[%s3 + $0x20] sm:$0xf]
        %v749 = vld [vmem:[%s3 + $0x24] sm:$0xf]
        %v750 = vld [vmem:[%s3 + $0x28] sm:$0xf]
        %v751 = vld [vmem:[%s3 + $0x2c] sm:$0xf]
        %v752 = vld [vmem:[%s3 + $0x30] sm:$0xf]
        %v753 = vld [vmem:[%s3 + $0x34] sm:$0xf]
        %v754 = vld [vmem:[%s3 + $0x38] sm:$0xf]
        %v755 = vld [vmem:[%s3 + $0x3c] sm:$0xf]
        %v756 = vpack.c.bf16 %v738, %v738
        %v757 = vld [vmem:[%s3 + $0x40] sm:$0xf]
        %v758 = vld [vmem:[%s3 + $0x44] sm:$0xf]
        %v759 = vld [vmem:[%s3 + $0x48] sm:$0xf]
        %v760 = vld [vmem:[%s3 + $0x4c] sm:$0xf]
        %v761 = vld [vmem:[%s3 + $0x50] sm:$0xf]
        %v762 = vld [vmem:[%s3 + $0x54] sm:$0xf]
        %v763 = vld [vmem:[%s3 + $0x58] sm:$0xf]
        %v764 = vld [vmem:[%s3 + $0x5c] sm:$0xf]
        %v765 = vld [vmem:[%s3 + $0x60] sm:$0xf]
        %v766 = vld [vmem:[%s3 + $0x64] sm:$0xf]
        %v767 = vld [vmem:[%s3 + $0x68] sm:$0xf]
        %v768 = vld [vmem:[%s3 + $0x6c] sm:$0xf]
        %v769 = vld [vmem:[%s3 + $0x70] sm:$0xf]
        %v770 = vld [vmem:[%s3 + $0x74] sm:$0xf]
        %v771 = vld [vmem:[%s3 + $0x78] sm:$0xf]
        %v772 = vld [vmem:[%s3 + $0x7c] sm:$0xf]
        %v774 = vshrl.u32 %v756, 16
        %v776 = vshll.u32 %v756, 16
        %v778 = vrot.slane %v776, 1
        %v779 = vor.u32 %v774, %v778
        %v797 = vunpack.c.l.b16 %v757
        %v798 = vunpack.c.l.b16 %v758
        %v799 = vunpack.c.l.b16 %v759
        %v800 = vunpack.c.l.b16 %v760
        %v801 = vunpack.c.l.b16 %v761
        %v802 = vunpack.c.l.b16 %v762
        %v803 = vunpack.c.l.b16 %v763
        %v804 = vunpack.c.l.b16 %v764
        %v805 = vunpack.c.l.b16 %v765
        %v806 = vunpack.c.l.b16 %v766
        %v807 = vunpack.c.l.b16 %v767
        %v808 = vunpack.c.l.b16 %v768
        %v809 = vunpack.c.l.b16 %v769
        %v810 = vunpack.c.l.b16 %v770
        %v811 = vunpack.c.l.b16 %v771
        %v812 = vunpack.c.l.b16 %v772
        %v813 = vpack.c.b16 %v798, %v797
        %v814 = vpack.c.b16 %v800, %v799
        %v815 = vpack.c.b16 %v802, %v801
        %v816 = vpack.c.b16 %v804, %v803
        %v817 = vpack.c.b16 %v806, %v805
        %v818 = vpack.c.b16 %v808, %v807
        %v819 = vpack.c.b16 %v810, %v809
        %v820 = vpack.c.b16 %v812, %v811
        %829 = vmatprep.subr.bf16.mxu0 0
        %830 = vmatpush1.bf16.msra.mxu0 %v813
        %831 = vmatprep.subr.bf16.mxu0 0
        %832 = vmatpush1.bf16.msra.mxu0 %v814
        %833 = vmatprep.subr.bf16.mxu0 0
        %834 = vmatpush1.bf16.msra.mxu0 %v815
        %835 = vmatprep.subr.bf16.mxu0 0
        %836 = vmatpush1.bf16.msra.mxu0 %v816
        %837 = vmatprep.subr.bf16.mxu0 0
        %838 = vmatpush1.bf16.msra.mxu0 %v817
        %839 = vmatprep.subr.bf16.mxu0 0
        %840 = vmatpush1.bf16.msra.mxu0 %v818
        %841 = vmatprep.subr.bf16.mxu0 0
        %842 = vmatpush1.bf16.msra.mxu0 %v819
        %843 = vmatprep.subr.bf16.mxu0 0
        %844 = vmatpush1.bf16.msra.mxu0 %v820
        %845 = vmatprep.subr.bf16.mxu0 0
        %846 = vmatpush1.bf16.msra.mxu0 0
        %847 = vmatprep.subr.bf16.mxu0 0
        %848 = vmatpush1.bf16.msra.mxu0 0
        %849 = vmatprep.subr.bf16.mxu0 0
        %850 = vmatpush1.bf16.msra.mxu0 0
        %851 = vmatprep.subr.bf16.mxu0 0
        %852 = vmatpush1.bf16.msra.mxu0 0
        %853 = vmatprep.subr.bf16.mxu0 0
        %854 = vmatpush1.bf16.msra.mxu0 0
        %855 = vmatprep.subr.bf16.mxu0 0
        %856 = vmatpush1.bf16.msra.mxu0 0
        %857 = vmatprep.subr.bf16.mxu0 0
        %858 = vmatpush1.bf16.msra.mxu0 0
        %859 = vmatprep.subr.bf16.mxu0 0
        %860 = vmatpush1.bf16.msra.mxu0 0
        %861 = vmatprep.mubr.bf16.mxu0 0
        %862 = vmatmul.mubr.bf16.gmra.mrb[0].mxu0 %v779
        %v863 = vpop.f32.mrb[0].mxu0
        %v864 = vadd.f32 0.0, %v863
        %v865 = vpop.f32.mrb[0].mxu0
        %v866 = vpop.f32.mrb[0].mxu0
        %v867 = vpop.f32.mrb[0].mxu0
        %868 = vdwg.mxu0
        %v885 = vunpack.c.l.b16 %v740
        %v886 = vunpack.c.l.b16 %v741
        %v887 = vunpack.c.l.b16 %v742
        %v888 = vunpack.c.l.b16 %v743
        %v889 = vunpack.c.l.b16 %v744
        %v890 = vunpack.c.l.b16 %v745
        %v891 = vunpack.c.l.b16 %v746
        %v892 = vunpack.c.l.b16 %v747
        %v893 = vunpack.c.l.b16 %v748
        %v894 = vunpack.c.l.b16 %v749
        %v895 = vunpack.c.l.b16 %v750
        %v896 = vunpack.c.l.b16 %v751
        %v897 = vunpack.c.l.b16 %v752
        %v898 = vunpack.c.l.b16 %v753
        %v899 = vunpack.c.l.b16 %v754
        %v900 = vunpack.c.l.b16 %v755
        %v901 = vpack.c.b16 %v886, %v885
        %v902 = vpack.c.b16 %v888, %v887
        %v903 = vpack.c.b16 %v890, %v889
        %v904 = vpack.c.b16 %v892, %v891
        %v905 = vpack.c.b16 %v894, %v893
        %v906 = vpack.c.b16 %v896, %v895
        %v907 = vpack.c.b16 %v898, %v897
        %v908 = vpack.c.b16 %v900, %v899
        %917 = vmatprep.subr.bf16.mxu0 0
        %918 = vmatpush1.bf16.msra.mxu0 %v901
        %919 = vmatprep.subr.bf16.mxu0 0
        %920 = vmatpush1.bf16.msra.mxu0 %v902
        %921 = vmatprep.subr.bf16.mxu0 0
        %922 = vmatpush1.bf16.msra.mxu0 %v903
        %923 = vmatprep.subr.bf16.mxu0 0
        %924 = vmatpush1.bf16.msra.mxu0 %v904
        %925 = vmatprep.subr.bf16.mxu0 0
        %926 = vmatpush1.bf16.msra.mxu0 %v905
        %927 = vmatprep.subr.bf16.mxu0 0
        %928 = vmatpush1.bf16.msra.mxu0 %v906
        %929 = vmatprep.subr.bf16.mxu0 0
        %930 = vmatpush1.bf16.msra.mxu0 %v907
        %931 = vmatprep.subr.bf16.mxu0 0
        %932 = vmatpush1.bf16.msra.mxu0 %v908
        %933 = vmatprep.subr.bf16.mxu0 0
        %934 = vmatpush1.bf16.msra.mxu0 0
        %935 = vmatprep.subr.bf16.mxu0 0
        %936 = vmatpush1.bf16.msra.mxu0 0
        %937 = vmatprep.subr.bf16.mxu0 0
        %938 = vmatpush1.bf16.msra.mxu0 0
        %939 = vmatprep.subr.bf16.mxu0 0
        %940 = vmatpush1.bf16.msra.mxu0 0
        %941 = vmatprep.subr.bf16.mxu0 0
        %942 = vmatpush1.bf16.msra.mxu0 0
        %943 = vmatprep.subr.bf16.mxu0 0
        %944 = vmatpush1.bf16.msra.mxu0 0
        %945 = vmatprep.subr.bf16.mxu0 0
        %946 = vmatpush1.bf16.msra.mxu0 0
        %947 = vmatprep.subr.bf16.mxu0 0
        %948 = vmatpush1.bf16.msra.mxu0 0
        %949 = vmatprep.mubr.bf16.mxu0 0
        %950 = vmatmul.mubr.bf16.gmra.mrb[0].mxu0 %v756
        %v951 = vpop.f32.mrb[0].mxu0
        %v952 = vadd.f32 %v864, %v951
        %v953 = vpop.f32.mrb[0].mxu0
        %v954 = vpop.f32.mrb[0].mxu0
        %v955 = vpop.f32.mrb[0].mxu0
        %956 = vdwg.mxu0
        %v957 = vrot.slane %v774, 2
        %v958 = vrot.slane %v776, 3
        %v959 = vor.u32 %v957, %v958
        %961 = vmatprep.subr.bf16.mxu0 0
        %962 = vmatpush1.bf16.msra.mxu0 %v813
        %963 = vmatprep.subr.bf16.mxu0 0
        %964 = vmatpush1.bf16.msra.mxu0 %v814
        %965 = vmatprep.subr.bf16.mxu0 0
        %966 = vmatpush1.bf16.msra.mxu0 %v815
        %967 = vmatprep.subr.bf16.mxu0 0
        %968 = vmatpush1.bf16.msra.mxu0 %v816
        %969 = vmatprep.subr.bf16.mxu0 0
        %970 = vmatpush1.bf16.msra.mxu0 %v817
        %971 = vmatprep.subr.bf16.mxu0 0
        %972 = vmatpush1.bf16.msra.mxu0 %v818
        %973 = vmatprep.subr.bf16.mxu0 0
        %974 = vmatpush1.bf16.msra.mxu0 %v819
        %975 = vmatprep.subr.bf16.mxu0 0
        %976 = vmatpush1.bf16.msra.mxu0 %v820
        %977 = vmatprep.subr.bf16.mxu0 0
        %978 = vmatpush1.bf16.msra.mxu0 0
        %979 = vmatprep.subr.bf16.mxu0 0
        %980 = vmatpush1.bf16.msra.mxu0 0
        %981 = vmatprep.subr.bf16.mxu0 0
        %982 = vmatpush1.bf16.msra.mxu0 0
        %983 = vmatprep.subr.bf16.mxu0 0
        %984 = vmatpush1.bf16.msra.mxu0 0
        %985 = vmatprep.subr.bf16.mxu0 0
        %986 = vmatpush1.bf16.msra.mxu0 0
        %987 = vmatprep.subr.bf16.mxu0 0
        %988 = vmatpush1.bf16.msra.mxu0 0
        %989 = vmatprep.subr.bf16.mxu0 0
        %990 = vmatpush1.bf16.msra.mxu0 0
        %991 = vmatprep.subr.bf16.mxu0 0
        %992 = vmatpush1.bf16.msra.mxu0 0
        %993 = vmatprep.mubr.bf16.mxu0 0
        %994 = vmatmul.mubr.bf16.gmra.mrb[0].mxu0 %v959
        %v995 = vpop.f32.mrb[0].mxu0
        %v996 = vadd.f32 0.0, %v995
        %v997 = vpop.f32.mrb[0].mxu0
        %v998 = vpop.f32.mrb[0].mxu0
        %v999 = vpop.f32.mrb[0].mxu0
        %1000 = vdwg.mxu0
        %v1002 = vrot.slane %v756, 2
        %1004 = vmatprep.subr.bf16.mxu0 0
        %1005 = vmatpush1.bf16.msra.mxu0 %v901
        %1006 = vmatprep.subr.bf16.mxu0 0
        %1007 = vmatpush1.bf16.msra.mxu0 %v902
        %1008 = vmatprep.subr.bf16.mxu0 0
        %1009 = vmatpush1.bf16.msra.mxu0 %v903
        %1010 = vmatprep.subr.bf16.mxu0 0
        %1011 = vmatpush1.bf16.msra.mxu0 %v904
        %1012 = vmatprep.subr.bf16.mxu0 0
        %1013 = vmatpush1.bf16.msra.mxu0 %v905
        %1014 = vmatprep.subr.bf16.mxu0 0
        %1015 = vmatpush1.bf16.msra.mxu0 %v906
        %1016 = vmatprep.subr.bf16.mxu0 0
        %1017 = vmatpush1.bf16.msra.mxu0 %v907
        %1018 = vmatprep.subr.bf16.mxu0 0
        %1019 = vmatpush1.bf16.msra.mxu0 %v908
        %1020 = vmatprep.subr.bf16.mxu0 0
        %1021 = vmatpush1.bf16.msra.mxu0 0
        %1022 = vmatprep.subr.bf16.mxu0 0
        %1023 = vmatpush1.bf16.msra.mxu0 0
        %1024 = vmatprep.subr.bf16.mxu0 0
        %1025 = vmatpush1.bf16.msra.mxu0 0
        %1026 = vmatprep.subr.bf16.mxu0 0
        %1027 = vmatpush1.bf16.msra.mxu0 0
        %1028 = vmatprep.subr.bf16.mxu0 0
        %1029 = vmatpush1.bf16.msra.mxu0 0
        %1030 = vmatprep.subr.bf16.mxu0 0
        %1031 = vmatpush1.bf16.msra.mxu0 0
        %1032 = vmatprep.subr.bf16.mxu0 0
        %1033 = vmatpush1.bf16.msra.mxu0 0
        %1034 = vmatprep.subr.bf16.mxu0 0
        %1035 = vmatpush1.bf16.msra.mxu0 0
        %1036 = vmatprep.mubr.bf16.mxu0 0
        %1037 = vmatmul.mubr.bf16.gmra.mrb[0].mxu0 %v1002
        %v1038 = vpop.f32.mrb[0].mxu0
        %v1039 = vadd.f32 %v996, %v1038
        %v1040 = vpop.f32.mrb[0].mxu0
        %v1041 = vpop.f32.mrb[0].mxu0
        %v1042 = vpop.f32.mrb[0].mxu0
        %1043 = vdwg.mxu0
        %v1044 = vld [vmem:[%s3 + $0x80] sm:$0xf]
        %v1045 = vld [vmem:[%s3 + $0x84] sm:$0xf]
        %v1046 = vld [vmem:[%s3 + $0x88] sm:$0xf]
        %v1047 = vld [vmem:[%s3 + $0x8c] sm:$0xf]
        %v1048 = vld [vmem:[%s3 + $0x90] sm:$0xf]
        %v1049 = vld [vmem:[%s3 + $0x94] sm:$0xf]
        %v1050 = vld [vmem:[%s3 + $0x98] sm:$0xf]
        %v1051 = vld [vmem:[%s3 + $0x9c] sm:$0xf]
        %v1052 = vld [vmem:[%s3 + $0xa0] sm:$0xf]
        %v1053 = vld [vmem:[%s3 + $0xa4] sm:$0xf]
        %v1054 = vld [vmem:[%s3 + $0xa8] sm:$0xf]
        %v1055 = vld [vmem:[%s3 + $0xac] sm:$0xf]
        %v1056 = vld [vmem:[%s3 + $0xb0] sm:$0xf]
        %v1057 = vld [vmem:[%s3 + $0xb4] sm:$0xf]
        %v1058 = vld [vmem:[%s3 + $0xb8] sm:$0xf]
        %v1059 = vld [vmem:[%s3 + $0xbc] sm:$0xf]
        %v1060 = vrot.slane %v756, 1
        %v1078 = vunpack.c.l.b16 %v1044
        %v1079 = vunpack.c.l.b16 %v1045
        %v1080 = vunpack.c.l.b16 %v1046
        %v1081 = vunpack.c.l.b16 %v1047
        %v1082 = vunpack.c.l.b16 %v1048
        %v1083 = vunpack.c.l.b16 %v1049
        %v1084 = vunpack.c.l.b16 %v1050
        %v1085 = vunpack.c.l.b16 %v1051
        %v1086 = vunpack.c.l.b16 %v1052
        %v1087 = vunpack.c.l.b16 %v1053
        %v1088 = vunpack.c.l.b16 %v1054
        %v1089 = vunpack.c.l.b16 %v1055
        %v1090 = vunpack.c.l.b16 %v1056
        %v1091 = vunpack.c.l.b16 %v1057
        %v1092 = vunpack.c.l.b16 %v1058
        %v1093 = vunpack.c.l.b16 %v1059
        %v1094 = vpack.c.b16 %v1079, %v1078
        %v1095 = vpack.c.b16 %v1081, %v1080
        %v1096 = vpack.c.b16 %v1083, %v1082
        %v1097 = vpack.c.b16 %v1085, %v1084
        %v1098 = vpack.c.b16 %v1087, %v1086
        %v1099 = vpack.c.b16 %v1089, %v1088
        %v1100 = vpack.c.b16 %v1091, %v1090
        %v1101 = vpack.c.b16 %v1093, %v1092
        %1110 = vmatprep.subr.bf16.mxu0 0
        %1111 = vmatpush1.bf16.msra.mxu0 %v1094
        %1112 = vmatprep.subr.bf16.mxu0 0
        %1113 = vmatpush1.bf16.msra.mxu0 %v1095
        %1114 = vmatprep.subr.bf16.mxu0 0
        %1115 = vmatpush1.bf16.msra.mxu0 %v1096
        %1116 = vmatprep.subr.bf16.mxu0 0
        %1117 = vmatpush1.bf16.msra.mxu0 %v1097
        %1118 = vmatprep.subr.bf16.mxu0 0
        %1119 = vmatpush1.bf16.msra.mxu0 %v1098
        %1120 = vmatprep.subr.bf16.mxu0 0
        %1121 = vmatpush1.bf16.msra.mxu0 %v1099
        %1122 = vmatprep.subr.bf16.mxu0 0
        %1123 = vmatpush1.bf16.msra.mxu0 %v1100
        %1124 = vmatprep.subr.bf16.mxu0 0
        %1125 = vmatpush1.bf16.msra.mxu0 %v1101
        %1126 = vmatprep.subr.bf16.mxu0 0
        %1127 = vmatpush1.bf16.msra.mxu0 0
        %1128 = vmatprep.subr.bf16.mxu0 0
        %1129 = vmatpush1.bf16.msra.mxu0 0
        %1130 = vmatprep.subr.bf16.mxu0 0
        %1131 = vmatpush1.bf16.msra.mxu0 0
        %1132 = vmatprep.subr.bf16.mxu0 0
        %1133 = vmatpush1.bf16.msra.mxu0 0
        %1134 = vmatprep.subr.bf16.mxu0 0
        %1135 = vmatpush1.bf16.msra.mxu0 0
        %1136 = vmatprep.subr.bf16.mxu0 0
        %1137 = vmatpush1.bf16.msra.mxu0 0
        %1138 = vmatprep.subr.bf16.mxu0 0
        %1139 = vmatpush1.bf16.msra.mxu0 0
        %1140 = vmatprep.subr.bf16.mxu0 0
        %1141 = vmatpush1.bf16.msra.mxu0 0
        %1142 = vmatprep.mubr.bf16.mxu0 0
        %1143 = vmatmul.mubr.bf16.gmra.mrb[0].mxu0 %v1060
        %v1144 = vpop.f32.mrb[0].mxu0
        %v1145 = vadd.f32 0.0, %v1144
        %v1146 = vpop.f32.mrb[0].mxu0
        %v1147 = vpop.f32.mrb[0].mxu0
        %v1148 = vpop.f32.mrb[0].mxu0
        %1149 = vdwg.mxu0
        %v1150 = vadd.f32 %v952, %v1145
        %v1151 = vrot.slane %v756, 3
        %1153 = vmatprep.subr.bf16.mxu0 0
        %1154 = vmatpush1.bf16.msra.mxu0 %v1094
        %1155 = vmatprep.subr.bf16.mxu0 0
        %1156 = vmatpush1.bf16.msra.mxu0 %v1095
        %1157 = vmatprep.subr.bf16.mxu0 0
        %1158 = vmatpush1.bf16.msra.mxu0 %v1096
        %1159 = vmatprep.subr.bf16.mxu0 0
        %1160 = vmatpush1.bf16.msra.mxu0 %v1097
        %1161 = vmatprep.subr.bf16.mxu0 0
        %1162 = vmatpush1.bf16.msra.mxu0 %v1098
        %1163 = vmatprep.subr.bf16.mxu0 0
        %1164 = vmatpush1.bf16.msra.mxu0 %v1099
        %1165 = vmatprep.subr.bf16.mxu0 0
        %1166 = vmatpush1.bf16.msra.mxu0 %v1100
        %1167 = vmatprep.subr.bf16.mxu0 0
        %1168 = vmatpush1.bf16.msra.mxu0 %v1101
        %1169 = vmatprep.subr.bf16.mxu0 0
        %1170 = vmatpush1.bf16.msra.mxu0 0
        %1171 = vmatprep.subr.bf16.mxu0 0
        %1172 = vmatpush1.bf16.msra.mxu0 0
        %1173 = vmatprep.subr.bf16.mxu0 0
        %1174 = vmatpush1.bf16.msra.mxu0 0
        %1175 = vmatprep.subr.bf16.mxu0 0
        %1176 = vmatpush1.bf16.msra.mxu0 0
        %1177 = vmatprep.subr.bf16.mxu0 0
        %1178 = vmatpush1.bf16.msra.mxu0 0
        %1179 = vmatprep.subr.bf16.mxu0 0
        %1180 = vmatpush1.bf16.msra.mxu0 0
        %1181 = vmatprep.subr.bf16.mxu0 0
        %1182 = vmatpush1.bf16.msra.mxu0 0
        %1183 = vmatprep.subr.bf16.mxu0 0
        %1184 = vmatpush1.bf16.msra.mxu0 0
        %1185 = vmatprep.mubr.bf16.mxu0 0
        %1186 = vmatmul.mubr.bf16.gmra.mrb[0].mxu0 %v1151
        %v1187 = vpop.f32.mrb[0].mxu0
        %v1188 = vadd.f32 0.0, %v1187
        %v1189 = vpop.f32.mrb[0].mxu0
        %v1190 = vpop.f32.mrb[0].mxu0
        %v1191 = vpop.f32.mrb[0].mxu0
        %1192 = vdwg.mxu0
        %v1193 = vadd.f32 %v1039, %v1188
        %v1194 = vld [vmem:[%s3 + $0xc0] sm:$0xf]
        %v1195 = vld [vmem:[%s3 + $0xc4] sm:$0xf]
        %v1196 = vld [vmem:[%s3 + $0xc8] sm:$0xf]
        %v1197 = vld [vmem:[%s3 + $0xcc] sm:$0xf]
        %v1198 = vld [vmem:[%s3 + $0xd0] sm:$0xf]
        %v1199 = vld [vmem:[%s3 + $0xd4] sm:$0xf]
        %v1200 = vld [vmem:[%s3 + $0xd8] sm:$0xf]
        %v1201 = vld [vmem:[%s3 + $0xdc] sm:$0xf]
        %v1202 = vld [vmem:[%s3 + $0xe0] sm:$0xf]
        %v1203 = vld [vmem:[%s3 + $0xe4] sm:$0xf]
        %v1204 = vld [vmem:[%s3 + $0xe8] sm:$0xf]
        %v1205 = vld [vmem:[%s3 + $0xec] sm:$0xf]
        %v1206 = vld [vmem:[%s3 + $0xf0] sm:$0xf]
        %v1207 = vld [vmem:[%s3 + $0xf4] sm:$0xf]
        %v1208 = vld [vmem:[%s3 + $0xf8] sm:$0xf]
        %v1209 = vld [vmem:[%s3 + $0xfc] sm:$0xf]
        %v1226 = vunpack.c.l.b16 %v1194
        %v1227 = vunpack.c.l.b16 %v1195
        %v1228 = vunpack.c.l.b16 %v1196
        %v1229 = vunpack.c.l.b16 %v1197
        %v1230 = vunpack.c.l.b16 %v1198
        %v1231 = vunpack.c.l.b16 %v1199
        %v1232 = vunpack.c.l.b16 %v1200
        %v1233 = vunpack.c.l.b16 %v1201
        %v1234 = vunpack.c.l.b16 %v1202
        %v1235 = vunpack.c.l.b16 %v1203
        %v1236 = vunpack.c.l.b16 %v1204
        %v1237 = vunpack.c.l.b16 %v1205
        %v1238 = vunpack.c.l.b16 %v1206
        %v1239 = vunpack.c.l.b16 %v1207
        %v1240 = vunpack.c.l.b16 %v1208
        %v1241 = vunpack.c.l.b16 %v1209
        %v1242 = vpack.c.b16 %v1227, %v1226
        %v1243 = vpack.c.b16 %v1229, %v1228
        %v1244 = vpack.c.b16 %v1231, %v1230
        %v1245 = vpack.c.b16 %v1233, %v1232
        %v1246 = vpack.c.b16 %v1235, %v1234
        %v1247 = vpack.c.b16 %v1237, %v1236
        %v1248 = vpack.c.b16 %v1239, %v1238
        %v1249 = vpack.c.b16 %v1241, %v1240
        %1258 = vmatprep.subr.bf16.mxu0 0
        %1259 = vmatpush1.bf16.msra.mxu0 %v1242
        %1260 = vmatprep.subr.bf16.mxu0 0
        %1261 = vmatpush1.bf16.msra.mxu0 %v1243
        %1262 = vmatprep.subr.bf16.mxu0 0
        %1263 = vmatpush1.bf16.msra.mxu0 %v1244
        %1264 = vmatprep.subr.bf16.mxu0 0
        %1265 = vmatpush1.bf16.msra.mxu0 %v1245
        %1266 = vmatprep.subr.bf16.mxu0 0
        %1267 = vmatpush1.bf16.msra.mxu0 %v1246
        %1268 = vmatprep.subr.bf16.mxu0 0
        %1269 = vmatpush1.bf16.msra.mxu0 %v1247
        %1270 = vmatprep.subr.bf16.mxu0 0
        %1271 = vmatpush1.bf16.msra.mxu0 %v1248
        %1272 = vmatprep.subr.bf16.mxu0 0
        %1273 = vmatpush1.bf16.msra.mxu0 %v1249
        %1274 = vmatprep.subr.bf16.mxu0 0
        %1275 = vmatpush1.bf16.msra.mxu0 0
        %1276 = vmatprep.subr.bf16.mxu0 0
        %1277 = vmatpush1.bf16.msra.mxu0 0
        %1278 = vmatprep.subr.bf16.mxu0 0
        %1279 = vmatpush1.bf16.msra.mxu0 0
        %1280 = vmatprep.subr.bf16.mxu0 0
        %1281 = vmatpush1.bf16.msra.mxu0 0
        %1282 = vmatprep.subr.bf16.mxu0 0
        %1283 = vmatpush1.bf16.msra.mxu0 0
        %1284 = vmatprep.subr.bf16.mxu0 0
        %1285 = vmatpush1.bf16.msra.mxu0 0
        %1286 = vmatprep.subr.bf16.mxu0 0
        %1287 = vmatpush1.bf16.msra.mxu0 0
        %1288 = vmatprep.subr.bf16.mxu0 0
        %1289 = vmatpush1.bf16.msra.mxu0 0
        %1290 = vmatprep.mubr.bf16.mxu0 0
        %1291 = vmatmul.mubr.bf16.gmra.mrb[0].mxu0 %v1002
        %v1292 = vpop.f32.mrb[0].mxu0
        %v1293 = vadd.f32 0.0, %v1292
        %v1294 = vpop.f32.mrb[0].mxu0
        %v1295 = vpop.f32.mrb[0].mxu0
        %v1296 = vpop.f32.mrb[0].mxu0
        %1297 = vdwg.mxu0
        %v1298 = vadd.f32 %v1150, %v1293
        %v1299 = vpack.c.bf16 %v739, %v739
        %1300 = vmatprep.subr.bf16.mxu0 0
        %1301 = vmatpush1.bf16.msra.mxu0 %v1242
        %1302 = vmatprep.subr.bf16.mxu0 0
        %1303 = vmatpush1.bf16.msra.mxu0 %v1243
        %1304 = vmatprep.subr.bf16.mxu0 0
        %1305 = vmatpush1.bf16.msra.mxu0 %v1244
        %1306 = vmatprep.subr.bf16.mxu0 0
        %1307 = vmatpush1.bf16.msra.mxu0 %v1245
        %1308 = vmatprep.subr.bf16.mxu0 0
        %1309 = vmatpush1.bf16.msra.mxu0 %v1246
        %1310 = vmatprep.subr.bf16.mxu0 0
        %1311 = vmatpush1.bf16.msra.mxu0 %v1247
        %1312 = vmatprep.subr.bf16.mxu0 0
        %1313 = vmatpush1.bf16.msra.mxu0 %v1248
        %1314 = vmatprep.subr.bf16.mxu0 0
        %1315 = vmatpush1.bf16.msra.mxu0 %v1249
        %1316 = vmatprep.subr.bf16.mxu0 0
        %1317 = vmatpush1.bf16.msra.mxu0 0
        %1318 = vmatprep.subr.bf16.mxu0 0
        %1319 = vmatpush1.bf16.msra.mxu0 0
        %1320 = vmatprep.subr.bf16.mxu0 0
        %1321 = vmatpush1.bf16.msra.mxu0 0
        %1322 = vmatprep.subr.bf16.mxu0 0
        %1323 = vmatpush1.bf16.msra.mxu0 0
        %1324 = vmatprep.subr.bf16.mxu0 0
        %1325 = vmatpush1.bf16.msra.mxu0 0
        %1326 = vmatprep.subr.bf16.mxu0 0
        %1327 = vmatpush1.bf16.msra.mxu0 0
        %1328 = vmatprep.subr.bf16.mxu0 0
        %1329 = vmatpush1.bf16.msra.mxu0 0
        %1330 = vmatprep.subr.bf16.mxu0 0
        %1331 = vmatpush1.bf16.msra.mxu0 0
        %1332 = vmatprep.mubr.bf16.mxu0 0
        %1333 = vmatmul.mubr.bf16.gmra.mrb[0].mxu0 %v1299
        %v1334 = vpop.f32.mrb[0].mxu0
        %v1335 = vadd.f32 0.0, %v1334
        %v1336 = vpop.f32.mrb[0].mxu0
        %v1337 = vpop.f32.mrb[0].mxu0
        %v1338 = vpop.f32.mrb[0].mxu0
        %1339 = vdwg.mxu0
        %v1340 = vadd.f32 %v1193, %v1335
        %v1341 = vld [vmem:[%s3 + $0x100] sm:$0xf]
        %v1342 = vld [vmem:[%s3 + $0x104] sm:$0xf]
        %v1343 = vld [vmem:[%s3 + $0x108] sm:$0xf]
        %v1344 = vld [vmem:[%s3 + $0x10c] sm:$0xf]
        %v1345 = vld [vmem:[%s3 + $0x110] sm:$0xf]
        %v1346 = vld [vmem:[%s3 + $0x114] sm:$0xf]
        %v1347 = vld [vmem:[%s3 + $0x118] sm:$0xf]
        %v1348 = vld [vmem:[%s3 + $0x11c] sm:$0xf]
        %v1349 = vld [vmem:[%s3 + $0x120] sm:$0xf]
        %v1350 = vld [vmem:[%s3 + $0x124] sm:$0xf]
        %v1351 = vld [vmem:[%s3 + $0x128] sm:$0xf]
        %v1352 = vld [vmem:[%s3 + $0x12c] sm:$0xf]
        %v1353 = vld [vmem:[%s3 + $0x130] sm:$0xf]
        %v1354 = vld [vmem:[%s3 + $0x134] sm:$0xf]
        %v1355 = vld [vmem:[%s3 + $0x138] sm:$0xf]
        %v1356 = vld [vmem:[%s3 + $0x13c] sm:$0xf]
        %v1373 = vunpack.c.l.b16 %v1341
        %v1374 = vunpack.c.l.b16 %v1342
        %v1375 = vunpack.c.l.b16 %v1343
        %v1376 = vunpack.c.l.b16 %v1344
        %v1377 = vunpack.c.l.b16 %v1345
        %v1378 = vunpack.c.l.b16 %v1346
        %v1379 = vunpack.c.l.b16 %v1347
        %v1380 = vunpack.c.l.b16 %v1348
        %v1381 = vunpack.c.l.b16 %v1349
        %v1382 = vunpack.c.l.b16 %v1350
        %v1383 = vunpack.c.l.b16 %v1351
        %v1384 = vunpack.c.l.b16 %v1352
        %v1385 = vunpack.c.l.b16 %v1353
        %v1386 = vunpack.c.l.b16 %v1354
        %v1387 = vunpack.c.l.b16 %v1355
        %v1388 = vunpack.c.l.b16 %v1356
        %v1389 = vpack.c.b16 %v1374, %v1373
        %v1390 = vpack.c.b16 %v1376, %v1375
        %v1391 = vpack.c.b16 %v1378, %v1377
        %v1392 = vpack.c.b16 %v1380, %v1379
        %v1393 = vpack.c.b16 %v1382, %v1381
        %v1394 = vpack.c.b16 %v1384, %v1383
        %v1395 = vpack.c.b16 %v1386, %v1385
        %v1396 = vpack.c.b16 %v1388, %v1387
        %1405 = vmatprep.subr.bf16.mxu0 0
        %1406 = vmatpush1.bf16.msra.mxu0 %v1389
        %1407 = vmatprep.subr.bf16.mxu0 0
        %1408 = vmatpush1.bf16.msra.mxu0 %v1390
        %1409 = vmatprep.subr.bf16.mxu0 0
        %1410 = vmatpush1.bf16.msra.mxu0 %v1391
        %1411 = vmatprep.subr.bf16.mxu0 0
        %1412 = vmatpush1.bf16.msra.mxu0 %v1392
        %1413 = vmatprep.subr.bf16.mxu0 0
        %1414 = vmatpush1.bf16.msra.mxu0 %v1393
        %1415 = vmatprep.subr.bf16.mxu0 0
        %1416 = vmatpush1.bf16.msra.mxu0 %v1394
        %1417 = vmatprep.subr.bf16.mxu0 0
        %1418 = vmatpush1.bf16.msra.mxu0 %v1395
        %1419 = vmatprep.subr.bf16.mxu0 0
        %1420 = vmatpush1.bf16.msra.mxu0 %v1396
        %1421 = vmatprep.subr.bf16.mxu0 0
        %1422 = vmatpush1.bf16.msra.mxu0 0
        %1423 = vmatprep.subr.bf16.mxu0 0
        %1424 = vmatpush1.bf16.msra.mxu0 0
        %1425 = vmatprep.subr.bf16.mxu0 0
        %1426 = vmatpush1.bf16.msra.mxu0 0
        %1427 = vmatprep.subr.bf16.mxu0 0
        %1428 = vmatpush1.bf16.msra.mxu0 0
        %1429 = vmatprep.subr.bf16.mxu0 0
        %1430 = vmatpush1.bf16.msra.mxu0 0
        %1431 = vmatprep.subr.bf16.mxu0 0
        %1432 = vmatpush1.bf16.msra.mxu0 0
        %1433 = vmatprep.subr.bf16.mxu0 0
        %1434 = vmatpush1.bf16.msra.mxu0 0
        %1435 = vmatprep.subr.bf16.mxu0 0
        %1436 = vmatpush1.bf16.msra.mxu0 0
        %1437 = vmatprep.mubr.bf16.mxu0 0
        %1438 = vmatmul.mubr.bf16.gmra.mrb[0].mxu0 %v959
        %v1439 = vpop.f32.mrb[0].mxu0
        %v1440 = vadd.f32 0.0, %v1439
        %v1441 = vpop.f32.mrb[0].mxu0
        %v1442 = vpop.f32.mrb[0].mxu0
        %v1443 = vpop.f32.mrb[0].mxu0
        %1444 = vdwg.mxu0
        %v1445 = vadd.f32 %v1298, %v1440
        %v1447 = vshrl.u32 %v1299, 16
        %v1449 = vshll.u32 %v1299, 16
        %v1451 = vrot.slane %v1449, 1
        %v1452 = vor.u32 %v1447, %v1451
        %1454 = vmatprep.subr.bf16.mxu0 0
        %1455 = vmatpush1.bf16.msra.mxu0 %v1389
        %1456 = vmatprep.subr.bf16.mxu0 0
        %1457 = vmatpush1.bf16.msra.mxu0 %v1390
        %1458 = vmatprep.subr.bf16.mxu0 0
        %1459 = vmatpush1.bf16.msra.mxu0 %v1391
        %1460 = vmatprep.subr.bf16.mxu0 0
        %1461 = vmatpush1.bf16.msra.mxu0 %v1392
        %1462 = vmatprep.subr.bf16.mxu0 0
        %1463 = vmatpush1.bf16.msra.mxu0 %v1393
        %1464 = vmatprep.subr.bf16.mxu0 0
        %1465 = vmatpush1.bf16.msra.mxu0 %v1394
        %1466 = vmatprep.subr.bf16.mxu0 0
        %1467 = vmatpush1.bf16.msra.mxu0 %v1395
        %1468 = vmatprep.subr.bf16.mxu0 0
        %1469 = vmatpush1.bf16.msra.mxu0 %v1396
        %1470 = vmatprep.subr.bf16.mxu0 0
        %1471 = vmatpush1.bf16.msra.mxu0 0
        %1472 = vmatprep.subr.bf16.mxu0 0
        %1473 = vmatpush1.bf16.msra.mxu0 0
        %1474 = vmatprep.subr.bf16.mxu0 0
        %1475 = vmatpush1.bf16.msra.mxu0 0
        %1476 = vmatprep.subr.bf16.mxu0 0
        %1477 = vmatpush1.bf16.msra.mxu0 0
        %1478 = vmatprep.subr.bf16.mxu0 0
        %1479 = vmatpush1.bf16.msra.mxu0 0
        %1480 = vmatprep.subr.bf16.mxu0 0
        %1481 = vmatpush1.bf16.msra.mxu0 0
        %1482 = vmatprep.subr.bf16.mxu0 0
        %1483 = vmatpush1.bf16.msra.mxu0 0
        %1484 = vmatprep.subr.bf16.mxu0 0
        %1485 = vmatpush1.bf16.msra.mxu0 0
        %1486 = vmatprep.mubr.bf16.mxu0 0
        %1487 = vmatmul.mubr.bf16.gmra.mrb[0].mxu0 %v1452
        %v1488 = vpop.f32.mrb[0].mxu0
        %v1489 = vadd.f32 0.0, %v1488
        %v1490 = vpop.f32.mrb[0].mxu0
        %v1491 = vpop.f32.mrb[0].mxu0
        %v1492 = vpop.f32.mrb[0].mxu0
        %1493 = vdwg.mxu0
        %v1494 = vadd.f32 %v1340, %v1489
        %v1495 = vld [vmem:[%s3 + $0x140] sm:$0xf]
        %v1496 = vld [vmem:[%s3 + $0x144] sm:$0xf]
        %v1497 = vld [vmem:[%s3 + $0x148] sm:$0xf]
        %v1498 = vld [vmem:[%s3 + $0x14c] sm:$0xf]
        %v1499 = vld [vmem:[%s3 + $0x150] sm:$0xf]
        %v1500 = vld [vmem:[%s3 + $0x154] sm:$0xf]
        %v1501 = vld [vmem:[%s3 + $0x158] sm:$0xf]
        %v1502 = vld [vmem:[%s3 + $0x15c] sm:$0xf]
        %v1503 = vld [vmem:[%s3 + $0x160] sm:$0xf]
        %v1504 = vld [vmem:[%s3 + $0x164] sm:$0xf]
        %v1505 = vld [vmem:[%s3 + $0x168] sm:$0xf]
        %v1506 = vld [vmem:[%s3 + $0x16c] sm:$0xf]
        %v1507 = vld [vmem:[%s3 + $0x170] sm:$0xf]
        %v1508 = vld [vmem:[%s3 + $0x174] sm:$0xf]
        %v1509 = vld [vmem:[%s3 + $0x178] sm:$0xf]
        %v1510 = vld [vmem:[%s3 + $0x17c] sm:$0xf]
        %v1527 = vunpack.c.l.b16 %v1495
        %v1528 = vunpack.c.l.b16 %v1496
        %v1529 = vunpack.c.l.b16 %v1497
        %v1530 = vunpack.c.l.b16 %v1498
        %v1531 = vunpack.c.l.b16 %v1499
        %v1532 = vunpack.c.l.b16 %v1500
        %v1533 = vunpack.c.l.b16 %v1501
        %v1534 = vunpack.c.l.b16 %v1502
        %v1535 = vunpack.c.l.b16 %v1503
        %v1536 = vunpack.c.l.b16 %v1504
        %v1537 = vunpack.c.l.b16 %v1505
        %v1538 = vunpack.c.l.b16 %v1506
        %v1539 = vunpack.c.l.b16 %v1507
        %v1540 = vunpack.c.l.b16 %v1508
        %v1541 = vunpack.c.l.b16 %v1509
        %v1542 = vunpack.c.l.b16 %v1510
        %v1543 = vpack.c.b16 %v1528, %v1527
        %v1544 = vpack.c.b16 %v1530, %v1529
        %v1545 = vpack.c.b16 %v1532, %v1531
        %v1546 = vpack.c.b16 %v1534, %v1533
        %v1547 = vpack.c.b16 %v1536, %v1535
        %v1548 = vpack.c.b16 %v1538, %v1537
        %v1549 = vpack.c.b16 %v1540, %v1539
        %v1550 = vpack.c.b16 %v1542, %v1541
        %1559 = vmatprep.subr.bf16.mxu0 0
        %1560 = vmatpush1.bf16.msra.mxu0 %v1543
        %1561 = vmatprep.subr.bf16.mxu0 0
        %1562 = vmatpush1.bf16.msra.mxu0 %v1544
        %1563 = vmatprep.subr.bf16.mxu0 0
        %1564 = vmatpush1.bf16.msra.mxu0 %v1545
        %1565 = vmatprep.subr.bf16.mxu0 0
        %1566 = vmatpush1.bf16.msra.mxu0 %v1546
        %1567 = vmatprep.subr.bf16.mxu0 0
        %1568 = vmatpush1.bf16.msra.mxu0 %v1547
        %1569 = vmatprep.subr.bf16.mxu0 0
        %1570 = vmatpush1.bf16.msra.mxu0 %v1548
        %1571 = vmatprep.subr.bf16.mxu0 0
        %1572 = vmatpush1.bf16.msra.mxu0 %v1549
        %1573 = vmatprep.subr.bf16.mxu0 0
        %1574 = vmatpush1.bf16.msra.mxu0 %v1550
        %1575 = vmatprep.subr.bf16.mxu0 0
        %1576 = vmatpush1.bf16.msra.mxu0 0
        %1577 = vmatprep.subr.bf16.mxu0 0
        %1578 = vmatpush1.bf16.msra.mxu0 0
        %1579 = vmatprep.subr.bf16.mxu0 0
        %1580 = vmatpush1.bf16.msra.mxu0 0
        %1581 = vmatprep.subr.bf16.mxu0 0
        %1582 = vmatpush1.bf16.msra.mxu0 0
        %1583 = vmatprep.subr.bf16.mxu0 0
        %1584 = vmatpush1.bf16.msra.mxu0 0
        %1585 = vmatprep.subr.bf16.mxu0 0
        %1586 = vmatpush1.bf16.msra.mxu0 0
        %1587 = vmatprep.subr.bf16.mxu0 0
        %1588 = vmatpush1.bf16.msra.mxu0 0
        %1589 = vmatprep.subr.bf16.mxu0 0
        %1590 = vmatpush1.bf16.msra.mxu0 0
        %1591 = vmatprep.mubr.bf16.mxu0 0
        %1592 = vmatmul.mubr.bf16.gmra.mrb[0].mxu0 %v1151
        %v1593 = vpop.f32.mrb[0].mxu0
        %v1594 = vadd.f32 0.0, %v1593
        %v1595 = vpop.f32.mrb[0].mxu0
        %v1596 = vpop.f32.mrb[0].mxu0
        %v1597 = vpop.f32.mrb[0].mxu0
        %1598 = vdwg.mxu0
        %v1599 = vadd.f32 %v1445, %v1594
        %v1601 = vrot.slane %v1299, 1
        %1603 = vmatprep.subr.bf16.mxu0 0
        %1604 = vmatpush1.bf16.msra.mxu0 %v1543
        %1605 = vmatprep.subr.bf16.mxu0 0
        %1606 = vmatpush1.bf16.msra.mxu0 %v1544
        %1607 = vmatprep.subr.bf16.mxu0 0
        %1608 = vmatpush1.bf16.msra.mxu0 %v1545
        %1609 = vmatprep.subr.bf16.mxu0 0
        %1610 = vmatpush1.bf16.msra.mxu0 %v1546
        %1611 = vmatprep.subr.bf16.mxu0 0
        %1612 = vmatpush1.bf16.msra.mxu0 %v1547
        %1613 = vmatprep.subr.bf16.mxu0 0
        %1614 = vmatpush1.bf16.msra.mxu0 %v1548
        %1615 = vmatprep.subr.bf16.mxu0 0
        %1616 = vmatpush1.bf16.msra.mxu0 %v1549
        %1617 = vmatprep.subr.bf16.mxu0 0
        %1618 = vmatpush1.bf16.msra.mxu0 %v1550
        %1619 = vmatprep.subr.bf16.mxu0 0
        %1620 = vmatpush1.bf16.msra.mxu0 0
        %1621 = vmatprep.subr.bf16.mxu0 0
        %1622 = vmatpush1.bf16.msra.mxu0 0
        %1623 = vmatprep.subr.bf16.mxu0 0
        %1624 = vmatpush1.bf16.msra.mxu0 0
        %1625 = vmatprep.subr.bf16.mxu0 0
        %1626 = vmatpush1.bf16.msra.mxu0 0
        %1627 = vmatprep.subr.bf16.mxu0 0
        %1628 = vmatpush1.bf16.msra.mxu0 0
        %1629 = vmatprep.subr.bf16.mxu0 0
        %1630 = vmatpush1.bf16.msra.mxu0 0
        %1631 = vmatprep.subr.bf16.mxu0 0
        %1632 = vmatpush1.bf16.msra.mxu0 0
        %1633 = vmatprep.subr.bf16.mxu0 0
        %1634 = vmatpush1.bf16.msra.mxu0 0
        %1635 = vmatprep.mubr.bf16.mxu0 0
        %1636 = vmatmul.mubr.bf16.gmra.mrb[0].mxu0 %v1601
        %v1637 = vpop.f32.mrb[0].mxu0
        %v1638 = vadd.f32 0.0, %v1637
        %v1639 = vpop.f32.mrb[0].mxu0
        %v1640 = vpop.f32.mrb[0].mxu0
        %v1641 = vpop.f32.mrb[0].mxu0
        %1642 = vdwg.mxu0
        %v1643 = vadd.f32 %v1494, %v1638
        %v1644 = vld [vmem:[%s3 + $0x180] sm:$0xf]
        %v1645 = vld [vmem:[%s3 + $0x184] sm:$0xf]
        %v1646 = vld [vmem:[%s3 + $0x188] sm:$0xf]
        %v1647 = vld [vmem:[%s3 + $0x18c] sm:$0xf]
        %v1648 = vld [vmem:[%s3 + $0x190] sm:$0xf]
        %v1649 = vld [vmem:[%s3 + $0x194] sm:$0xf]
        %v1650 = vld [vmem:[%s3 + $0x198] sm:$0xf]
        %v1651 = vld [vmem:[%s3 + $0x19c] sm:$0xf]
        %v1652 = vld [vmem:[%s3 + $0x1a0] sm:$0xf]
        %v1653 = vld [vmem:[%s3 + $0x1a4] sm:$0xf]
        %v1654 = vld [vmem:[%s3 + $0x1a8] sm:$0xf]
        %v1655 = vld [vmem:[%s3 + $0x1ac] sm:$0xf]
        %v1656 = vld [vmem:[%s3 + $0x1b0] sm:$0xf]
        %v1657 = vld [vmem:[%s3 + $0x1b4] sm:$0xf]
        %v1658 = vld [vmem:[%s3 + $0x1b8] sm:$0xf]
        %v1659 = vld [vmem:[%s3 + $0x1bc] sm:$0xf]
        %v1676 = vunpack.c.l.b16 %v1644
        %v1677 = vunpack.c.l.b16 %v1645
        %v1678 = vunpack.c.l.b16 %v1646
        %v1679 = vunpack.c.l.b16 %v1647
        %v1680 = vunpack.c.l.b16 %v1648
        %v1681 = vunpack.c.l.b16 %v1649
        %v1682 = vunpack.c.l.b16 %v1650
        %v1683 = vunpack.c.l.b16 %v1651
        %v1684 = vunpack.c.l.b16 %v1652
        %v1685 = vunpack.c.l.b16 %v1653
        %v1686 = vunpack.c.l.b16 %v1654
        %v1687 = vunpack.c.l.b16 %v1655
        %v1688 = vunpack.c.l.b16 %v1656
        %v1689 = vunpack.c.l.b16 %v1657
        %v1690 = vunpack.c.l.b16 %v1658
        %v1691 = vunpack.c.l.b16 %v1659
        %v1692 = vpack.c.b16 %v1677, %v1676
        %v1693 = vpack.c.b16 %v1679, %v1678
        %v1694 = vpack.c.b16 %v1681, %v1680
        %v1695 = vpack.c.b16 %v1683, %v1682
        %v1696 = vpack.c.b16 %v1685, %v1684
        %v1697 = vpack.c.b16 %v1687, %v1686
        %v1698 = vpack.c.b16 %v1689, %v1688
        %v1699 = vpack.c.b16 %v1691, %v1690
        %1708 = vmatprep.subr.bf16.mxu0 0
        %1709 = vmatpush1.bf16.msra.mxu0 %v1692
        %1710 = vmatprep.subr.bf16.mxu0 0
        %1711 = vmatpush1.bf16.msra.mxu0 %v1693
        %1712 = vmatprep.subr.bf16.mxu0 0
        %1713 = vmatpush1.bf16.msra.mxu0 %v1694
        %1714 = vmatprep.subr.bf16.mxu0 0
        %1715 = vmatpush1.bf16.msra.mxu0 %v1695
        %1716 = vmatprep.subr.bf16.mxu0 0
        %1717 = vmatpush1.bf16.msra.mxu0 %v1696
        %1718 = vmatprep.subr.bf16.mxu0 0
        %1719 = vmatpush1.bf16.msra.mxu0 %v1697
        %1720 = vmatprep.subr.bf16.mxu0 0
        %1721 = vmatpush1.bf16.msra.mxu0 %v1698
        %1722 = vmatprep.subr.bf16.mxu0 0
        %1723 = vmatpush1.bf16.msra.mxu0 %v1699
        %1724 = vmatprep.subr.bf16.mxu0 0
        %1725 = vmatpush1.bf16.msra.mxu0 0
        %1726 = vmatprep.subr.bf16.mxu0 0
        %1727 = vmatpush1.bf16.msra.mxu0 0
        %1728 = vmatprep.subr.bf16.mxu0 0
        %1729 = vmatpush1.bf16.msra.mxu0 0
        %1730 = vmatprep.subr.bf16.mxu0 0
        %1731 = vmatpush1.bf16.msra.mxu0 0
        %1732 = vmatprep.subr.bf16.mxu0 0
        %1733 = vmatpush1.bf16.msra.mxu0 0
        %1734 = vmatprep.subr.bf16.mxu0 0
        %1735 = vmatpush1.bf16.msra.mxu0 0
        %1736 = vmatprep.subr.bf16.mxu0 0
        %1737 = vmatpush1.bf16.msra.mxu0 0
        %1738 = vmatprep.subr.bf16.mxu0 0
        %1739 = vmatpush1.bf16.msra.mxu0 0
        %1740 = vmatprep.mubr.bf16.mxu0 0
        %1741 = vmatmul.mubr.bf16.gmra.mrb[0].mxu0 %v1299
        %v1742 = vpop.f32.mrb[0].mxu0
        %v1743 = vadd.f32 0.0, %v1742
        %v1744 = vpop.f32.mrb[0].mxu0
        %v1745 = vpop.f32.mrb[0].mxu0
        %v1746 = vpop.f32.mrb[0].mxu0
        %1747 = vdwg.mxu0
        %v1748 = vadd.f32 %v1599, %v1743
        %v1749 = vrot.slane %v1299, 2
        %1751 = vmatprep.subr.bf16.mxu0 0
        %1752 = vmatpush1.bf16.msra.mxu0 %v1692
        %1753 = vmatprep.subr.bf16.mxu0 0
        %1754 = vmatpush1.bf16.msra.mxu0 %v1693
        %1755 = vmatprep.subr.bf16.mxu0 0
        %1756 = vmatpush1.bf16.msra.mxu0 %v1694
        %1757 = vmatprep.subr.bf16.mxu0 0
        %1758 = vmatpush1.bf16.msra.mxu0 %v1695
        %1759 = vmatprep.subr.bf16.mxu0 0
        %1760 = vmatpush1.bf16.msra.mxu0 %v1696
        %1761 = vmatprep.subr.bf16.mxu0 0
        %1762 = vmatpush1.bf16.msra.mxu0 %v1697
        %1763 = vmatprep.subr.bf16.mxu0 0
        %1764 = vmatpush1.bf16.msra.mxu0 %v1698
        %1765 = vmatprep.subr.bf16.mxu0 0
        %1766 = vmatpush1.bf16.msra.mxu0 %v1699
        %1767 = vmatprep.subr.bf16.mxu0 0
        %1768 = vmatpush1.bf16.msra.mxu0 0
        %1769 = vmatprep.subr.bf16.mxu0 0
        %1770 = vmatpush1.bf16.msra.mxu0 0
        %1771 = vmatprep.subr.bf16.mxu0 0
        %1772 = vmatpush1.bf16.msra.mxu0 0
        %1773 = vmatprep.subr.bf16.mxu0 0
        %1774 = vmatpush1.bf16.msra.mxu0 0
        %1775 = vmatprep.subr.bf16.mxu0 0
        %1776 = vmatpush1.bf16.msra.mxu0 0
        %1777 = vmatprep.subr.bf16.mxu0 0
        %1778 = vmatpush1.bf16.msra.mxu0 0
        %1779 = vmatprep.subr.bf16.mxu0 0
        %1780 = vmatpush1.bf16.msra.mxu0 0
        %1781 = vmatprep.subr.bf16.mxu0 0
        %1782 = vmatpush1.bf16.msra.mxu0 0
        %1783 = vmatprep.mubr.bf16.mxu0 0
        %1784 = vmatmul.mubr.bf16.gmra.mrb[0].mxu0 %v1749
        %v1785 = vpop.f32.mrb[0].mxu0
        %v1786 = vadd.f32 0.0, %v1785
        %v1787 = vpop.f32.mrb[0].mxu0
        %v1788 = vpop.f32.mrb[0].mxu0
        %v1789 = vpop.f32.mrb[0].mxu0
        %1790 = vdwg.mxu0
        %v1791 = vadd.f32 %v1643, %v1786
        %v1792 = vld [vmem:[%s3 + $0x1c0] sm:$0xf]
        %v1793 = vld [vmem:[%s3 + $0x1c4] sm:$0xf]
        %v1794 = vld [vmem:[%s3 + $0x1c8] sm:$0xf]
        %v1795 = vld [vmem:[%s3 + $0x1cc] sm:$0xf]
        %v1796 = vld [vmem:[%s3 + $0x1d0] sm:$0xf]
        %v1797 = vld [vmem:[%s3 + $0x1d4] sm:$0xf]
        %v1798 = vld [vmem:[%s3 + $0x1d8] sm:$0xf]
        %v1799 = vld [vmem:[%s3 + $0x1dc] sm:$0xf]
        %v1800 = vld [vmem:[%s3 + $0x1e0] sm:$0xf]
        %v1801 = vld [vmem:[%s3 + $0x1e4] sm:$0xf]
        %v1802 = vld [vmem:[%s3 + $0x1e8] sm:$0xf]
        %v1803 = vld [vmem:[%s3 + $0x1ec] sm:$0xf]
        %v1804 = vld [vmem:[%s3 + $0x1f0] sm:$0xf]
        %v1805 = vld [vmem:[%s3 + $0x1f4] sm:$0xf]
        %v1806 = vld [vmem:[%s3 + $0x1f8] sm:$0xf]
        %v1807 = vld [vmem:[%s3 + $0x1fc] sm:$0xf]
        %v1824 = vunpack.c.l.b16 %v1792
        %v1825 = vunpack.c.l.b16 %v1793
        %v1826 = vunpack.c.l.b16 %v1794
        %v1827 = vunpack.c.l.b16 %v1795
        %v1828 = vunpack.c.l.b16 %v1796
        %v1829 = vunpack.c.l.b16 %v1797
        %v1830 = vunpack.c.l.b16 %v1798
        %v1831 = vunpack.c.l.b16 %v1799
        %v1832 = vunpack.c.l.b16 %v1800
        %v1833 = vunpack.c.l.b16 %v1801
        %v1834 = vunpack.c.l.b16 %v1802
        %v1835 = vunpack.c.l.b16 %v1803
        %v1836 = vunpack.c.l.b16 %v1804
        %v1837 = vunpack.c.l.b16 %v1805
        %v1838 = vunpack.c.l.b16 %v1806
        %v1839 = vunpack.c.l.b16 %v1807
        %v1840 = vpack.c.b16 %v1825, %v1824
        %v1841 = vpack.c.b16 %v1827, %v1826
        %v1842 = vpack.c.b16 %v1829, %v1828
        %v1843 = vpack.c.b16 %v1831, %v1830
        %v1844 = vpack.c.b16 %v1833, %v1832
        %v1845 = vpack.c.b16 %v1835, %v1834
        %v1846 = vpack.c.b16 %v1837, %v1836
        %v1847 = vpack.c.b16 %v1839, %v1838
        %1856 = vmatprep.subr.bf16.mxu0 0
        %1857 = vmatpush1.bf16.msra.mxu0 %v1840
        %1858 = vmatprep.subr.bf16.mxu0 0
        %1859 = vmatpush1.bf16.msra.mxu0 %v1841
        %1860 = vmatprep.subr.bf16.mxu0 0
        %1861 = vmatpush1.bf16.msra.mxu0 %v1842
        %1862 = vmatprep.subr.bf16.mxu0 0
        %1863 = vmatpush1.bf16.msra.mxu0 %v1843
        %1864 = vmatprep.subr.bf16.mxu0 0
        %1865 = vmatpush1.bf16.msra.mxu0 %v1844
        %1866 = vmatprep.subr.bf16.mxu0 0
        %1867 = vmatpush1.bf16.msra.mxu0 %v1845
        %1868 = vmatprep.subr.bf16.mxu0 0
        %1869 = vmatpush1.bf16.msra.mxu0 %v1846
        %1870 = vmatprep.subr.bf16.mxu0 0
        %1871 = vmatpush1.bf16.msra.mxu0 %v1847
        %1872 = vmatprep.subr.bf16.mxu0 0
        %1873 = vmatpush1.bf16.msra.mxu0 0
        %1874 = vmatprep.subr.bf16.mxu0 0
        %1875 = vmatpush1.bf16.msra.mxu0 0
        %1876 = vmatprep.subr.bf16.mxu0 0
        %1877 = vmatpush1.bf16.msra.mxu0 0
        %1878 = vmatprep.subr.bf16.mxu0 0
        %1879 = vmatpush1.bf16.msra.mxu0 0
        %1880 = vmatprep.subr.bf16.mxu0 0
        %1881 = vmatpush1.bf16.msra.mxu0 0
        %1882 = vmatprep.subr.bf16.mxu0 0
        %1883 = vmatpush1.bf16.msra.mxu0 0
        %1884 = vmatprep.subr.bf16.mxu0 0
        %1885 = vmatpush1.bf16.msra.mxu0 0
        %1886 = vmatprep.subr.bf16.mxu0 0
        %1887 = vmatpush1.bf16.msra.mxu0 0
        %1888 = vmatprep.mubr.bf16.mxu0 0
        %1889 = vmatmul.mubr.bf16.gmra.mrb[0].mxu0 %v1452
        %v1890 = vpop.f32.mrb[0].mxu0
        %v1891 = vadd.f32 0.0, %v1890
        %v1892 = vpop.f32.mrb[0].mxu0
        %v1893 = vpop.f32.mrb[0].mxu0
        %v1894 = vpop.f32.mrb[0].mxu0
        %1895 = vdwg.mxu0
        %v1896 = vadd.f32 %v1748, %v1891
        %v1897 = vrot.slane %v1447, 2
        %v1898 = vrot.slane %v1449, 3
        %v1899 = vor.u32 %v1897, %v1898
        %1901 = vmatprep.subr.bf16.mxu0 0
        %1902 = vmatpush1.bf16.msra.mxu0 %v1840
        %1903 = vmatprep.subr.bf16.mxu0 0
        %1904 = vmatpush1.bf16.msra.mxu0 %v1841
        %1905 = vmatprep.subr.bf16.mxu0 0
        %1906 = vmatpush1.bf16.msra.mxu0 %v1842
        %1907 = vmatprep.subr.bf16.mxu0 0
        %1908 = vmatpush1.bf16.msra.mxu0 %v1843
        %1909 = vmatprep.subr.bf16.mxu0 0
        %1910 = vmatpush1.bf16.msra.mxu0 %v1844
        %1911 = vmatprep.subr.bf16.mxu0 0
        %1912 = vmatpush1.bf16.msra.mxu0 %v1845
        %1913 = vmatprep.subr.bf16.mxu0 0
        %1914 = vmatpush1.bf16.msra.mxu0 %v1846
        %1915 = vmatprep.subr.bf16.mxu0 0
        %1916 = vmatpush1.bf16.msra.mxu0 %v1847
        %1917 = vmatprep.subr.bf16.mxu0 0
        %1918 = vmatpush1.bf16.msra.mxu0 0
        %1919 = vmatprep.subr.bf16.mxu0 0
        %1920 = vmatpush1.bf16.msra.mxu0 0
        %1921 = vmatprep.subr.bf16.mxu0 0
        %1922 = vmatpush1.bf16.msra.mxu0 0
        %1923 = vmatprep.subr.bf16.mxu0 0
        %1924 = vmatpush1.bf16.msra.mxu0 0
        %1925 = vmatprep.subr.bf16.mxu0 0
        %1926 = vmatpush1.bf16.msra.mxu0 0
        %1927 = vmatprep.subr.bf16.mxu0 0
        %1928 = vmatpush1.bf16.msra.mxu0 0
        %1929 = vmatprep.subr.bf16.mxu0 0
        %1930 = vmatpush1.bf16.msra.mxu0 0
        %1931 = vmatprep.subr.bf16.mxu0 0
        %1932 = vmatpush1.bf16.msra.mxu0 0
        %1933 = vmatprep.mubr.bf16.mxu0 0
        %1934 = vmatmul.mubr.bf16.gmra.mrb[0].mxu0 %v1899
        %v1935 = vpop.f32.mrb[0].mxu0
        %v1936 = vadd.f32 0.0, %v1935
        %v1937 = vpop.f32.mrb[0].mxu0
        %v1938 = vpop.f32.mrb[0].mxu0
        %v1939 = vpop.f32.mrb[0].mxu0
        %1940 = vdwg.mxu0
        %v1941 = vadd.f32 %v1791, %v1936
        %v1942 = vld [vmem:[%s3 + $0x200] sm:$0xf]
        %v1943 = vld [vmem:[%s3 + $0x204] sm:$0xf]
        %v1944 = vld [vmem:[%s3 + $0x208] sm:$0xf]
        %v1945 = vld [vmem:[%s3 + $0x20c] sm:$0xf]
        %v1946 = vld [vmem:[%s3 + $0x210] sm:$0xf]
        %v1947 = vld [vmem:[%s3 + $0x214] sm:$0xf]
        %v1948 = vld [vmem:[%s3 + $0x218] sm:$0xf]
        %v1949 = vld [vmem:[%s3 + $0x21c] sm:$0xf]
        %v1950 = vld [vmem:[%s3 + $0x220] sm:$0xf]
        %v1951 = vld [vmem:[%s3 + $0x224] sm:$0xf]
        %v1952 = vld [vmem:[%s3 + $0x228] sm:$0xf]
        %v1953 = vld [vmem:[%s3 + $0x22c] sm:$0xf]
        %v1954 = vld [vmem:[%s3 + $0x230] sm:$0xf]
        %v1955 = vld [vmem:[%s3 + $0x234] sm:$0xf]
        %v1956 = vld [vmem:[%s3 + $0x238] sm:$0xf]
        %v1957 = vld [vmem:[%s3 + $0x23c] sm:$0xf]
        %v1974 = vunpack.c.l.b16 %v1942
        %v1975 = vunpack.c.l.b16 %v1943
        %v1976 = vunpack.c.l.b16 %v1944
        %v1977 = vunpack.c.l.b16 %v1945
        %v1978 = vunpack.c.l.b16 %v1946
        %v1979 = vunpack.c.l.b16 %v1947
        %v1980 = vunpack.c.l.b16 %v1948
        %v1981 = vunpack.c.l.b16 %v1949
        %v1982 = vunpack.c.l.b16 %v1950
        %v1983 = vunpack.c.l.b16 %v1951
        %v1984 = vunpack.c.l.b16 %v1952
        %v1985 = vunpack.c.l.b16 %v1953
        %v1986 = vunpack.c.l.b16 %v1954
        %v1987 = vunpack.c.l.b16 %v1955
        %v1988 = vunpack.c.l.b16 %v1956
        %v1989 = vunpack.c.l.b16 %v1957
        %v1990 = vpack.c.b16 %v1975, %v1974
        %v1991 = vpack.c.b16 %v1977, %v1976
        %v1992 = vpack.c.b16 %v1979, %v1978
        %v1993 = vpack.c.b16 %v1981, %v1980
        %v1994 = vpack.c.b16 %v1983, %v1982
        %v1995 = vpack.c.b16 %v1985, %v1984
        %v1996 = vpack.c.b16 %v1987, %v1986
        %v1997 = vpack.c.b16 %v1989, %v1988
        %2006 = vmatprep.subr.bf16.mxu0 0
        %2007 = vmatpush1.bf16.msra.mxu0 %v1990
        %2008 = vmatprep.subr.bf16.mxu0 0
        %2009 = vmatpush1.bf16.msra.mxu0 %v1991
        %2010 = vmatprep.subr.bf16.mxu0 0
        %2011 = vmatpush1.bf16.msra.mxu0 %v1992
        %2012 = vmatprep.subr.bf16.mxu0 0
        %2013 = vmatpush1.bf16.msra.mxu0 %v1993
        %2014 = vmatprep.subr.bf16.mxu0 0
        %2015 = vmatpush1.bf16.msra.mxu0 %v1994
        %2016 = vmatprep.subr.bf16.mxu0 0
        %2017 = vmatpush1.bf16.msra.mxu0 %v1995
        %2018 = vmatprep.subr.bf16.mxu0 0
        %2019 = vmatpush1.bf16.msra.mxu0 %v1996
        %2020 = vmatprep.subr.bf16.mxu0 0
        %2021 = vmatpush1.bf16.msra.mxu0 %v1997
        %2022 = vmatprep.subr.bf16.mxu0 0
        %2023 = vmatpush1.bf16.msra.mxu0 0
        %2024 = vmatprep.subr.bf16.mxu0 0
        %2025 = vmatpush1.bf16.msra.mxu0 0
        %2026 = vmatprep.subr.bf16.mxu0 0
        %2027 = vmatpush1.bf16.msra.mxu0 0
        %2028 = vmatprep.subr.bf16.mxu0 0
        %2029 = vmatpush1.bf16.msra.mxu0 0
        %2030 = vmatprep.subr.bf16.mxu0 0
        %2031 = vmatpush1.bf16.msra.mxu0 0
        %2032 = vmatprep.subr.bf16.mxu0 0
        %2033 = vmatpush1.bf16.msra.mxu0 0
        %2034 = vmatprep.subr.bf16.mxu0 0
        %2035 = vmatpush1.bf16.msra.mxu0 0
        %2036 = vmatprep.subr.bf16.mxu0 0
        %2037 = vmatpush1.bf16.msra.mxu0 0
        %2038 = vmatprep.mubr.bf16.mxu0 0
        %2039 = vmatmul.mubr.bf16.gmra.mrb[0].mxu0 %v1601
        %v2040 = vpop.f32.mrb[0].mxu0
        %v2041 = vadd.f32 0.0, %v2040
        %v2042 = vpop.f32.mrb[0].mxu0
        %v2043 = vpop.f32.mrb[0].mxu0
        %v2044 = vpop.f32.mrb[0].mxu0
        %2045 = vdwg.mxu0
        %v2046 = vadd.f32 %v1896, %v2041
        %v2047 = vrot.slane %v1299, 3
        %2049 = vmatprep.subr.bf16.mxu0 0
        %2050 = vmatpush1.bf16.msra.mxu0 %v1990
        %2051 = vmatprep.subr.bf16.mxu0 0
        %2052 = vmatpush1.bf16.msra.mxu0 %v1991
        %2053 = vmatprep.subr.bf16.mxu0 0
        %2054 = vmatpush1.bf16.msra.mxu0 %v1992
        %2055 = vmatprep.subr.bf16.mxu0 0
        %2056 = vmatpush1.bf16.msra.mxu0 %v1993
        %2057 = vmatprep.subr.bf16.mxu0 0
        %2058 = vmatpush1.bf16.msra.mxu0 %v1994
        %2059 = vmatprep.subr.bf16.mxu0 0
        %2060 = vmatpush1.bf16.msra.mxu0 %v1995
        %2061 = vmatprep.subr.bf16.mxu0 0
        %2062 = vmatpush1.bf16.msra.mxu0 %v1996
        %2063 = vmatprep.subr.bf16.mxu0 0
        %2064 = vmatpush1.bf16.msra.mxu0 %v1997
        %2065 = vmatprep.subr.bf16.mxu0 0
        %2066 = vmatpush1.bf16.msra.mxu0 0
        %2067 = vmatprep.subr.bf16.mxu0 0
        %2068 = vmatpush1.bf16.msra.mxu0 0
        %2069 = vmatprep.subr.bf16.mxu0 0
        %2070 = vmatpush1.bf16.msra.mxu0 0
        %2071 = vmatprep.subr.bf16.mxu0 0
        %2072 = vmatpush1.bf16.msra.mxu0 0
        %2073 = vmatprep.subr.bf16.mxu0 0
        %2074 = vmatpush1.bf16.msra.mxu0 0
        %2075 = vmatprep.subr.bf16.mxu0 0
        %2076 = vmatpush1.bf16.msra.mxu0 0
        %2077 = vmatprep.subr.bf16.mxu0 0
        %2078 = vmatpush1.bf16.msra.mxu0 0
        %2079 = vmatprep.subr.bf16.mxu0 0
        %2080 = vmatpush1.bf16.msra.mxu0 0
        %2081 = vmatprep.mubr.bf16.mxu0 0
        %2082 = vmatmul.mubr.bf16.gmra.mrb[0].mxu0 %v2047
        %v2083 = vpop.f32.mrb[0].mxu0
        %v2084 = vadd.f32 0.0, %v2083
        %v2085 = vpop.f32.mrb[0].mxu0
        %v2086 = vpop.f32.mrb[0].mxu0
        %v2087 = vpop.f32.mrb[0].mxu0
        %2088 = vdwg.mxu0
        %v2089 = vadd.f32 %v1941, %v2084
        %v2091 = vrot.slane %v2089, 6
        %vm2093 = vcmask 1041408
        %v2094 = vsel %vm2093, %v2046, %v2091
        %v2095 = vld [vmem:[%s4] sm:$0x1]
        %v2097 = vlaneseq
        %v2098 = vshrl.u32 %v2097, 7
        %v2099 = vsub.s32 0, %v2098
        %v2100 = vrot.slane %v2095, %v2099
        %v2102 = vadd.f32 %v2094, %v2100
        %v2103 = vmax.f32 %v2102, 0.0
        %2104 = vst [vmem:[%s367] sm:$0xf] %v2103
        %v2105 = vpack.c.bf16 %v2103, %v2103
        %v2106 = vld [vmem:[%s5] sm:$0xff]
        %v2107 = vld [vmem:[%s5 + $0x8] sm:$0xff]
        %v2108 = vld [vmem:[%s5 + $0x10] sm:$0xff]
        %v2109 = vld [vmem:[%s5 + $0x18] sm:$0xff]
        %v2110 = vld [vmem:[%s5 + $0x20] sm:$0xff]
        %v2111 = vld [vmem:[%s5 + $0x28] sm:$0xff]
        %v2112 = vld [vmem:[%s5 + $0x30] sm:$0xff]
        %v2113 = vld [vmem:[%s5 + $0x38] sm:$0xff]
        %v2114 = vld [vmem:[%s5 + $0x40] sm:$0xff]
        %v2115 = vld [vmem:[%s5 + $0x48] sm:$0xff]
        %v2116 = vld [vmem:[%s5 + $0x50] sm:$0xff]
        %v2117 = vld [vmem:[%s5 + $0x58] sm:$0xff]
        %v2118 = vld [vmem:[%s5 + $0x60] sm:$0xff]
        %v2119 = vld [vmem:[%s5 + $0x68] sm:$0xff]
        %v2120 = vld [vmem:[%s5 + $0x70] sm:$0xff]
        %v2121 = vld [vmem:[%s5 + $0x78] sm:$0xff]
        %v2122 = vld [vmem:[%s5 + $0x80] sm:$0xff]
        %v2123 = vld [vmem:[%s5 + $0x88] sm:$0xff]
        %v2124 = vld [vmem:[%s5 + $0x90] sm:$0xff]
        %v2125 = vld [vmem:[%s5 + $0x98] sm:$0xff]
        %v2126 = vld [vmem:[%s5 + $0xa0] sm:$0xff]
        %v2127 = vld [vmem:[%s5 + $0xa8] sm:$0xff]
        %v2128 = vld [vmem:[%s5 + $0xb0] sm:$0xff]
        %v2129 = vld [vmem:[%s5 + $0xb8] sm:$0xff]
        %v2130 = vld [vmem:[%s5 + $0xc0] sm:$0xff]
        %v2131 = vld [vmem:[%s5 + $0xc8] sm:$0xff]
        %v2132 = vld [vmem:[%s5 + $0xd0] sm:$0xff]
        %v2133 = vld [vmem:[%s5 + $0xd8] sm:$0xff]
        %v2134 = vld [vmem:[%s5 + $0xe0] sm:$0xff]
        %v2135 = vld [vmem:[%s5 + $0xe8] sm:$0xff]
        %v2136 = vld [vmem:[%s5 + $0xf0] sm:$0xff]
        %v2137 = vld [vmem:[%s5 + $0xf8] sm:$0xff]
        %v2138 = vld [vmem:[%s5 + $0x100] sm:$0xff]
        %v2139 = vld [vmem:[%s5 + $0x108] sm:$0xff]
        %v2140 = vld [vmem:[%s5 + $0x110] sm:$0xff]
        %v2141 = vld [vmem:[%s5 + $0x118] sm:$0xff]
        %v2142 = vld [vmem:[%s5 + $0x120] sm:$0xff]
        %v2143 = vld [vmem:[%s5 + $0x128] sm:$0xff]
        %v2144 = vld [vmem:[%s5 + $0x130] sm:$0xff]
        %v2145 = vld [vmem:[%s5 + $0x138] sm:$0xff]
        %v2146 = vld [vmem:[%s5 + $0x140] sm:$0xff]
        %v2147 = vld [vmem:[%s5 + $0x148] sm:$0xff]
        %v2148 = vld [vmem:[%s5 + $0x150] sm:$0xff]
        %v2149 = vld [vmem:[%s5 + $0x158] sm:$0xff]
        %v2150 = vld [vmem:[%s5 + $0x160] sm:$0xff]
        %v2151 = vld [vmem:[%s5 + $0x168] sm:$0xff]
        %v2152 = vld [vmem:[%s5 + $0x170] sm:$0xff]
        %v2153 = vld [vmem:[%s5 + $0x178] sm:$0xff]
        %v2154 = vld [vmem:[%s5 + $0x180] sm:$0xff]
        %v2155 = vld [vmem:[%s5 + $0x188] sm:$0xff]
        %v2156 = vld [vmem:[%s5 + $0x190] sm:$0xff]
        %v2157 = vld [vmem:[%s5 + $0x198] sm:$0xff]
        %v2158 = vld [vmem:[%s5 + $0x1a0] sm:$0xff]
        %v2159 = vld [vmem:[%s5 + $0x1a8] sm:$0xff]
        %v2160 = vld [vmem:[%s5 + $0x1b0] sm:$0xff]
        %v2161 = vld [vmem:[%s5 + $0x1b8] sm:$0xff]
        %v2162 = vld [vmem:[%s5 + $0x1c0] sm:$0xff]
        %v2163 = vld [vmem:[%s5 + $0x1c8] sm:$0xff]
        %v2164 = vld [vmem:[%s5 + $0x1d0] sm:$0xff]
        %v2165 = vld [vmem:[%s5 + $0x1d8] sm:$0xff]
        %v2166 = vld [vmem:[%s5 + $0x1e0] sm:$0xff]
        %v2167 = vld [vmem:[%s5 + $0x1e8] sm:$0xff]
        %v2168 = vld [vmem:[%s5 + $0x1f0] sm:$0xff]
        %v2169 = vld [vmem:[%s5 + $0x1f8] sm:$0xff]
        %v2171 = vshrl.u32 %v2105, 16
        %v2206 = vunpack.c.l.b16 %v2138
        %v2207 = vunpack.c.h.b16 %v2138
        %v2208 = vunpack.c.l.b16 %v2139
        %v2209 = vunpack.c.h.b16 %v2139
        %v2210 = vunpack.c.l.b16 %v2140
        %v2211 = vunpack.c.h.b16 %v2140
        %v2212 = vunpack.c.l.b16 %v2141
        %v2213 = vunpack.c.h.b16 %v2141
        %v2214 = vunpack.c.l.b16 %v2142
        %v2215 = vunpack.c.h.b16 %v2142
        %v2216 = vunpack.c.l.b16 %v2143
        %v2217 = vunpack.c.h.b16 %v2143
        %v2218 = vunpack.c.l.b16 %v2144
        %v2219 = vunpack.c.h.b16 %v2144
        %v2220 = vunpack.c.l.b16 %v2145
        %v2221 = vunpack.c.h.b16 %v2145
        %v2222 = vunpack.c.l.b16 %v2146
        %v2223 = vunpack.c.h.b16 %v2146
        %v2224 = vunpack.c.l.b16 %v2147
        %v2225 = vunpack.c.h.b16 %v2147
        %v2226 = vunpack.c.l.b16 %v2148
        %v2227 = vunpack.c.h.b16 %v2148
        %v2228 = vunpack.c.l.b16 %v2149
        %v2229 = vunpack.c.h.b16 %v2149
        %v2230 = vunpack.c.l.b16 %v2150
        %v2231 = vunpack.c.h.b16 %v2150
        %v2232 = vunpack.c.l.b16 %v2151
        %v2233 = vunpack.c.h.b16 %v2151
        %v2234 = vunpack.c.l.b16 %v2152
        %v2235 = vunpack.c.h.b16 %v2152
        %v2236 = vunpack.c.l.b16 %v2153
        %v2237 = vunpack.c.h.b16 %v2153
        %v2238 = vunpack.c.l.b16 %v2154
        %v2239 = vunpack.c.h.b16 %v2154
        %v2240 = vunpack.c.l.b16 %v2155
        %v2241 = vunpack.c.h.b16 %v2155
        %v2242 = vunpack.c.l.b16 %v2156
        %v2243 = vunpack.c.h.b16 %v2156
        %v2244 = vunpack.c.l.b16 %v2157
        %v2245 = vunpack.c.h.b16 %v2157
        %v2246 = vunpack.c.l.b16 %v2158
        %v2247 = vunpack.c.h.b16 %v2158
        %v2248 = vunpack.c.l.b16 %v2159
        %v2249 = vunpack.c.h.b16 %v2159
        %v2250 = vunpack.c.l.b16 %v2160
        %v2251 = vunpack.c.h.b16 %v2160
        %v2252 = vunpack.c.l.b16 %v2161
        %v2253 = vunpack.c.h.b16 %v2161
        %v2254 = vunpack.c.l.b16 %v2162
        %v2255 = vunpack.c.h.b16 %v2162
        %v2256 = vunpack.c.l.b16 %v2163
        %v2257 = vunpack.c.h.b16 %v2163
        %v2258 = vunpack.c.l.b16 %v2164
        %v2259 = vunpack.c.h.b16 %v2164
        %v2260 = vunpack.c.l.b16 %v2165
        %v2261 = vunpack.c.h.b16 %v2165
        %v2262 = vunpack.c.l.b16 %v2166
        %v2263 = vunpack.c.h.b16 %v2166
        %v2264 = vunpack.c.l.b16 %v2167
        %v2265 = vunpack.c.h.b16 %v2167
        %v2266 = vunpack.c.l.b16 %v2168
        %v2267 = vunpack.c.h.b16 %v2168
        %v2268 = vunpack.c.l.b16 %v2169
        %v2269 = vunpack.c.h.b16 %v2169
        %v2270 = vpack.c.b16 %v2210, %v2206
        %v2271 = vpack.c.b16 %v2211, %v2207
        %v2272 = vpack.c.b16 %v2212, %v2208
        %v2273 = vpack.c.b16 %v2213, %v2209
        %v2274 = vpack.c.b16 %v2218, %v2214
        %v2275 = vpack.c.b16 %v2219, %v2215
        %v2276 = vpack.c.b16 %v2220, %v2216
        %v2277 = vpack.c.b16 %v2221, %v2217
        %v2278 = vpack.c.b16 %v2226, %v2222
        %v2279 = vpack.c.b16 %v2227, %v2223
        %v2280 = vpack.c.b16 %v2228, %v2224
        %v2281 = vpack.c.b16 %v2229, %v2225
        %v2282 = vpack.c.b16 %v2234, %v2230
        %v2283 = vpack.c.b16 %v2235, %v2231
        %v2284 = vpack.c.b16 %v2236, %v2232
        %v2285 = vpack.c.b16 %v2237, %v2233
        %v2286 = vpack.c.b16 %v2242, %v2238
        %v2287 = vpack.c.b16 %v2243, %v2239
        %v2288 = vpack.c.b16 %v2244, %v2240
        %v2289 = vpack.c.b16 %v2245, %v2241
        %v2290 = vpack.c.b16 %v2250, %v2246
        %v2291 = vpack.c.b16 %v2251, %v2247
        %v2292 = vpack.c.b16 %v2252, %v2248
        %v2293 = vpack.c.b16 %v2253, %v2249
        %v2294 = vpack.c.b16 %v2258, %v2254
        %v2295 = vpack.c.b16 %v2259, %v2255
        %v2296 = vpack.c.b16 %v2260, %v2256
        %v2297 = vpack.c.b16 %v2261, %v2257
        %v2298 = vpack.c.b16 %v2266, %v2262
        %v2299 = vpack.c.b16 %v2267, %v2263
        %v2300 = vpack.c.b16 %v2268, %v2264
        %v2301 = vpack.c.b16 %v2269, %v2265
        %2334 = vmatprep.subr.bf16.mxu0 %v2271
        %2335 = vmatpush1.bf16.msra.mxu0 %v2270
        %2336 = vmatprep.subr.bf16.mxu0 %v2275
        %2337 = vmatpush1.bf16.msra.mxu0 %v2274
        %2338 = vmatprep.subr.bf16.mxu0 %v2279
        %2339 = vmatpush1.bf16.msra.mxu0 %v2278
        %2340 = vmatprep.subr.bf16.mxu0 %v2283
        %2341 = vmatpush1.bf16.msra.mxu0 %v2282
        %2342 = vmatprep.subr.bf16.mxu0 %v2287
        %2343 = vmatpush1.bf16.msra.mxu0 %v2286
        %2344 = vmatprep.subr.bf16.mxu0 %v2291
        %2345 = vmatpush1.bf16.msra.mxu0 %v2290
        %2346 = vmatprep.subr.bf16.mxu0 %v2295
        %2347 = vmatpush1.bf16.msra.mxu0 %v2294
        %2348 = vmatprep.subr.bf16.mxu0 %v2299
        %2349 = vmatpush1.bf16.msra.mxu0 %v2298
        %2350 = vmatprep.subr.bf16.mxu0 0
        %2351 = vmatpush1.bf16.msra.mxu0 0
        %2352 = vmatprep.subr.bf16.mxu0 0
        %2353 = vmatpush1.bf16.msra.mxu0 0
        %2354 = vmatprep.subr.bf16.mxu0 0
        %2355 = vmatpush1.bf16.msra.mxu0 0
        %2356 = vmatprep.subr.bf16.mxu0 0
        %2357 = vmatpush1.bf16.msra.mxu0 0
        %2358 = vmatprep.subr.bf16.mxu0 0
        %2359 = vmatpush1.bf16.msra.mxu0 0
        %2360 = vmatprep.subr.bf16.mxu0 0
        %2361 = vmatpush1.bf16.msra.mxu0 0
        %2362 = vmatprep.subr.bf16.mxu0 0
        %2363 = vmatpush1.bf16.msra.mxu0 0
        %2364 = vmatprep.subr.bf16.mxu0 0
        %2365 = vmatpush1.bf16.msra.mxu0 0
        %2366 = vmatprep.mubr.bf16.mxu0 0
        %2367 = vmatmul.mubr.bf16.gmra.mrb[0].mxu0 %v2171
        %v2368 = vpop.f32.mrb[0].mxu0
        %v2369 = vadd.f32 0.0, %v2368
        %v2370 = vpop.f32.mrb[0].mxu0
        %v2371 = vadd.f32 0.0, %v2370
        %v2372 = vpop.f32.mrb[0].mxu0
        %v2373 = vpop.f32.mrb[0].mxu0
        %2374 = vdwg.mxu0
        %2375 = vmatprep.subr.bf16.mxu0 %v2273
        %2376 = vmatpush1.bf16.msra.mxu0 %v2272
        %2377 = vmatprep.subr.bf16.mxu0 %v2277
        %2378 = vmatpush1.bf16.msra.mxu0 %v2276
        %2379 = vmatprep.subr.bf16.mxu0 %v2281
        %2380 = vmatpush1.bf16.msra.mxu0 %v2280
        %2381 = vmatprep.subr.bf16.mxu0 %v2285
        %2382 = vmatpush1.bf16.msra.mxu0 %v2284
        %2383 = vmatprep.subr.bf16.mxu0 %v2289
        %2384 = vmatpush1.bf16.msra.mxu0 %v2288
        %2385 = vmatprep.subr.bf16.mxu0 %v2293
        %2386 = vmatpush1.bf16.msra.mxu0 %v2292
        %2387 = vmatprep.subr.bf16.mxu0 %v2297
        %2388 = vmatpush1.bf16.msra.mxu0 %v2296
        %2389 = vmatprep.subr.bf16.mxu0 %v2301
        %2390 = vmatpush1.bf16.msra.mxu0 %v2300
        %2391 = vmatprep.subr.bf16.mxu0 0
        %2392 = vmatpush1.bf16.msra.mxu0 0
        %2393 = vmatprep.subr.bf16.mxu0 0
        %2394 = vmatpush1.bf16.msra.mxu0 0
        %2395 = vmatprep.subr.bf16.mxu0 0
        %2396 = vmatpush1.bf16.msra.mxu0 0
        %2397 = vmatprep.subr.bf16.mxu0 0
        %2398 = vmatpush1.bf16.msra.mxu0 0
        %2399 = vmatprep.subr.bf16.mxu0 0
        %2400 = vmatpush1.bf16.msra.mxu0 0
        %2401 = vmatprep.subr.bf16.mxu0 0
        %2402 = vmatpush1.bf16.msra.mxu0 0
        %2403 = vmatprep.subr.bf16.mxu0 0
        %2404 = vmatpush1.bf16.msra.mxu0 0
        %2405 = vmatprep.subr.bf16.mxu0 0
        %2406 = vmatpush1.bf16.msra.mxu0 0
        %2407 = vmatprep.mubr.bf16.mxu0 0
        %2408 = vmatmul.mubr.bf16.gmra.mrb[0].mxu0 %v2171
        %v2409 = vpop.f32.mrb[0].mxu0
        %v2410 = vadd.f32 0.0, %v2409
        %v2411 = vpop.f32.mrb[0].mxu0
        %v2412 = vadd.f32 0.0, %v2411
        %v2413 = vpop.f32.mrb[0].mxu0
        %v2414 = vpop.f32.mrb[0].mxu0
        %2415 = vdwg.mxu0
        %v2448 = vunpack.c.l.b16 %v2106
        %v2449 = vunpack.c.h.b16 %v2106
        %v2450 = vunpack.c.l.b16 %v2107
        %v2451 = vunpack.c.h.b16 %v2107
        %v2452 = vunpack.c.l.b16 %v2108
        %v2453 = vunpack.c.h.b16 %v2108
        %v2454 = vunpack.c.l.b16 %v2109
        %v2455 = vunpack.c.h.b16 %v2109
        %v2456 = vunpack.c.l.b16 %v2110
        %v2457 = vunpack.c.h.b16 %v2110
        %v2458 = vunpack.c.l.b16 %v2111
        %v2459 = vunpack.c.h.b16 %v2111
        %v2460 = vunpack.c.l.b16 %v2112
        %v2461 = vunpack.c.h.b16 %v2112
        %v2462 = vunpack.c.l.b16 %v2113
        %v2463 = vunpack.c.h.b16 %v2113
        %v2464 = vunpack.c.l.b16 %v2114
        %v2465 = vunpack.c.h.b16 %v2114
        %v2466 = vunpack.c.l.b16 %v2115
        %v2467 = vunpack.c.h.b16 %v2115
        %v2468 = vunpack.c.l.b16 %v2116
        %v2469 = vunpack.c.h.b16 %v2116
        %v2470 = vunpack.c.l.b16 %v2117
        %v2471 = vunpack.c.h.b16 %v2117
        %v2472 = vunpack.c.l.b16 %v2118
        %v2473 = vunpack.c.h.b16 %v2118
        %v2474 = vunpack.c.l.b16 %v2119
        %v2475 = vunpack.c.h.b16 %v2119
        %v2476 = vunpack.c.l.b16 %v2120
        %v2477 = vunpack.c.h.b16 %v2120
        %v2478 = vunpack.c.l.b16 %v2121
        %v2479 = vunpack.c.h.b16 %v2121
        %v2480 = vunpack.c.l.b16 %v2122
        %v2481 = vunpack.c.h.b16 %v2122
        %v2482 = vunpack.c.l.b16 %v2123
        %v2483 = vunpack.c.h.b16 %v2123
        %v2484 = vunpack.c.l.b16 %v2124
        %v2485 = vunpack.c.h.b16 %v2124
        %v2486 = vunpack.c.l.b16 %v2125
        %v2487 = vunpack.c.h.b16 %v2125
        %v2488 = vunpack.c.l.b16 %v2126
        %v2489 = vunpack.c.h.b16 %v2126
        %v2490 = vunpack.c.l.b16 %v2127
        %v2491 = vunpack.c.h.b16 %v2127
        %v2492 = vunpack.c.l.b16 %v2128
        %v2493 = vunpack.c.h.b16 %v2128
        %v2494 = vunpack.c.l.b16 %v2129
        %v2495 = vunpack.c.h.b16 %v2129
        %v2496 = vunpack.c.l.b16 %v2130
        %v2497 = vunpack.c.h.b16 %v2130
        %v2498 = vunpack.c.l.b16 %v2131
        %v2499 = vunpack.c.h.b16 %v2131
        %v2500 = vunpack.c.l.b16 %v2132
        %v2501 = vunpack.c.h.b16 %v2132
        %v2502 = vunpack.c.l.b16 %v2133
        %v2503 = vunpack.c.h.b16 %v2133
        %v2504 = vunpack.c.l.b16 %v2134
        %v2505 = vunpack.c.h.b16 %v2134
        %v2506 = vunpack.c.l.b16 %v2135
        %v2507 = vunpack.c.h.b16 %v2135
        %v2508 = vunpack.c.l.b16 %v2136
        %v2509 = vunpack.c.h.b16 %v2136
        %v2510 = vunpack.c.l.b16 %v2137
        %v2511 = vunpack.c.h.b16 %v2137
        %v2512 = vpack.c.b16 %v2452, %v2448
        %v2513 = vpack.c.b16 %v2453, %v2449
        %v2514 = vpack.c.b16 %v2454, %v2450
        %v2515 = vpack.c.b16 %v2455, %v2451
        %v2516 = vpack.c.b16 %v2460, %v2456
        %v2517 = vpack.c.b16 %v2461, %v2457
        %v2518 = vpack.c.b16 %v2462, %v2458
        %v2519 = vpack.c.b16 %v2463, %v2459
        %v2520 = vpack.c.b16 %v2468, %v2464
        %v2521 = vpack.c.b16 %v2469, %v2465
        %v2522 = vpack.c.b16 %v2470, %v2466
        %v2523 = vpack.c.b16 %v2471, %v2467
        %v2524 = vpack.c.b16 %v2476, %v2472
        %v2525 = vpack.c.b16 %v2477, %v2473
        %v2526 = vpack.c.b16 %v2478, %v2474
        %v2527 = vpack.c.b16 %v2479, %v2475
        %v2528 = vpack.c.b16 %v2484, %v2480
        %v2529 = vpack.c.b16 %v2485, %v2481
        %v2530 = vpack.c.b16 %v2486, %v2482
        %v2531 = vpack.c.b16 %v2487, %v2483
        %v2532 = vpack.c.b16 %v2492, %v2488
        %v2533 = vpack.c.b16 %v2493, %v2489
        %v2534 = vpack.c.b16 %v2494, %v2490
        %v2535 = vpack.c.b16 %v2495, %v2491
        %v2536 = vpack.c.b16 %v2500, %v2496
        %v2537 = vpack.c.b16 %v2501, %v2497
        %v2538 = vpack.c.b16 %v2502, %v2498
        %v2539 = vpack.c.b16 %v2503, %v2499
        %v2540 = vpack.c.b16 %v2508, %v2504
        %v2541 = vpack.c.b16 %v2509, %v2505
        %v2542 = vpack.c.b16 %v2510, %v2506
        %v2543 = vpack.c.b16 %v2511, %v2507
        %2576 = vmatprep.subr.bf16.mxu0 %v2513
        %2577 = vmatpush1.bf16.msra.mxu0 %v2512
        %2578 = vmatprep.subr.bf16.mxu0 %v2517
        %2579 = vmatpush1.bf16.msra.mxu0 %v2516
        %2580 = vmatprep.subr.bf16.mxu0 %v2521
        %2581 = vmatpush1.bf16.msra.mxu0 %v2520
        %2582 = vmatprep.subr.bf16.mxu0 %v2525
        %2583 = vmatpush1.bf16.msra.mxu0 %v2524
        %2584 = vmatprep.subr.bf16.mxu0 %v2529
        %2585 = vmatpush1.bf16.msra.mxu0 %v2528
        %2586 = vmatprep.subr.bf16.mxu0 %v2533
        %2587 = vmatpush1.bf16.msra.mxu0 %v2532
        %2588 = vmatprep.subr.bf16.mxu0 %v2537
        %2589 = vmatpush1.bf16.msra.mxu0 %v2536
        %2590 = vmatprep.subr.bf16.mxu0 %v2541
        %2591 = vmatpush1.bf16.msra.mxu0 %v2540
        %2592 = vmatprep.subr.bf16.mxu0 0
        %2593 = vmatpush1.bf16.msra.mxu0 0
        %2594 = vmatprep.subr.bf16.mxu0 0
        %2595 = vmatpush1.bf16.msra.mxu0 0
        %2596 = vmatprep.subr.bf16.mxu0 0
        %2597 = vmatpush1.bf16.msra.mxu0 0
        %2598 = vmatprep.subr.bf16.mxu0 0
        %2599 = vmatpush1.bf16.msra.mxu0 0
        %2600 = vmatprep.subr.bf16.mxu0 0
        %2601 = vmatpush1.bf16.msra.mxu0 0
        %2602 = vmatprep.subr.bf16.mxu0 0
        %2603 = vmatpush1.bf16.msra.mxu0 0
        %2604 = vmatprep.subr.bf16.mxu0 0
        %2605 = vmatpush1.bf16.msra.mxu0 0
        %2606 = vmatprep.subr.bf16.mxu0 0
        %2607 = vmatpush1.bf16.msra.mxu0 0
        %2608 = vmatprep.mubr.bf16.mxu0 0
        %2609 = vmatmul.mubr.bf16.gmra.mrb[0].mxu0 %v2105
        %v2610 = vpop.f32.mrb[0].mxu0
        %v2611 = vadd.f32 %v2369, %v2610
        %v2612 = vpop.f32.mrb[0].mxu0
        %v2613 = vadd.f32 %v2371, %v2612
        %v2614 = vpop.f32.mrb[0].mxu0
        %v2615 = vpop.f32.mrb[0].mxu0
        %2616 = vdwg.mxu0
        %2617 = vmatprep.subr.bf16.mxu0 %v2515
        %2618 = vmatpush1.bf16.msra.mxu0 %v2514
        %2619 = vmatprep.subr.bf16.mxu0 %v2519
        %2620 = vmatpush1.bf16.msra.mxu0 %v2518
        %2621 = vmatprep.subr.bf16.mxu0 %v2523
        %2622 = vmatpush1.bf16.msra.mxu0 %v2522
        %2623 = vmatprep.subr.bf16.mxu0 %v2527
        %2624 = vmatpush1.bf16.msra.mxu0 %v2526
        %2625 = vmatprep.subr.bf16.mxu0 %v2531
        %2626 = vmatpush1.bf16.msra.mxu0 %v2530
        %2627 = vmatprep.subr.bf16.mxu0 %v2535
        %2628 = vmatpush1.bf16.msra.mxu0 %v2534
        %2629 = vmatprep.subr.bf16.mxu0 %v2539
        %2630 = vmatpush1.bf16.msra.mxu0 %v2538
        %2631 = vmatprep.subr.bf16.mxu0 %v2543
        %2632 = vmatpush1.bf16.msra.mxu0 %v2542
        %2633 = vmatprep.subr.bf16.mxu0 0
        %2634 = vmatpush1.bf16.msra.mxu0 0
        %2635 = vmatprep.subr.bf16.mxu0 0
        %2636 = vmatpush1.bf16.msra.mxu0 0
        %2637 = vmatprep.subr.bf16.mxu0 0
        %2638 = vmatpush1.bf16.msra.mxu0 0
        %2639 = vmatprep.subr.bf16.mxu0 0
        %2640 = vmatpush1.bf16.msra.mxu0 0
        %2641 = vmatprep.subr.bf16.mxu0 0
        %2642 = vmatpush1.bf16.msra.mxu0 0
        %2643 = vmatprep.subr.bf16.mxu0 0
        %2644 = vmatpush1.bf16.msra.mxu0 0
        %2645 = vmatprep.subr.bf16.mxu0 0
        %2646 = vmatpush1.bf16.msra.mxu0 0
        %2647 = vmatprep.subr.bf16.mxu0 0
        %2648 = vmatpush1.bf16.msra.mxu0 0
        %2649 = vmatprep.mubr.bf16.mxu0 0
        %2650 = vmatmul.mubr.bf16.gmra.mrb[0].mxu0 %v2105
        %v2651 = vpop.f32.mrb[0].mxu0
        %v2652 = vadd.f32 %v2410, %v2651
        %v2653 = vpop.f32.mrb[0].mxu0
        %v2654 = vadd.f32 %v2412, %v2653
        %v2655 = vpop.f32.mrb[0].mxu0
        %v2656 = vpop.f32.mrb[0].mxu0
        %2657 = vdwg.mxu0
        %v2658 = vld [vmem:[%s5 + $0x200] sm:$0xff]
        %v2659 = vld [vmem:[%s5 + $0x208] sm:$0xff]
        %v2660 = vld [vmem:[%s5 + $0x210] sm:$0xff]
        %v2661 = vld [vmem:[%s5 + $0x218] sm:$0xff]
        %v2662 = vld [vmem:[%s5 + $0x220] sm:$0xff]
        %v2663 = vld [vmem:[%s5 + $0x228] sm:$0xff]
        %v2664 = vld [vmem:[%s5 + $0x230] sm:$0xff]
        %v2665 = vld [vmem:[%s5 + $0x238] sm:$0xff]
        %v2666 = vld [vmem:[%s5 + $0x240] sm:$0xff]
        %v2667 = vld [vmem:[%s5 + $0x248] sm:$0xff]
        %v2668 = vld [vmem:[%s5 + $0x250] sm:$0xff]
        %v2669 = vld [vmem:[%s5 + $0x258] sm:$0xff]
        %v2670 = vld [vmem:[%s5 + $0x260] sm:$0xff]
        %v2671 = vld [vmem:[%s5 + $0x268] sm:$0xff]
        %v2672 = vld [vmem:[%s5 + $0x270] sm:$0xff]
        %v2673 = vld [vmem:[%s5 + $0x278] sm:$0xff]
        %v2674 = vld [vmem:[%s5 + $0x280] sm:$0xff]
        %v2675 = vld [vmem:[%s5 + $0x288] sm:$0xff]
        %v2676 = vld [vmem:[%s5 + $0x290] sm:$0xff]
        %v2677 = vld [vmem:[%s5 + $0x298] sm:$0xff]
        %v2678 = vld [vmem:[%s5 + $0x2a0] sm:$0xff]
        %v2679 = vld [vmem:[%s5 + $0x2a8] sm:$0xff]
        %v2680 = vld [vmem:[%s5 + $0x2b0] sm:$0xff]
        %v2681 = vld [vmem:[%s5 + $0x2b8] sm:$0xff]
        %v2682 = vld [vmem:[%s5 + $0x2c0] sm:$0xff]
        %v2683 = vld [vmem:[%s5 + $0x2c8] sm:$0xff]
        %v2684 = vld [vmem:[%s5 + $0x2d0] sm:$0xff]
        %v2685 = vld [vmem:[%s5 + $0x2d8] sm:$0xff]
        %v2686 = vld [vmem:[%s5 + $0x2e0] sm:$0xff]
        %v2687 = vld [vmem:[%s5 + $0x2e8] sm:$0xff]
        %v2688 = vld [vmem:[%s5 + $0x2f0] sm:$0xff]
        %v2689 = vld [vmem:[%s5 + $0x2f8] sm:$0xff]
        %v2691 = vrot.slane %v2105, 1
        %v2725 = vunpack.c.l.b16 %v2658
        %v2726 = vunpack.c.h.b16 %v2658
        %v2727 = vunpack.c.l.b16 %v2659
        %v2728 = vunpack.c.h.b16 %v2659
        %v2729 = vunpack.c.l.b16 %v2660
        %v2730 = vunpack.c.h.b16 %v2660
        %v2731 = vunpack.c.l.b16 %v2661
        %v2732 = vunpack.c.h.b16 %v2661
        %v2733 = vunpack.c.l.b16 %v2662
        %v2734 = vunpack.c.h.b16 %v2662
        %v2735 = vunpack.c.l.b16 %v2663
        %v2736 = vunpack.c.h.b16 %v2663
        %v2737 = vunpack.c.l.b16 %v2664
        %v2738 = vunpack.c.h.b16 %v2664
        %v2739 = vunpack.c.l.b16 %v2665
        %v2740 = vunpack.c.h.b16 %v2665
        %v2741 = vunpack.c.l.b16 %v2666
        %v2742 = vunpack.c.h.b16 %v2666
        %v2743 = vunpack.c.l.b16 %v2667
        %v2744 = vunpack.c.h.b16 %v2667
        %v2745 = vunpack.c.l.b16 %v2668
        %v2746 = vunpack.c.h.b16 %v2668
        %v2747 = vunpack.c.l.b16 %v2669
        %v2748 = vunpack.c.h.b16 %v2669
        %v2749 = vunpack.c.l.b16 %v2670
        %v2750 = vunpack.c.h.b16 %v2670
        %v2751 = vunpack.c.l.b16 %v2671
        %v2752 = vunpack.c.h.b16 %v2671
        %v2753 = vunpack.c.l.b16 %v2672
        %v2754 = vunpack.c.h.b16 %v2672
        %v2755 = vunpack.c.l.b16 %v2673
        %v2756 = vunpack.c.h.b16 %v2673
        %v2757 = vunpack.c.l.b16 %v2674
        %v2758 = vunpack.c.h.b16 %v2674
        %v2759 = vunpack.c.l.b16 %v2675
        %v2760 = vunpack.c.h.b16 %v2675
        %v2761 = vunpack.c.l.b16 %v2676
        %v2762 = vunpack.c.h.b16 %v2676
        %v2763 = vunpack.c.l.b16 %v2677
        %v2764 = vunpack.c.h.b16 %v2677
        %v2765 = vunpack.c.l.b16 %v2678
        %v2766 = vunpack.c.h.b16 %v2678
        %v2767 = vunpack.c.l.b16 %v2679
        %v2768 = vunpack.c.h.b16 %v2679
        %v2769 = vunpack.c.l.b16 %v2680
        %v2770 = vunpack.c.h.b16 %v2680
        %v2771 = vunpack.c.l.b16 %v2681
        %v2772 = vunpack.c.h.b16 %v2681
        %v2773 = vunpack.c.l.b16 %v2682
        %v2774 = vunpack.c.h.b16 %v2682
        %v2775 = vunpack.c.l.b16 %v2683
        %v2776 = vunpack.c.h.b16 %v2683
        %v2777 = vunpack.c.l.b16 %v2684
        %v2778 = vunpack.c.h.b16 %v2684
        %v2779 = vunpack.c.l.b16 %v2685
        %v2780 = vunpack.c.h.b16 %v2685
        %v2781 = vunpack.c.l.b16 %v2686
        %v2782 = vunpack.c.h.b16 %v2686
        %v2783 = vunpack.c.l.b16 %v2687
        %v2784 = vunpack.c.h.b16 %v2687
        %v2785 = vunpack.c.l.b16 %v2688
        %v2786 = vunpack.c.h.b16 %v2688
        %v2787 = vunpack.c.l.b16 %v2689
        %v2788 = vunpack.c.h.b16 %v2689
        %v2789 = vpack.c.b16 %v2729, %v2725
        %v2790 = vpack.c.b16 %v2730, %v2726
        %v2791 = vpack.c.b16 %v2731, %v2727
        %v2792 = vpack.c.b16 %v2732, %v2728
        %v2793 = vpack.c.b16 %v2737, %v2733
        %v2794 = vpack.c.b16 %v2738, %v2734
        %v2795 = vpack.c.b16 %v2739, %v2735
        %v2796 = vpack.c.b16 %v2740, %v2736
        %v2797 = vpack.c.b16 %v2745, %v2741
        %v2798 = vpack.c.b16 %v2746, %v2742
        %v2799 = vpack.c.b16 %v2747, %v2743
        %v2800 = vpack.c.b16 %v2748, %v2744
        %v2801 = vpack.c.b16 %v2753, %v2749
        %v2802 = vpack.c.b16 %v2754, %v2750
        %v2803 = vpack.c.b16 %v2755, %v2751
        %v2804 = vpack.c.b16 %v2756, %v2752
        %v2805 = vpack.c.b16 %v2761, %v2757
        %v2806 = vpack.c.b16 %v2762, %v2758
        %v2807 = vpack.c.b16 %v2763, %v2759
        %v2808 = vpack.c.b16 %v2764, %v2760
        %v2809 = vpack.c.b16 %v2769, %v2765
        %v2810 = vpack.c.b16 %v2770, %v2766
        %v2811 = vpack.c.b16 %v2771, %v2767
        %v2812 = vpack.c.b16 %v2772, %v2768
        %v2813 = vpack.c.b16 %v2777, %v2773
        %v2814 = vpack.c.b16 %v2778, %v2774
        %v2815 = vpack.c.b16 %v2779, %v2775
        %v2816 = vpack.c.b16 %v2780, %v2776
        %v2817 = vpack.c.b16 %v2785, %v2781
        %v2818 = vpack.c.b16 %v2786, %v2782
        %v2819 = vpack.c.b16 %v2787, %v2783
        %v2820 = vpack.c.b16 %v2788, %v2784
        %2853 = vmatprep.subr.bf16.mxu0 %v2790
        %2854 = vmatpush1.bf16.msra.mxu0 %v2789
        %2855 = vmatprep.subr.bf16.mxu0 %v2794
        %2856 = vmatpush1.bf16.msra.mxu0 %v2793
        %2857 = vmatprep.subr.bf16.mxu0 %v2798
        %2858 = vmatpush1.bf16.msra.mxu0 %v2797
        %2859 = vmatprep.subr.bf16.mxu0 %v2802
        %2860 = vmatpush1.bf16.msra.mxu0 %v2801
        %2861 = vmatprep.subr.bf16.mxu0 %v2806
        %2862 = vmatpush1.bf16.msra.mxu0 %v2805
        %2863 = vmatprep.subr.bf16.mxu0 %v2810
        %2864 = vmatpush1.bf16.msra.mxu0 %v2809
        %2865 = vmatprep.subr.bf16.mxu0 %v2814
        %2866 = vmatpush1.bf16.msra.mxu0 %v2813
        %2867 = vmatprep.subr.bf16.mxu0 %v2818
        %2868 = vmatpush1.bf16.msra.mxu0 %v2817
        %2869 = vmatprep.subr.bf16.mxu0 0
        %2870 = vmatpush1.bf16.msra.mxu0 0
        %2871 = vmatprep.subr.bf16.mxu0 0
        %2872 = vmatpush1.bf16.msra.mxu0 0
        %2873 = vmatprep.subr.bf16.mxu0 0
        %2874 = vmatpush1.bf16.msra.mxu0 0
        %2875 = vmatprep.subr.bf16.mxu0 0
        %2876 = vmatpush1.bf16.msra.mxu0 0
        %2877 = vmatprep.subr.bf16.mxu0 0
        %2878 = vmatpush1.bf16.msra.mxu0 0
        %2879 = vmatprep.subr.bf16.mxu0 0
        %2880 = vmatpush1.bf16.msra.mxu0 0
        %2881 = vmatprep.subr.bf16.mxu0 0
        %2882 = vmatpush1.bf16.msra.mxu0 0
        %2883 = vmatprep.subr.bf16.mxu0 0
        %2884 = vmatpush1.bf16.msra.mxu0 0
        %2885 = vmatprep.mubr.bf16.mxu0 0
        %2886 = vmatmul.mubr.bf16.gmra.mrb[0].mxu0 %v2691
        %v2887 = vpop.f32.mrb[0].mxu0
        %v2888 = vadd.f32 0.0, %v2887
        %v2889 = vpop.f32.mrb[0].mxu0
        %v2890 = vadd.f32 0.0, %v2889
        %v2891 = vpop.f32.mrb[0].mxu0
        %v2892 = vpop.f32.mrb[0].mxu0
        %2893 = vdwg.mxu0
        %2894 = vmatprep.subr.bf16.mxu0 %v2792
        %2895 = vmatpush1.bf16.msra.mxu0 %v2791
        %2896 = vmatprep.subr.bf16.mxu0 %v2796
        %2897 = vmatpush1.bf16.msra.mxu0 %v2795
        %2898 = vmatprep.subr.bf16.mxu0 %v2800
        %2899 = vmatpush1.bf16.msra.mxu0 %v2799
        %2900 = vmatprep.subr.bf16.mxu0 %v2804
        %2901 = vmatpush1.bf16.msra.mxu0 %v2803
        %2902 = vmatprep.subr.bf16.mxu0 %v2808
        %2903 = vmatpush1.bf16.msra.mxu0 %v2807
        %2904 = vmatprep.subr.bf16.mxu0 %v2812
        %2905 = vmatpush1.bf16.msra.mxu0 %v2811
        %2906 = vmatprep.subr.bf16.mxu0 %v2816
        %2907 = vmatpush1.bf16.msra.mxu0 %v2815
        %2908 = vmatprep.subr.bf16.mxu0 %v2820
        %2909 = vmatpush1.bf16.msra.mxu0 %v2819
        %2910 = vmatprep.subr.bf16.mxu0 0
        %2911 = vmatpush1.bf16.msra.mxu0 0
        %2912 = vmatprep.subr.bf16.mxu0 0
        %2913 = vmatpush1.bf16.msra.mxu0 0
        %2914 = vmatprep.subr.bf16.mxu0 0
        %2915 = vmatpush1.bf16.msra.mxu0 0
        %2916 = vmatprep.subr.bf16.mxu0 0
        %2917 = vmatpush1.bf16.msra.mxu0 0
        %2918 = vmatprep.subr.bf16.mxu0 0
        %2919 = vmatpush1.bf16.msra.mxu0 0
        %2920 = vmatprep.subr.bf16.mxu0 0
        %2921 = vmatpush1.bf16.msra.mxu0 0
        %2922 = vmatprep.subr.bf16.mxu0 0
        %2923 = vmatpush1.bf16.msra.mxu0 0
        %2924 = vmatprep.subr.bf16.mxu0 0
        %2925 = vmatpush1.bf16.msra.mxu0 0
        %2926 = vmatprep.mubr.bf16.mxu0 0
        %2927 = vmatmul.mubr.bf16.gmra.mrb[0].mxu0 %v2691
        %v2928 = vpop.f32.mrb[0].mxu0
        %v2929 = vadd.f32 0.0, %v2928
        %v2930 = vpop.f32.mrb[0].mxu0
        %v2931 = vadd.f32 0.0, %v2930
        %v2932 = vpop.f32.mrb[0].mxu0
        %v2933 = vpop.f32.mrb[0].mxu0
        %2934 = vdwg.mxu0
        %v2935 = vadd.f32 %v2611, %v2888
        %v2936 = vadd.f32 %v2613, %v2890
        %v2937 = vadd.f32 %v2652, %v2929
        %v2938 = vadd.f32 %v2654, %v2931
        %v2939 = vld [vmem:[%s5 + $0x300] sm:$0xff]
        %v2940 = vld [vmem:[%s5 + $0x308] sm:$0xff]
        %v2941 = vld [vmem:[%s5 + $0x310] sm:$0xff]
        %v2942 = vld [vmem:[%s5 + $0x318] sm:$0xff]
        %v2943 = vld [vmem:[%s5 + $0x320] sm:$0xff]
        %v2944 = vld [vmem:[%s5 + $0x328] sm:$0xff]
        %v2945 = vld [vmem:[%s5 + $0x330] sm:$0xff]
        %v2946 = vld [vmem:[%s5 + $0x338] sm:$0xff]
        %v2947 = vld [vmem:[%s5 + $0x340] sm:$0xff]
        %v2948 = vld [vmem:[%s5 + $0x348] sm:$0xff]
        %v2949 = vld [vmem:[%s5 + $0x350] sm:$0xff]
        %v2950 = vld [vmem:[%s5 + $0x358] sm:$0xff]
        %v2951 = vld [vmem:[%s5 + $0x360] sm:$0xff]
        %v2952 = vld [vmem:[%s5 + $0x368] sm:$0xff]
        %v2953 = vld [vmem:[%s5 + $0x370] sm:$0xff]
        %v2954 = vld [vmem:[%s5 + $0x378] sm:$0xff]
        %v2955 = vld [vmem:[%s5 + $0x380] sm:$0xff]
        %v2956 = vld [vmem:[%s5 + $0x388] sm:$0xff]
        %v2957 = vld [vmem:[%s5 + $0x390] sm:$0xff]
        %v2958 = vld [vmem:[%s5 + $0x398] sm:$0xff]
        %v2959 = vld [vmem:[%s5 + $0x3a0] sm:$0xff]
        %v2960 = vld [vmem:[%s5 + $0x3a8] sm:$0xff]
        %v2961 = vld [vmem:[%s5 + $0x3b0] sm:$0xff]
        %v2962 = vld [vmem:[%s5 + $0x3b8] sm:$0xff]
        %v2963 = vld [vmem:[%s5 + $0x3c0] sm:$0xff]
        %v2964 = vld [vmem:[%s5 + $0x3c8] sm:$0xff]
        %v2965 = vld [vmem:[%s5 + $0x3d0] sm:$0xff]
        %v2966 = vld [vmem:[%s5 + $0x3d8] sm:$0xff]
        %v2967 = vld [vmem:[%s5 + $0x3e0] sm:$0xff]
        %v2968 = vld [vmem:[%s5 + $0x3e8] sm:$0xff]
        %v2969 = vld [vmem:[%s5 + $0x3f0] sm:$0xff]
        %v2970 = vld [vmem:[%s5 + $0x3f8] sm:$0xff]
        %v2971 = vrot.slane %v2171, 1
        %v3005 = vunpack.c.l.b16 %v2939
        %v3006 = vunpack.c.h.b16 %v2939
        %v3007 = vunpack.c.l.b16 %v2940
        %v3008 = vunpack.c.h.b16 %v2940
        %v3009 = vunpack.c.l.b16 %v2941
        %v3010 = vunpack.c.h.b16 %v2941
        %v3011 = vunpack.c.l.b16 %v2942
        %v3012 = vunpack.c.h.b16 %v2942
        %v3013 = vunpack.c.l.b16 %v2943
        %v3014 = vunpack.c.h.b16 %v2943
        %v3015 = vunpack.c.l.b16 %v2944
        %v3016 = vunpack.c.h.b16 %v2944
        %v3017 = vunpack.c.l.b16 %v2945
        %v3018 = vunpack.c.h.b16 %v2945
        %v3019 = vunpack.c.l.b16 %v2946
        %v3020 = vunpack.c.h.b16 %v2946
        %v3021 = vunpack.c.l.b16 %v2947
        %v3022 = vunpack.c.h.b16 %v2947
        %v3023 = vunpack.c.l.b16 %v2948
        %v3024 = vunpack.c.h.b16 %v2948
        %v3025 = vunpack.c.l.b16 %v2949
        %v3026 = vunpack.c.h.b16 %v2949
        %v3027 = vunpack.c.l.b16 %v2950
        %v3028 = vunpack.c.h.b16 %v2950
        %v3029 = vunpack.c.l.b16 %v2951
        %v3030 = vunpack.c.h.b16 %v2951
        %v3031 = vunpack.c.l.b16 %v2952
        %v3032 = vunpack.c.h.b16 %v2952
        %v3033 = vunpack.c.l.b16 %v2953
        %v3034 = vunpack.c.h.b16 %v2953
        %v3035 = vunpack.c.l.b16 %v2954
        %v3036 = vunpack.c.h.b16 %v2954
        %v3037 = vunpack.c.l.b16 %v2955
        %v3038 = vunpack.c.h.b16 %v2955
        %v3039 = vunpack.c.l.b16 %v2956
        %v3040 = vunpack.c.h.b16 %v2956
        %v3041 = vunpack.c.l.b16 %v2957
        %v3042 = vunpack.c.h.b16 %v2957
        %v3043 = vunpack.c.l.b16 %v2958
        %v3044 = vunpack.c.h.b16 %v2958
        %v3045 = vunpack.c.l.b16 %v2959
        %v3046 = vunpack.c.h.b16 %v2959
        %v3047 = vunpack.c.l.b16 %v2960
        %v3048 = vunpack.c.h.b16 %v2960
        %v3049 = vunpack.c.l.b16 %v2961
        %v3050 = vunpack.c.h.b16 %v2961
        %v3051 = vunpack.c.l.b16 %v2962
        %v3052 = vunpack.c.h.b16 %v2962
        %v3053 = vunpack.c.l.b16 %v2963
        %v3054 = vunpack.c.h.b16 %v2963
        %v3055 = vunpack.c.l.b16 %v2964
        %v3056 = vunpack.c.h.b16 %v2964
        %v3057 = vunpack.c.l.b16 %v2965
        %v3058 = vunpack.c.h.b16 %v2965
        %v3059 = vunpack.c.l.b16 %v2966
        %v3060 = vunpack.c.h.b16 %v2966
        %v3061 = vunpack.c.l.b16 %v2967
        %v3062 = vunpack.c.h.b16 %v2967
        %v3063 = vunpack.c.l.b16 %v2968
        %v3064 = vunpack.c.h.b16 %v2968
        %v3065 = vunpack.c.l.b16 %v2969
        %v3066 = vunpack.c.h.b16 %v2969
        %v3067 = vunpack.c.l.b16 %v2970
        %v3068 = vunpack.c.h.b16 %v2970
        %v3069 = vpack.c.b16 %v3009, %v3005
        %v3070 = vpack.c.b16 %v3010, %v3006
        %v3071 = vpack.c.b16 %v3011, %v3007
        %v3072 = vpack.c.b16 %v3012, %v3008
        %v3073 = vpack.c.b16 %v3017, %v3013
        %v3074 = vpack.c.b16 %v3018, %v3014
        %v3075 = vpack.c.b16 %v3019, %v3015
        %v3076 = vpack.c.b16 %v3020, %v3016
        %v3077 = vpack.c.b16 %v3025, %v3021
        %v3078 = vpack.c.b16 %v3026, %v3022
        %v3079 = vpack.c.b16 %v3027, %v3023
        %v3080 = vpack.c.b16 %v3028, %v3024
        %v3081 = vpack.c.b16 %v3033, %v3029
        %v3082 = vpack.c.b16 %v3034, %v3030
        %v3083 = vpack.c.b16 %v3035, %v3031
        %v3084 = vpack.c.b16 %v3036, %v3032
        %v3085 = vpack.c.b16 %v3041, %v3037
        %v3086 = vpack.c.b16 %v3042, %v3038
        %v3087 = vpack.c.b16 %v3043, %v3039
        %v3088 = vpack.c.b16 %v3044, %v3040
        %v3089 = vpack.c.b16 %v3049, %v3045
        %v3090 = vpack.c.b16 %v3050, %v3046
        %v3091 = vpack.c.b16 %v3051, %v3047
        %v3092 = vpack.c.b16 %v3052, %v3048
        %v3093 = vpack.c.b16 %v3057, %v3053
        %v3094 = vpack.c.b16 %v3058, %v3054
        %v3095 = vpack.c.b16 %v3059, %v3055
        %v3096 = vpack.c.b16 %v3060, %v3056
        %v3097 = vpack.c.b16 %v3065, %v3061
        %v3098 = vpack.c.b16 %v3066, %v3062
        %v3099 = vpack.c.b16 %v3067, %v3063
        %v3100 = vpack.c.b16 %v3068, %v3064
        %3133 = vmatprep.subr.bf16.mxu0 %v3070
        %3134 = vmatpush1.bf16.msra.mxu0 %v3069
        %3135 = vmatprep.subr.bf16.mxu0 %v3074
        %3136 = vmatpush1.bf16.msra.mxu0 %v3073
        %3137 = vmatprep.subr.bf16.mxu0 %v3078
        %3138 = vmatpush1.bf16.msra.mxu0 %v3077
        %3139 = vmatprep.subr.bf16.mxu0 %v3082
        %3140 = vmatpush1.bf16.msra.mxu0 %v3081
        %3141 = vmatprep.subr.bf16.mxu0 %v3086
        %3142 = vmatpush1.bf16.msra.mxu0 %v3085
        %3143 = vmatprep.subr.bf16.mxu0 %v3090
        %3144 = vmatpush1.bf16.msra.mxu0 %v3089
        %3145 = vmatprep.subr.bf16.mxu0 %v3094
        %3146 = vmatpush1.bf16.msra.mxu0 %v3093
        %3147 = vmatprep.subr.bf16.mxu0 %v3098
        %3148 = vmatpush1.bf16.msra.mxu0 %v3097
        %3149 = vmatprep.subr.bf16.mxu0 0
        %3150 = vmatpush1.bf16.msra.mxu0 0
        %3151 = vmatprep.subr.bf16.mxu0 0
        %3152 = vmatpush1.bf16.msra.mxu0 0
        %3153 = vmatprep.subr.bf16.mxu0 0
        %3154 = vmatpush1.bf16.msra.mxu0 0
        %3155 = vmatprep.subr.bf16.mxu0 0
        %3156 = vmatpush1.bf16.msra.mxu0 0
        %3157 = vmatprep.subr.bf16.mxu0 0
        %3158 = vmatpush1.bf16.msra.mxu0 0
        %3159 = vmatprep.subr.bf16.mxu0 0
        %3160 = vmatpush1.bf16.msra.mxu0 0
        %3161 = vmatprep.subr.bf16.mxu0 0
        %3162 = vmatpush1.bf16.msra.mxu0 0
        %3163 = vmatprep.subr.bf16.mxu0 0
        %3164 = vmatpush1.bf16.msra.mxu0 0
        %3165 = vmatprep.mubr.bf16.mxu0 0
        %3166 = vmatmul.mubr.bf16.gmra.mrb[0].mxu0 %v2971
        %v3167 = vpop.f32.mrb[0].mxu0
        %v3168 = vadd.f32 0.0, %v3167
        %v3169 = vpop.f32.mrb[0].mxu0
        %v3170 = vadd.f32 0.0, %v3169
        %v3171 = vpop.f32.mrb[0].mxu0
        %v3172 = vpop.f32.mrb[0].mxu0
        %3173 = vdwg.mxu0
        %3174 = vmatprep.subr.bf16.mxu0 %v3072
        %3175 = vmatpush1.bf16.msra.mxu0 %v3071
        %3176 = vmatprep.subr.bf16.mxu0 %v3076
        %3177 = vmatpush1.bf16.msra.mxu0 %v3075
        %3178 = vmatprep.subr.bf16.mxu0 %v3080
        %3179 = vmatpush1.bf16.msra.mxu0 %v3079
        %3180 = vmatprep.subr.bf16.mxu0 %v3084
        %3181 = vmatpush1.bf16.msra.mxu0 %v3083
        %3182 = vmatprep.subr.bf16.mxu0 %v3088
        %3183 = vmatpush1.bf16.msra.mxu0 %v3087
        %3184 = vmatprep.subr.bf16.mxu0 %v3092
        %3185 = vmatpush1.bf16.msra.mxu0 %v3091
        %3186 = vmatprep.subr.bf16.mxu0 %v3096
        %3187 = vmatpush1.bf16.msra.mxu0 %v3095
        %3188 = vmatprep.subr.bf16.mxu0 %v3100
        %3189 = vmatpush1.bf16.msra.mxu0 %v3099
        %3190 = vmatprep.subr.bf16.mxu0 0
        %3191 = vmatpush1.bf16.msra.mxu0 0
        %3192 = vmatprep.subr.bf16.mxu0 0
        %3193 = vmatpush1.bf16.msra.mxu0 0
        %3194 = vmatprep.subr.bf16.mxu0 0
        %3195 = vmatpush1.bf16.msra.mxu0 0
        %3196 = vmatprep.subr.bf16.mxu0 0
        %3197 = vmatpush1.bf16.msra.mxu0 0
        %3198 = vmatprep.subr.bf16.mxu0 0
        %3199 = vmatpush1.bf16.msra.mxu0 0
        %3200 = vmatprep.subr.bf16.mxu0 0
        %3201 = vmatpush1.bf16.msra.mxu0 0
        %3202 = vmatprep.subr.bf16.mxu0 0
        %3203 = vmatpush1.bf16.msra.mxu0 0
        %3204 = vmatprep.subr.bf16.mxu0 0
        %3205 = vmatpush1.bf16.msra.mxu0 0
        %3206 = vmatprep.mubr.bf16.mxu0 0
        %3207 = vmatmul.mubr.bf16.gmra.mrb[0].mxu0 %v2971
        %v3208 = vpop.f32.mrb[0].mxu0
        %v3209 = vadd.f32 0.0, %v3208
        %v3210 = vpop.f32.mrb[0].mxu0
        %v3211 = vadd.f32 0.0, %v3210
        %v3212 = vpop.f32.mrb[0].mxu0
        %v3213 = vpop.f32.mrb[0].mxu0
        %3214 = vdwg.mxu0
        %v3215 = vadd.f32 %v2935, %v3168
        %v3216 = vadd.f32 %v2936, %v3170
        %v3217 = vadd.f32 %v2937, %v3209
        %v3218 = vadd.f32 %v2938, %v3211
        %v3219 = vld [vmem:[%s6] sm:$0xf]
        %v3221 = vlaneseq
        %v3222 = vshrl.u32 %v3221, 7
        %v3223 = vsub.s32 0, %v3222
        %v3224 = vrot.slane %v3219, %v3223
        %v3225 = vlaneseq
        %v3226 = vshrl.u32 %v3225, 7
        %v3227 = vsub.s32 1, %v3226
        %v3228 = vrot.slane %v3219, %v3227
        %v3229 = vlaneseq
        %v3230 = vshrl.u32 %v3229, 7
        %v3231 = vsub.s32 2, %v3230
        %v3232 = vrot.slane %v3219, %v3231
        %v3233 = vlaneseq
        %v3234 = vshrl.u32 %v3233, 7
        %v3235 = vsub.s32 3, %v3234
        %v3236 = vrot.slane %v3219, %v3235
        %v3241 = vadd.f32 %v3215, %v3224
        %v3242 = vadd.f32 %v3216, %v3228
        %v3243 = vadd.f32 %v3217, %v3232
        %v3244 = vadd.f32 %v3218, %v3236
        %v3245 = vmax.f32 %v3241, 0.0
        %v3246 = vmax.f32 %v3242, 0.0
        %v3247 = vmax.f32 %v3243, 0.0
        %v3248 = vmax.f32 %v3244, 0.0
        %v3249 = vpack.c.bf16 %v3245, %v3245
        %v3250 = vpack.c.bf16 %v3246, %v3246
        %v3251 = vpack.c.bf16 %v3247, %v3247
        %v3252 = vpack.c.bf16 %v3248, %v3248
        %v3253 = vld [vmem:[%s7] sm:$0xf]
        %v3254 = vld [vmem:[%s7 + $0x4] sm:$0xf]
        %v3255 = vld [vmem:[%s7 + $0x8] sm:$0xf]
        %v3256 = vld [vmem:[%s7 + $0xc] sm:$0xf]
        %v3257 = vld [vmem:[%s7 + $0x10] sm:$0xf]
        %v3258 = vld [vmem:[%s7 + $0x14] sm:$0xf]
        %v3259 = vld [vmem:[%s7 + $0x18] sm:$0xf]
        %v3260 = vld [vmem:[%s7 + $0x1c] sm:$0xf]
        %v3261 = vld [vmem:[%s7 + $0x20] sm:$0xf]
        %v3262 = vld [vmem:[%s7 + $0x24] sm:$0xf]
        %v3263 = vld [vmem:[%s7 + $0x28] sm:$0xf]
        %v3264 = vld [vmem:[%s7 + $0x2c] sm:$0xf]
        %v3265 = vld [vmem:[%s7 + $0x30] sm:$0xf]
        %v3266 = vld [vmem:[%s7 + $0x34] sm:$0xf]
        %v3267 = vld [vmem:[%s7 + $0x38] sm:$0xf]
        %v3268 = vld [vmem:[%s7 + $0x3c] sm:$0xf]
        %v3269 = vld [vmem:[%s7 + $0x40] sm:$0xf]
        %v3270 = vld [vmem:[%s7 + $0x44] sm:$0xf]
        %v3271 = vld [vmem:[%s7 + $0x48] sm:$0xf]
        %v3272 = vld [vmem:[%s7 + $0x4c] sm:$0xf]
        %v3273 = vld [vmem:[%s7 + $0x50] sm:$0xf]
        %v3274 = vld [vmem:[%s7 + $0x54] sm:$0xf]
        %v3275 = vld [vmem:[%s7 + $0x58] sm:$0xf]
        %v3276 = vld [vmem:[%s7 + $0x5c] sm:$0xf]
        %v3277 = vld [vmem:[%s7 + $0x60] sm:$0xf]
        %v3278 = vld [vmem:[%s7 + $0x64] sm:$0xf]
        %v3279 = vld [vmem:[%s7 + $0x68] sm:$0xf]
        %v3280 = vld [vmem:[%s7 + $0x6c] sm:$0xf]
        %v3281 = vld [vmem:[%s7 + $0x70] sm:$0xf]
        %v3282 = vld [vmem:[%s7 + $0x74] sm:$0xf]
        %v3283 = vld [vmem:[%s7 + $0x78] sm:$0xf]
        %v3284 = vld [vmem:[%s7 + $0x7c] sm:$0xf]
        %v3285 = vld [vmem:[%s7 + $0x80] sm:$0xf]
        %v3286 = vld [vmem:[%s7 + $0x84] sm:$0xf]
        %v3287 = vld [vmem:[%s7 + $0x88] sm:$0xf]
        %v3288 = vld [vmem:[%s7 + $0x8c] sm:$0xf]
        %v3289 = vld [vmem:[%s7 + $0x90] sm:$0xf]
        %v3290 = vld [vmem:[%s7 + $0x94] sm:$0xf]
        %v3291 = vld [vmem:[%s7 + $0x98] sm:$0xf]
        %v3292 = vld [vmem:[%s7 + $0x9c] sm:$0xf]
        %v3293 = vld [vmem:[%s7 + $0xa0] sm:$0xf]
        %v3294 = vld [vmem:[%s7 + $0xa4] sm:$0xf]
        %v3295 = vld [vmem:[%s7 + $0xa8] sm:$0xf]
        %v3296 = vld [vmem:[%s7 + $0xac] sm:$0xf]
        %v3297 = vld [vmem:[%s7 + $0xb0] sm:$0xf]
        %v3298 = vld [vmem:[%s7 + $0xb4] sm:$0xf]
        %v3299 = vld [vmem:[%s7 + $0xb8] sm:$0xf]
        %v3300 = vld [vmem:[%s7 + $0xbc] sm:$0xf]
        %v3301 = vld [vmem:[%s7 + $0xc0] sm:$0xf]
        %v3302 = vld [vmem:[%s7 + $0xc4] sm:$0xf]
        %v3303 = vld [vmem:[%s7 + $0xc8] sm:$0xf]
        %v3304 = vld [vmem:[%s7 + $0xcc] sm:$0xf]
        %v3305 = vld [vmem:[%s7 + $0xd0] sm:$0xf]
        %v3306 = vld [vmem:[%s7 + $0xd4] sm:$0xf]
        %v3307 = vld [vmem:[%s7 + $0xd8] sm:$0xf]
        %v3308 = vld [vmem:[%s7 + $0xdc] sm:$0xf]
        %v3309 = vld [vmem:[%s7 + $0xe0] sm:$0xf]
        %v3310 = vld [vmem:[%s7 + $0xe4] sm:$0xf]
        %v3311 = vld [vmem:[%s7 + $0xe8] sm:$0xf]
        %v3312 = vld [vmem:[%s7 + $0xec] sm:$0xf]
        %v3313 = vld [vmem:[%s7 + $0xf0] sm:$0xf]
        %v3314 = vld [vmem:[%s7 + $0xf4] sm:$0xf]
        %v3315 = vld [vmem:[%s7 + $0xf8] sm:$0xf]
        %v3316 = vld [vmem:[%s7 + $0xfc] sm:$0xf]
        %v3317 = vld [vmem:[%s8] sm:$0x1]
        %v3382 = vunpack.c.l.b16 %v3253
        %v3383 = vunpack.c.l.b16 %v3254
        %v3384 = vunpack.c.l.b16 %v3255
        %v3385 = vunpack.c.l.b16 %v3256
        %v3386 = vunpack.c.l.b16 %v3257
        %v3387 = vunpack.c.l.b16 %v3258
        %v3388 = vunpack.c.l.b16 %v3259
        %v3389 = vunpack.c.l.b16 %v3260
        %v3390 = vunpack.c.l.b16 %v3261
        %v3391 = vunpack.c.l.b16 %v3262
        %v3392 = vunpack.c.l.b16 %v3263
        %v3393 = vunpack.c.l.b16 %v3264
        %v3394 = vunpack.c.l.b16 %v3265
        %v3395 = vunpack.c.l.b16 %v3266
        %v3396 = vunpack.c.l.b16 %v3267
        %v3397 = vunpack.c.l.b16 %v3268
        %v3398 = vunpack.c.l.b16 %v3269
        %v3399 = vunpack.c.l.b16 %v3270
        %v3400 = vunpack.c.l.b16 %v3271
        %v3401 = vunpack.c.l.b16 %v3272
        %v3402 = vunpack.c.l.b16 %v3273
        %v3403 = vunpack.c.l.b16 %v3274
        %v3404 = vunpack.c.l.b16 %v3275
        %v3405 = vunpack.c.l.b16 %v3276
        %v3406 = vunpack.c.l.b16 %v3277
        %v3407 = vunpack.c.l.b16 %v3278
        %v3408 = vunpack.c.l.b16 %v3279
        %v3409 = vunpack.c.l.b16 %v3280
        %v3410 = vunpack.c.l.b16 %v3281
        %v3411 = vunpack.c.l.b16 %v3282
        %v3412 = vunpack.c.l.b16 %v3283
        %v3413 = vunpack.c.l.b16 %v3284
        %v3414 = vunpack.c.l.b16 %v3285
        %v3415 = vunpack.c.l.b16 %v3286
        %v3416 = vunpack.c.l.b16 %v3287
        %v3417 = vunpack.c.l.b16 %v3288
        %v3418 = vunpack.c.l.b16 %v3289
        %v3419 = vunpack.c.l.b16 %v3290
        %v3420 = vunpack.c.l.b16 %v3291
        %v3421 = vunpack.c.l.b16 %v3292
        %v3422 = vunpack.c.l.b16 %v3293
        %v3423 = vunpack.c.l.b16 %v3294
        %v3424 = vunpack.c.l.b16 %v3295
        %v3425 = vunpack.c.l.b16 %v3296
        %v3426 = vunpack.c.l.b16 %v3297
        %v3427 = vunpack.c.l.b16 %v3298
        %v3428 = vunpack.c.l.b16 %v3299
        %v3429 = vunpack.c.l.b16 %v3300
        %v3430 = vunpack.c.l.b16 %v3301
        %v3431 = vunpack.c.l.b16 %v3302
        %v3432 = vunpack.c.l.b16 %v3303
        %v3433 = vunpack.c.l.b16 %v3304
        %v3434 = vunpack.c.l.b16 %v3305
        %v3435 = vunpack.c.l.b16 %v3306
        %v3436 = vunpack.c.l.b16 %v3307
        %v3437 = vunpack.c.l.b16 %v3308
        %v3438 = vunpack.c.l.b16 %v3309
        %v3439 = vunpack.c.l.b16 %v3310
        %v3440 = vunpack.c.l.b16 %v3311
        %v3441 = vunpack.c.l.b16 %v3312
        %v3442 = vunpack.c.l.b16 %v3313
        %v3443 = vunpack.c.l.b16 %v3314
        %v3444 = vunpack.c.l.b16 %v3315
        %v3445 = vunpack.c.l.b16 %v3316
        %v3446 = vpack.c.b16 %v3383, %v3382
        %v3447 = vpack.c.b16 %v3385, %v3384
        %v3448 = vpack.c.b16 %v3387, %v3386
        %v3449 = vpack.c.b16 %v3389, %v3388
        %v3450 = vpack.c.b16 %v3391, %v3390
        %v3451 = vpack.c.b16 %v3393, %v3392
        %v3452 = vpack.c.b16 %v3395, %v3394
        %v3453 = vpack.c.b16 %v3397, %v3396
        %v3454 = vpack.c.b16 %v3399, %v3398
        %v3455 = vpack.c.b16 %v3401, %v3400
        %v3456 = vpack.c.b16 %v3403, %v3402
        %v3457 = vpack.c.b16 %v3405, %v3404
        %v3458 = vpack.c.b16 %v3407, %v3406
        %v3459 = vpack.c.b16 %v3409, %v3408
        %v3460 = vpack.c.b16 %v3411, %v3410
        %v3461 = vpack.c.b16 %v3413, %v3412
        %v3462 = vpack.c.b16 %v3415, %v3414
        %v3463 = vpack.c.b16 %v3417, %v3416
        %v3464 = vpack.c.b16 %v3419, %v3418
        %v3465 = vpack.c.b16 %v3421, %v3420
        %v3466 = vpack.c.b16 %v3423, %v3422
        %v3467 = vpack.c.b16 %v3425, %v3424
        %v3468 = vpack.c.b16 %v3427, %v3426
        %v3469 = vpack.c.b16 %v3429, %v3428
        %v3470 = vpack.c.b16 %v3431, %v3430
        %v3471 = vpack.c.b16 %v3433, %v3432
        %v3472 = vpack.c.b16 %v3435, %v3434
        %v3473 = vpack.c.b16 %v3437, %v3436
        %v3474 = vpack.c.b16 %v3439, %v3438
        %v3475 = vpack.c.b16 %v3441, %v3440
        %v3476 = vpack.c.b16 %v3443, %v3442
        %v3477 = vpack.c.b16 %v3445, %v3444
        %3510 = vmatprep.subr.bf16.mxu0 0
        %3511 = vmatpush1.bf16.msra.mxu0 %v3446
        %3512 = vmatprep.subr.bf16.mxu0 0
        %3513 = vmatpush1.bf16.msra.mxu0 %v3447
        %3514 = vmatprep.subr.bf16.mxu0 0
        %3515 = vmatpush1.bf16.msra.mxu0 %v3448
        %3516 = vmatprep.subr.bf16.mxu0 0
        %3517 = vmatpush1.bf16.msra.mxu0 %v3449
        %3518 = vmatprep.subr.bf16.mxu0 0
        %3519 = vmatpush1.bf16.msra.mxu0 %v3450
        %3520 = vmatprep.subr.bf16.mxu0 0
        %3521 = vmatpush1.bf16.msra.mxu0 %v3451
        %3522 = vmatprep.subr.bf16.mxu0 0
        %3523 = vmatpush1.bf16.msra.mxu0 %v3452
        %3524 = vmatprep.subr.bf16.mxu0 0
        %3525 = vmatpush1.bf16.msra.mxu0 %v3453
        %3526 = vmatprep.subr.bf16.mxu0 0
        %3527 = vmatpush1.bf16.msra.mxu0 %v3454
        %3528 = vmatprep.subr.bf16.mxu0 0
        %3529 = vmatpush1.bf16.msra.mxu0 %v3455
        %3530 = vmatprep.subr.bf16.mxu0 0
        %3531 = vmatpush1.bf16.msra.mxu0 %v3456
        %3532 = vmatprep.subr.bf16.mxu0 0
        %3533 = vmatpush1.bf16.msra.mxu0 %v3457
        %3534 = vmatprep.subr.bf16.mxu0 0
        %3535 = vmatpush1.bf16.msra.mxu0 %v3458
        %3536 = vmatprep.subr.bf16.mxu0 0
        %3537 = vmatpush1.bf16.msra.mxu0 %v3459
        %3538 = vmatprep.subr.bf16.mxu0 0
        %3539 = vmatpush1.bf16.msra.mxu0 %v3460
        %3540 = vmatprep.subr.bf16.mxu0 0
        %3541 = vmatpush1.bf16.msra.mxu0 %v3461
        %3542 = vmatprep.mubr.bf16.mxu0 %v3250
        %3543 = vmatmul.mubr.bf16.gmra.mrb[0].mxu0 %v3249
        %v3544 = vpop.f32.mrb[0].mxu0
        %v3545 = vadd.f32 %v3317, %v3544
        %v3546 = vpop.f32.mrb[0].mxu0
        %v3547 = vpop.f32.mrb[0].mxu0
        %v3548 = vpop.f32.mrb[0].mxu0
        %3549 = vdwg.mxu0
        %3550 = vmatprep.subr.bf16.mxu0 0
        %3551 = vmatpush1.bf16.msra.mxu0 %v3462
        %3552 = vmatprep.subr.bf16.mxu0 0
        %3553 = vmatpush1.bf16.msra.mxu0 %v3463
        %3554 = vmatprep.subr.bf16.mxu0 0
        %3555 = vmatpush1.bf16.msra.mxu0 %v3464
        %3556 = vmatprep.subr.bf16.mxu0 0
        %3557 = vmatpush1.bf16.msra.mxu0 %v3465
        %3558 = vmatprep.subr.bf16.mxu0 0
        %3559 = vmatpush1.bf16.msra.mxu0 %v3466
        %3560 = vmatprep.subr.bf16.mxu0 0
        %3561 = vmatpush1.bf16.msra.mxu0 %v3467
        %3562 = vmatprep.subr.bf16.mxu0 0
        %3563 = vmatpush1.bf16.msra.mxu0 %v3468
        %3564 = vmatprep.subr.bf16.mxu0 0
        %3565 = vmatpush1.bf16.msra.mxu0 %v3469
        %3566 = vmatprep.subr.bf16.mxu0 0
        %3567 = vmatpush1.bf16.msra.mxu0 %v3470
        %3568 = vmatprep.subr.bf16.mxu0 0
        %3569 = vmatpush1.bf16.msra.mxu0 %v3471
        %3570 = vmatprep.subr.bf16.mxu0 0
        %3571 = vmatpush1.bf16.msra.mxu0 %v3472
        %3572 = vmatprep.subr.bf16.mxu0 0
        %3573 = vmatpush1.bf16.msra.mxu0 %v3473
        %3574 = vmatprep.subr.bf16.mxu0 0
        %3575 = vmatpush1.bf16.msra.mxu0 %v3474
        %3576 = vmatprep.subr.bf16.mxu0 0
        %3577 = vmatpush1.bf16.msra.mxu0 %v3475
        %3578 = vmatprep.subr.bf16.mxu0 0
        %3579 = vmatpush1.bf16.msra.mxu0 %v3476
        %3580 = vmatprep.subr.bf16.mxu0 0
        %3581 = vmatpush1.bf16.msra.mxu0 %v3477
        %3582 = vmatprep.mubr.bf16.mxu0 %v3252
        %3583 = vmatmul.mubr.bf16.gmra.mrb[0].mxu0 %v3251
        %v3584 = vpop.f32.mrb[0].mxu0
        %v3585 = vadd.f32 %v3545, %v3584
        %v3586 = vpop.f32.mrb[0].mxu0
        %v3587 = vpop.f32.mrb[0].mxu0
        %v3588 = vpop.f32.mrb[0].mxu0
        %3589 = vdwg.mxu0
        %3590 = vst [vmem:[%s358] sm:$0x1] %v3585
        %p3591 = scmp.lt.s32.totalorder %s25, 1
        %s3592 = scalar_select %p3591, %s25, 1
        %s3593 = smul.addr %s3592, 4
        %s3594 = scalar_lea.vmem %s9, %s3593
        %s3595 = sand.u32 %s253, 1
        %s3596 = scalar_lea.sflag [#allocation3], %s3595
        %s3597 = sand.u32 %s253, 1
        %s3598 = scalar_lea.vmem [#allocation2], %s3597
        // Predicated region
        $region57: #{forward.3} parent=55 // pred_check
          %p3599 = pneg %p237
        $region58: #{forward.3} parent=55 // pred_check_branch
          %3601 = sbr.rel (%p3599) target = $region60
        $region59: #{forward.3} parent=55 // pred_region
          _
        $region60: #{forward.3} parent=55 // pred_fallthru
          _
        // Predicated region
        $region61: #{forward.3} parent=55 // pred_check
          %p3602 = pneg %p263
        $region62: #{forward.3} parent=55 // pred_check_branch
          %3604 = sbr.rel (%p3602) target = $region64
        $region63: #{forward.3} parent=55 // pred_region
          %s3606 = ssub.s32 16, 16
          %3607 = vsyncadd %s3596, %s3606
          %s3608 = smul.addr %s25, 16
          %s3609 = scalar_lea.hbm %s10, %s3608
          %s3611 = sshll.u32 %s3598, 4
          %s3612 = int_to_ptr.vmem [resolvable:$true] %s3611
          %3614 = dma.vmem_to_hbm [thread:$0]  %s3612, 16, %s3609, %s3596
        $region64: #{forward.3} parent=55 // pred_fallthru
          _
      $region56: #{forward.3} parent=5 // pred_fallthru
        _
      %p3615 = scmp.le.s32.totalorder 2, %s20
      // Predicated region
      $region65: #{forward.3} parent=5 // pred_check
        %p3616 = pneg %p3615
      $region66: #{forward.3} parent=5 // pred_check_branch
        %3618 = sbr.rel (%p3616) target = $region68
      $region67: #{forward.3} parent=5 // pred_region
        %s3619 = ssub.s32 %s20, 2
        // Predicated region
        $region69: #{forward.3} parent=67 // pred_check
          %p3620 = pneg %p243
        $region70: #{forward.3} parent=67 // pred_check_branch
          %3622 = sbr.rel (%p3620) target = $region72
        $region71: #{forward.3} parent=67 // pred_region
          %p3623 = scmp.lt.s32.totalorder %s26, 1
          %s3624 = scalar_select %p3623, %s26, 1
          %s3625 = smul.addr %s3624, 4
          %s3626 = scalar_lea.vmem %s9, %s3625
        $region72: #{forward.3} parent=67 // pred_fallthru
          _
        // Predicated region
        $region73: #{forward.3} parent=67 // pred_check
          %p3627 = pneg %p269
        $region74: #{forward.3} parent=67 // pred_check_branch
          %3629 = sbr.rel (%p3627) target = $region76
        $region75: #{forward.3} parent=67 // pred_region
          %s3630 = sand.u32 %s254, 1
          %s3631 = scalar_lea.sflag [#allocation3], %s3630
          %s3632 = sand.u32 %s254, 1
          %s3633 = scalar_lea.vmem [#allocation2], %s3632
          %3634 = dma.done %s3631, 16
        $region76: #{forward.3} parent=67 // pred_fallthru
          _
      $region68: #{forward.3} parent=5 // pred_fallthru
        _
    $region6: #{forward.3} parent=1 // loop_footer
      %s24 = sadd.s32 1, %s20
    $region7: #{forward.3} parent=1 // loop_footer_branch
      %19 = sbr.rel target = $region3
    $region8: #{forward.3} parent=1 // loop_exit
      _
    %3635 = vsyncpa [#allocation3], 1
    %s3636 = scalar_lea.sflag [#allocation3], 1
    %3637 = vsyncpa %s3636, 1

</llo_original>
